<compile_context>
chip_gen: v7x
topology: tpu7x:2x2x1
jax: 0.10.0
libtpu: 0.0.40
codegen_flags: <defaults>
</compile_context>

<pallas_src>
import jax
import jax.numpy as jnp
from jax.experimental import pallas as pl
from jax.experimental.pallas import tpu as pltpu


def _add_conv1x1_kernel(x1_ref, x2_ref, wt_ref, o_ref):
    # x1_ref, x2_ref : [C_in, HW]      f32 activations (channel-major)
    # wt_ref         : [C_in, C_out]   bf16 transposed 1x1-conv weight
    # o_ref          : [HW, C_out]     f32 output (lane-dense: C_out on lanes)
    y = (x1_ref[...] + x2_ref[...]).astype(wt_ref.dtype)  # add in f32 (VPU), cast for MXU
    o_ref[...] = jax.lax.dot_general(
        y,
        wt_ref[...],
        dimension_numbers=(((0,), (0,)), ((), ())),  # contract C_in -> [HW, C_out]
        preferred_element_type=jnp.float32,          # f32 accumulation on the MXU
    ).astype(o_ref.dtype)


def prepare_conv_weight(weight, dtype=jnp.bfloat16):
    """One-time prep (outside the hot path): PyTorch [C_out, C_in, 1, 1] ->
    transposed [C_in, C_out] in the matmul dtype (bf16 by default)."""
    c_out, c_in = weight.shape[0], weight.shape[1]
    return weight.reshape(c_out, c_in).T.astype(dtype)  # [C_in, C_out]


def add_conv1x1(x545, x531, wt_prepped):
    """
    x545, x531 : [N, C_in, H, W]  (NCHW, like the PyTorch module), f32
    wt_prepped : [C_in, C_out]    (from prepare_conv_weight), bf16
    returns    : [N, C_out, H, W] f32
    """
    n, c_in, h, w = x545.shape
    c_in_w, c_out = wt_prepped.shape
    assert c_in_w == c_in, (c_in_w, c_in)
    hw = h * w

    # Free reshapes: stay in channel-major layout, no input transposes emitted.
    a = x545.reshape(n, c_in, hw)
    b = x531.reshape(n, c_in, hw)

    out = pl.pallas_call(
        _add_conv1x1_kernel,
        out_shape=jax.ShapeDtypeStruct((n, hw, c_out), x545.dtype),
        grid=(n,),  # single step for N=1; weight block index constant across batch
        in_specs=[
            pl.BlockSpec((None, c_in, hw), lambda i: (i, 0, 0)),
            pl.BlockSpec((None, c_in, hw), lambda i: (i, 0, 0)),
            pl.BlockSpec((c_in, c_out), lambda i: (0, 0)),  # stays resident across n
        ],
        out_specs=pl.BlockSpec((None, hw, c_out), lambda i: (i, 0, 0)),
        compiler_params=pltpu.CompilerParams(
            dimension_semantics=("parallel",)
        ),
    )(a, b, wt_prepped)

    # out is [N, HW, C_out]; one cheap transpose back to NCHW to match PyTorch.
    return jnp.transpose(out, (0, 2, 1)).reshape(n, c_out, h, w)


if __name__ == "__main__":
    key = jax.random.PRNGKey(0)
    k1, k2, k3 = jax.random.split(key, 3)

    N, C_IN, H, W = 1, 344, 7, 7
    C_OUT = 2064

    x545 = jax.random.normal(k1, (N, C_IN, H, W), dtype=jnp.float32)
    x531 = jax.random.normal(k2, (N, C_IN, H, W), dtype=jnp.float32)
    # Deterministic Conv2d weight init (kaiming-uniform-like scale, no bias).
    fan_in = C_IN  # kernel_size = 1x1
    bound = 1.0 / (fan_in ** 0.5)
    weight = jax.random.uniform(
        k3, (C_OUT, C_IN, 1, 1), dtype=jnp.float32, minval=-bound, maxval=bound
    )

    # One-time weight prep (outside the per-call hot path).
    wt_prepped = prepare_conv_weight(weight)  # [C_IN, C_OUT], bf16

    out = add_conv1x1(x545, x531, wt_prepped)
    out = jax.block_until_ready(out)
    assert out.shape == (N, C_OUT, H, W), out.shape

    # Cross-check against a plain-JAX f32 reference of the same math
    # (looser tolerance since the matmul operands are bf16 in the kernel).
    y = x545 + x531
    ref = jnp.einsum("nchw,oc->nohw", y, weight.reshape(C_OUT, C_IN))
    assert jnp.allclose(out, ref, atol=5e-2, rtol=5e-2), float(
        jnp.max(jnp.abs(out - ref))
    )

    print("KERNEL_OK")
</pallas_src>

<mosaic_0001>
module attributes {stable_mosaic.version = 11 : i64} {
  func.func @_add_conv1x1_kernel(%arg0: i32, %arg1: memref<1x344x49xf32, #tpu.memory_space<vmem>>, %arg2: memref<1x344x49xf32, #tpu.memory_space<vmem>>, %arg3: memref<344x2064xbf16, #tpu.memory_space<vmem>>, %arg4: memref<1x49x2064xf32, #tpu.memory_space<vmem>>) attributes {dimension_semantics = [#tpu.dimension_semantics<parallel>], iteration_bounds = array<i64: 1>, scalar_prefetch = 0 : i64, scratch_operands = 0 : i64, tpu.core_type = #tpu.core_type<tc>, window_params = [{transform_indices = @transform_0, window_bounds = array<i64: 1, 344, 49>}, {transform_indices = @transform_1, window_bounds = array<i64: 1, 344, 49>}, {pipeline_mode = #tpu.pipeline_mode<synchronous>, transform_indices = @transform_2, window_bounds = array<i64: 344, 2064>}, {transform_indices = @transform_3, window_bounds = array<i64: 1, 49, 2064>}]} {
    %c0 = arith.constant 0 : index
    %c0_0 = arith.constant 0 : index
    %c0_1 = arith.constant 0 : index
    %0 = vector.load %arg1[%c0, %c0_0, %c0_1] : memref<1x344x49xf32, #tpu.memory_space<vmem>>, vector<1x344x49xf32>
    %1 = vector.shape_cast %0 : vector<1x344x49xf32> to vector<344x49xf32>
    %c0_2 = arith.constant 0 : index
    %c0_3 = arith.constant 0 : index
    %c0_4 = arith.constant 0 : index
    %2 = vector.load %arg2[%c0_2, %c0_3, %c0_4] : memref<1x344x49xf32, #tpu.memory_space<vmem>>, vector<1x344x49xf32>
    %3 = vector.shape_cast %2 : vector<1x344x49xf32> to vector<344x49xf32>
    %4 = arith.addf %1, %3 : vector<344x49xf32>
    %5 = arith.truncf %4 : vector<344x49xf32> to vector<344x49xbf16>
    %c0_5 = arith.constant 0 : index
    %c0_6 = arith.constant 0 : index
    %6 = vector.load %arg3[%c0_5, %c0_6] : memref<344x2064xbf16, #tpu.memory_space<vmem>>, vector<344x2064xbf16>
    %cst = arith.constant dense<0.000000e+00> : vector<49x2064xf32>
    %7 = tpu.matmul %5, %6, %cst {dimension_numbers = #tpu.dot_dimension_numbers<[0], [0], [1], [1], [0, 1, 1, 1], [], []>} : vector<344x49xbf16>, vector<344x2064xbf16>, vector<49x2064xf32> -> vector<49x2064xf32>
    %c0_7 = arith.constant 0 : index
    %c0_8 = arith.constant 0 : index
    %c0_9 = arith.constant 0 : index
    %8 = vector.load %arg4[%c0_7, %c0_8, %c0_9] : memref<1x49x2064xf32, #tpu.memory_space<vmem>>, vector<1x49x2064xf32>
    %9 = vector.shape_cast %8 : vector<1x49x2064xf32> to vector<49x2064xf32>
    %10 = vector.shape_cast %7 : vector<49x2064xf32> to vector<1x49x2064xf32>
    tpu.vector_store %arg4[%c0_7, %c0_8, %c0_9], %10 {strides = array<i32>} : memref<1x49x2064xf32, #tpu.memory_space<vmem>>, vector<1x49x2064xf32>,
    return
  }
  func.func @transform_0(%arg0: i32) -> (i32, i32, i32) {
    %c0_i32 = arith.constant 0 : i32
    %c0_i32_0 = arith.constant 0 : i32
    %c0_i32_1 = arith.constant 0 : i32
    return %arg0, %c0_i32, %c0_i32_0 : i32, i32, i32
  }
  func.func @transform_1(%arg0: i32) -> (i32, i32, i32) {
    %c0_i32 = arith.constant 0 : i32
    %c0_i32_0 = arith.constant 0 : i32
    %c0_i32_1 = arith.constant 0 : i32
    return %arg0, %c0_i32, %c0_i32_0 : i32, i32, i32
  }
  func.func @transform_2(%arg0: i32) -> (i32, i32) {
    %c0_i32 = arith.constant 0 : i32
    %c0_i32_0 = arith.constant 0 : i32
    %c0_i32_1 = arith.constant 0 : i32
    return %c0_i32, %c0_i32_0 : i32, i32
  }
  func.func @transform_3(%arg0: i32) -> (i32, i32, i32) {
    %c0_i32 = arith.constant 0 : i32
    %c0_i32_0 = arith.constant 0 : i32
    %c0_i32_1 = arith.constant 0 : i32
    return %arg0, %c0_i32, %c0_i32_0 : i32, i32, i32
  }
}

</mosaic_0001>

<llo_original>
// kernel: tpu_custom_call.1
$region0: #{tpu_custom_call.1}
  #allocation0 [shape = 'u32[]', space=smem, size = 0x4, offset = 0x4, fixed_abs, tag = 'smem constant byte address 0x4 - core index']
  #allocation1 [shape = 'u32[144,128]{1,0:T(1,128)}', space=vmem, size = 0x12000, scoped, tag = 'internal scratch']
  %s0 = inlined_call_operand.vmem [shape: f32[1,344,49], index: 0, kind: input, shape index: {}]
  %s1 = inlined_call_operand.vmem [shape: f32[1,344,49], index: 1, kind: input, shape index: {}]
  %s2 = inlined_call_operand.hbm [shape: bf16[344,2064], index: 2, kind: input, shape index: {}]
  %s3 = inlined_call_operand.vmem [shape: f32[1,49,2064], index: 3, kind: output, shape index: {}]
  %s4 = sld [smem:[#allocation0]]
  $region26: #{tpu_custom_call.1} parent=0
    _
  %s6 = ssub.s32 1, %s4
  %s7 = scalar_select 0, %s6, %s4
  $region1: #{tpu_custom_call.1} parent=0
    #allocation2 [shape = 'u8[1497088]{0}', space=vmem, size = 0x16d800, scoped, tag = 'input window, operand 2, single buffered']
    #allocation3 [shape = 's32[1]{0}', space=sflag, size = 0x4, scoped, tag = 'scoped memory for tpu_custom_call.1']
    %8 = vsyncpa [#allocation3], 0
    // Predicated region
    $region2: #{tpu_custom_call.1} parent=1 // pred_check
      _
    $region3: #{tpu_custom_call.1} parent=1 // pred_check_branch
      %10 = sbr.rel (0) target = $region5
    $region4: #{tpu_custom_call.1} parent=1 // pred_region
      _
    $region5: #{tpu_custom_call.1} parent=1 // pred_fallthru
      _
    // Predicated region
    $region6: #{tpu_custom_call.1} parent=1 // pred_check
      _
    $region7: #{tpu_custom_call.1} parent=1 // pred_check_branch
      %12 = sbr.rel (0) target = $region9
    $region8: #{tpu_custom_call.1} parent=1 // pred_region
      _
    $region9: #{tpu_custom_call.1} parent=1 // pred_fallthru
      _
    // Predicated region
    $region10: #{tpu_custom_call.1} parent=1 // pred_check
      _
    $region11: #{tpu_custom_call.1} parent=1 // pred_check_branch
      %14 = sbr.rel (0) target = $region13
    $region12: #{tpu_custom_call.1} parent=1 // pred_region
      %s16 = ssub.s32 46784, 46784
      %17 = vsyncadd [#allocation3], %s16
      %s18 = sshll.u32 [#allocation2], 4
      %s19 = int_to_ptr.vmem [resolvable:$true] %s18
      %24 = dma.hbm_to_vmem [thread:$0]  %s2, 46784, %s19, [#allocation3], 1088, 1088, 68
    $region13: #{tpu_custom_call.1} parent=1 // pred_fallthru
      _
    // Predicated region
    $region14: #{tpu_custom_call.1} parent=1 // pred_check
      _
    $region15: #{tpu_custom_call.1} parent=1 // pred_check_branch
      %26 = sbr.rel (0) target = $region17
    $region16: #{tpu_custom_call.1} parent=1 // pred_region
      %27 = dma.done [#allocation3], 46784
    $region17: #{tpu_custom_call.1} parent=1 // pred_fallthru
      _
    %v29 = vld [vmem:[%s0] sm:$0xff]
    %v30 = vld [vmem:[%s0 + $0x8] sm:$0xff]
    %v31 = vld [vmem:[%s0 + $0x10] sm:$0xff]
    %v32 = vld [vmem:[%s0 + $0x18] sm:$0xff]
    %v33 = vld [vmem:[%s0 + $0x20] sm:$0xff]
    %v34 = vld [vmem:[%s0 + $0x28] sm:$0xff]
    %v35 = vld [vmem:[%s0 + $0x30] sm:$0xff]
    %v36 = vld [vmem:[%s0 + $0x38] sm:$0xff]
    %v37 = vld [vmem:[%s0 + $0x40] sm:$0xff]
    %v38 = vld [vmem:[%s0 + $0x48] sm:$0xff]
    %v39 = vld [vmem:[%s0 + $0x50] sm:$0xff]
    %v40 = vld [vmem:[%s0 + $0x58] sm:$0xff]
    %v41 = vld [vmem:[%s0 + $0x60] sm:$0xff]
    %v42 = vld [vmem:[%s0 + $0x68] sm:$0xff]
    %v43 = vld [vmem:[%s0 + $0x70] sm:$0xff]
    %v44 = vld [vmem:[%s0 + $0x78] sm:$0xff]
    %v45 = vld [vmem:[%s0 + $0x80] sm:$0xff]
    %v46 = vld [vmem:[%s0 + $0x88] sm:$0xff]
    %v47 = vld [vmem:[%s0 + $0x90] sm:$0xff]
    %v48 = vld [vmem:[%s0 + $0x98] sm:$0xff]
    %v49 = vld [vmem:[%s0 + $0xa0] sm:$0xff]
    %v50 = vld [vmem:[%s0 + $0xa8] sm:$0xff]
    %v51 = vld [vmem:[%s0 + $0xb0] sm:$0xff]
    %v52 = vld [vmem:[%s0 + $0xb8] sm:$0xff]
    %v53 = vld [vmem:[%s0 + $0xc0] sm:$0xff]
    %v54 = vld [vmem:[%s0 + $0xc8] sm:$0xff]
    %v55 = vld [vmem:[%s0 + $0xd0] sm:$0xff]
    %v56 = vld [vmem:[%s0 + $0xd8] sm:$0xff]
    %v57 = vld [vmem:[%s0 + $0xe0] sm:$0xff]
    %v58 = vld [vmem:[%s0 + $0xe8] sm:$0xff]
    %v59 = vld [vmem:[%s0 + $0xf0] sm:$0xff]
    %v60 = vld [vmem:[%s0 + $0xf8] sm:$0xff]
    %v61 = vld [vmem:[%s0 + $0x100] sm:$0xff]
    %v62 = vld [vmem:[%s0 + $0x108] sm:$0xff]
    %v63 = vld [vmem:[%s0 + $0x110] sm:$0xff]
    %v64 = vld [vmem:[%s0 + $0x118] sm:$0xff]
    %v65 = vld [vmem:[%s0 + $0x120] sm:$0xff]
    %v66 = vld [vmem:[%s0 + $0x128] sm:$0xff]
    %v67 = vld [vmem:[%s0 + $0x130] sm:$0xff]
    %v68 = vld [vmem:[%s0 + $0x138] sm:$0xff]
    %v69 = vld [vmem:[%s0 + $0x140] sm:$0xff]
    %v70 = vld [vmem:[%s0 + $0x148] sm:$0xff]
    %v71 = vld [vmem:[%s0 + $0x150] sm:$0xff]
    %v72 = vld [vmem:[%s1] sm:$0xff]
    %v73 = vld [vmem:[%s1 + $0x8] sm:$0xff]
    %v74 = vld [vmem:[%s1 + $0x10] sm:$0xff]
    %v75 = vld [vmem:[%s1 + $0x18] sm:$0xff]
    %v76 = vld [vmem:[%s1 + $0x20] sm:$0xff]
    %v77 = vld [vmem:[%s1 + $0x28] sm:$0xff]
    %v78 = vld [vmem:[%s1 + $0x30] sm:$0xff]
    %v79 = vld [vmem:[%s1 + $0x38] sm:$0xff]
    %v80 = vld [vmem:[%s1 + $0x40] sm:$0xff]
    %v81 = vld [vmem:[%s1 + $0x48] sm:$0xff]
    %v82 = vld [vmem:[%s1 + $0x50] sm:$0xff]
    %v83 = vld [vmem:[%s1 + $0x58] sm:$0xff]
    %v84 = vld [vmem:[%s1 + $0x60] sm:$0xff]
    %v85 = vld [vmem:[%s1 + $0x68] sm:$0xff]
    %v86 = vld [vmem:[%s1 + $0x70] sm:$0xff]
    %v87 = vld [vmem:[%s1 + $0x78] sm:$0xff]
    %v88 = vld [vmem:[%s1 + $0x80] sm:$0xff]
    %v89 = vld [vmem:[%s1 + $0x88] sm:$0xff]
    %v90 = vld [vmem:[%s1 + $0x90] sm:$0xff]
    %v91 = vld [vmem:[%s1 + $0x98] sm:$0xff]
    %v92 = vld [vmem:[%s1 + $0xa0] sm:$0xff]
    %v93 = vld [vmem:[%s1 + $0xa8] sm:$0xff]
    %v94 = vld [vmem:[%s1 + $0xb0] sm:$0xff]
    %v95 = vld [vmem:[%s1 + $0xb8] sm:$0xff]
    %v96 = vld [vmem:[%s1 + $0xc0] sm:$0xff]
    %v97 = vld [vmem:[%s1 + $0xc8] sm:$0xff]
    %v98 = vld [vmem:[%s1 + $0xd0] sm:$0xff]
    %v99 = vld [vmem:[%s1 + $0xd8] sm:$0xff]
    %v100 = vld [vmem:[%s1 + $0xe0] sm:$0xff]
    %v101 = vld [vmem:[%s1 + $0xe8] sm:$0xff]
    %v102 = vld [vmem:[%s1 + $0xf0] sm:$0xff]
    %v103 = vld [vmem:[%s1 + $0xf8] sm:$0xff]
    %v104 = vld [vmem:[%s1 + $0x100] sm:$0xff]
    %v105 = vld [vmem:[%s1 + $0x108] sm:$0xff]
    %v106 = vld [vmem:[%s1 + $0x110] sm:$0xff]
    %v107 = vld [vmem:[%s1 + $0x118] sm:$0xff]
    %v108 = vld [vmem:[%s1 + $0x120] sm:$0xff]
    %v109 = vld [vmem:[%s1 + $0x128] sm:$0xff]
    %v110 = vld [vmem:[%s1 + $0x130] sm:$0xff]
    %v111 = vld [vmem:[%s1 + $0x138] sm:$0xff]
    %v112 = vld [vmem:[%s1 + $0x140] sm:$0xff]
    %v113 = vld [vmem:[%s1 + $0x148] sm:$0xff]
    %v114 = vld [vmem:[%s1 + $0x150] sm:$0xff]
    %v115 = vadd.f32 %v29, %v72
    %v116 = vadd.f32 %v30, %v73
    %v117 = vadd.f32 %v31, %v74
    %v118 = vadd.f32 %v32, %v75
    %v119 = vadd.f32 %v33, %v76
    %v120 = vadd.f32 %v34, %v77
    %v121 = vadd.f32 %v35, %v78
    %v122 = vadd.f32 %v36, %v79
    %v123 = vadd.f32 %v37, %v80
    %v124 = vadd.f32 %v38, %v81
    %v125 = vadd.f32 %v39, %v82
    %v126 = vadd.f32 %v40, %v83
    %v127 = vadd.f32 %v41, %v84
    %v128 = vadd.f32 %v42, %v85
    %v129 = vadd.f32 %v43, %v86
    %v130 = vadd.f32 %v44, %v87
    %v131 = vadd.f32 %v45, %v88
    %v132 = vadd.f32 %v46, %v89
    %v133 = vadd.f32 %v47, %v90
    %v134 = vadd.f32 %v48, %v91
    %v135 = vadd.f32 %v49, %v92
    %v136 = vadd.f32 %v50, %v93
    %v137 = vadd.f32 %v51, %v94
    %v138 = vadd.f32 %v52, %v95
    %v139 = vadd.f32 %v53, %v96
    %v140 = vadd.f32 %v54, %v97
    %v141 = vadd.f32 %v55, %v98
    %v142 = vadd.f32 %v56, %v99
    %v143 = vadd.f32 %v57, %v100
    %v144 = vadd.f32 %v58, %v101
    %v145 = vadd.f32 %v59, %v102
    %v146 = vadd.f32 %v60, %v103
    %v147 = vadd.f32 %v61, %v104
    %v148 = vadd.f32 %v62, %v105
    %v149 = vadd.f32 %v63, %v106
    %v150 = vadd.f32 %v64, %v107
    %v151 = vadd.f32 %v65, %v108
    %v152 = vadd.f32 %v66, %v109
    %v153 = vadd.f32 %v67, %v110
    %v154 = vadd.f32 %v68, %v111
    %v155 = vadd.f32 %v69, %v112
    %v156 = vadd.f32 %v70, %v113
    %v157 = vadd.f32 %v71, %v114
    %v158 = vpack.c.bf16 %v116, %v115
    %v159 = vpack.c.bf16 %v118, %v117
    %v160 = vpack.c.bf16 %v120, %v119
    %v161 = vpack.c.bf16 %v122, %v121
    %v162 = vpack.c.bf16 %v124, %v123
    %v163 = vpack.c.bf16 %v126, %v125
    %v164 = vpack.c.bf16 %v128, %v127
    %v165 = vpack.c.bf16 %v130, %v129
    %v166 = vpack.c.bf16 %v132, %v131
    %v167 = vpack.c.bf16 %v134, %v133
    %v168 = vpack.c.bf16 %v136, %v135
    %v169 = vpack.c.bf16 %v138, %v137
    %v170 = vpack.c.bf16 %v140, %v139
    %v171 = vpack.c.bf16 %v142, %v141
    %v172 = vpack.c.bf16 %v144, %v143
    %v173 = vpack.c.bf16 %v146, %v145
    %v174 = vpack.c.bf16 %v148, %v147
    %v175 = vpack.c.bf16 %v150, %v149
    %v176 = vpack.c.bf16 %v152, %v151
    %v177 = vpack.c.bf16 %v154, %v153
    %v178 = vpack.c.bf16 %v156, %v155
    %v179 = vpack.c.bf16 %v157, %v157
    %v180 = vld [vmem:[#allocation2] sm:$0xff]
    %v181 = vld [vmem:[#allocation2 + $0x8] sm:$0xff]
    %v182 = vld [vmem:[#allocation2 + $0x10] sm:$0xff]
    %v183 = vld [vmem:[#allocation2 + $0x18] sm:$0xff]
    %v184 = vld [vmem:[#allocation2 + $0x20] sm:$0xff]
    %v185 = vld [vmem:[#allocation2 + $0x28] sm:$0xff]
    %v186 = vld [vmem:[#allocation2 + $0x30] sm:$0xff]
    %v187 = vld [vmem:[#allocation2 + $0x38] sm:$0xff]
    %v188 = vld [vmem:[#allocation2 + $0x40] sm:$0xf]
    %v189 = vld [vmem:[#allocation2 + $0x44] sm:$0xff]
    %v190 = vld [vmem:[#allocation2 + $0x4c] sm:$0xff]
    %v191 = vld [vmem:[#allocation2 + $0x54] sm:$0xff]
    %v192 = vld [vmem:[#allocation2 + $0x5c] sm:$0xff]
    %v193 = vld [vmem:[#allocation2 + $0x64] sm:$0xff]
    %v194 = vld [vmem:[#allocation2 + $0x6c] sm:$0xff]
    %v195 = vld [vmem:[#allocation2 + $0x74] sm:$0xff]
    %v196 = vld [vmem:[#allocation2 + $0x7c] sm:$0xff]
    %v197 = vld [vmem:[#allocation2 + $0x84] sm:$0xf]
    %v198 = vld [vmem:[#allocation2 + $0x88] sm:$0xff]
    %v199 = vld [vmem:[#allocation2 + $0x90] sm:$0xff]
    %v200 = vld [vmem:[#allocation2 + $0x98] sm:$0xff]
    %v201 = vld [vmem:[#allocation2 + $0xa0] sm:$0xff]
    %v202 = vld [vmem:[#allocation2 + $0xa8] sm:$0xff]
    %v203 = vld [vmem:[#allocation2 + $0xb0] sm:$0xff]
    %v204 = vld [vmem:[#allocation2 + $0xb8] sm:$0xff]
    %v205 = vld [vmem:[#allocation2 + $0xc0] sm:$0xff]
    %v206 = vld [vmem:[#allocation2 + $0xc8] sm:$0xf]
    %v207 = vld [vmem:[#allocation2 + $0xcc] sm:$0xff]
    %v208 = vld [vmem:[#allocation2 + $0xd4] sm:$0xff]
    %v209 = vld [vmem:[#allocation2 + $0xdc] sm:$0xff]
    %v210 = vld [vmem:[#allocation2 + $0xe4] sm:$0xff]
    %v211 = vld [vmem:[#allocation2 + $0xec] sm:$0xff]
    %v212 = vld [vmem:[#allocation2 + $0xf4] sm:$0xff]
    %v213 = vld [vmem:[#allocation2 + $0xfc] sm:$0xff]
    %v214 = vld [vmem:[#allocation2 + $0x104] sm:$0xff]
    %v215 = vld [vmem:[#allocation2 + $0x10c] sm:$0xf]
    %v216 = vld [vmem:[#allocation2 + $0x110] sm:$0xff]
    %v217 = vld [vmem:[#allocation2 + $0x118] sm:$0xff]
    %v218 = vld [vmem:[#allocation2 + $0x120] sm:$0xff]
    %v219 = vld [vmem:[#allocation2 + $0x128] sm:$0xff]
    %v220 = vld [vmem:[#allocation2 + $0x130] sm:$0xff]
    %v221 = vld [vmem:[#allocation2 + $0x138] sm:$0xff]
    %v222 = vld [vmem:[#allocation2 + $0x140] sm:$0xff]
    %v223 = vld [vmem:[#allocation2 + $0x148] sm:$0xff]
    %v224 = vld [vmem:[#allocation2 + $0x150] sm:$0xf]
    %v225 = vld [vmem:[#allocation2 + $0x154] sm:$0xff]
    %v226 = vld [vmem:[#allocation2 + $0x15c] sm:$0xff]
    %v227 = vld [vmem:[#allocation2 + $0x164] sm:$0xff]
    %v228 = vld [vmem:[#allocation2 + $0x16c] sm:$0xff]
    %v229 = vld [vmem:[#allocation2 + $0x174] sm:$0xff]
    %v230 = vld [vmem:[#allocation2 + $0x17c] sm:$0xff]
    %v231 = vld [vmem:[#allocation2 + $0x184] sm:$0xff]
    %v232 = vld [vmem:[#allocation2 + $0x18c] sm:$0xff]
    %v233 = vld [vmem:[#allocation2 + $0x194] sm:$0xf]
    %v234 = vld [vmem:[#allocation2 + $0x198] sm:$0xff]
    %v235 = vld [vmem:[#allocation2 + $0x1a0] sm:$0xff]
    %v236 = vld [vmem:[#allocation2 + $0x1a8] sm:$0xff]
    %v237 = vld [vmem:[#allocation2 + $0x1b0] sm:$0xff]
    %v238 = vld [vmem:[#allocation2 + $0x1b8] sm:$0xff]
    %v239 = vld [vmem:[#allocation2 + $0x1c0] sm:$0xff]
    %v240 = vld [vmem:[#allocation2 + $0x1c8] sm:$0xff]
    %v241 = vld [vmem:[#allocation2 + $0x1d0] sm:$0xff]
    %v242 = vld [vmem:[#allocation2 + $0x1d8] sm:$0xf]
    %v243 = vld [vmem:[#allocation2 + $0x1dc] sm:$0xff]
    %v244 = vld [vmem:[#allocation2 + $0x1e4] sm:$0xff]
    %v245 = vld [vmem:[#allocation2 + $0x1ec] sm:$0xff]
    %v246 = vld [vmem:[#allocation2 + $0x1f4] sm:$0xff]
    %v247 = vld [vmem:[#allocation2 + $0x1fc] sm:$0xff]
    %v248 = vld [vmem:[#allocation2 + $0x204] sm:$0xff]
    %v249 = vld [vmem:[#allocation2 + $0x20c] sm:$0xff]
    %v250 = vld [vmem:[#allocation2 + $0x214] sm:$0xff]
    %v251 = vld [vmem:[#allocation2 + $0x21c] sm:$0xf]
    %v252 = vld [vmem:[#allocation2 + $0x220] sm:$0xff]
    %v253 = vld [vmem:[#allocation2 + $0x228] sm:$0xff]
    %v254 = vld [vmem:[#allocation2 + $0x230] sm:$0xff]
    %v255 = vld [vmem:[#allocation2 + $0x238] sm:$0xff]
    %v256 = vld [vmem:[#allocation2 + $0x240] sm:$0xff]
    %v257 = vld [vmem:[#allocation2 + $0x248] sm:$0xff]
    %v258 = vld [vmem:[#allocation2 + $0x250] sm:$0xff]
    %v259 = vld [vmem:[#allocation2 + $0x258] sm:$0xff]
    %v260 = vld [vmem:[#allocation2 + $0x260] sm:$0xf]
    %v261 = vld [vmem:[#allocation2 + $0x264] sm:$0xff]
    %v262 = vld [vmem:[#allocation2 + $0x26c] sm:$0xff]
    %v263 = vld [vmem:[#allocation2 + $0x274] sm:$0xff]
    %v264 = vld [vmem:[#allocation2 + $0x27c] sm:$0xff]
    %v265 = vld [vmem:[#allocation2 + $0x284] sm:$0xff]
    %v266 = vld [vmem:[#allocation2 + $0x28c] sm:$0xff]
    %v267 = vld [vmem:[#allocation2 + $0x294] sm:$0xff]
    %v268 = vld [vmem:[#allocation2 + $0x29c] sm:$0xff]
    %v269 = vld [vmem:[#allocation2 + $0x2a4] sm:$0xf]
    %v270 = vld [vmem:[#allocation2 + $0x2a8] sm:$0xff]
    %v271 = vld [vmem:[#allocation2 + $0x2b0] sm:$0xff]
    %v272 = vld [vmem:[#allocation2 + $0x2b8] sm:$0xff]
    %v273 = vld [vmem:[#allocation2 + $0x2c0] sm:$0xff]
    %v274 = vld [vmem:[#allocation2 + $0x2c8] sm:$0xff]
    %v275 = vld [vmem:[#allocation2 + $0x2d0] sm:$0xff]
    %v276 = vld [vmem:[#allocation2 + $0x2d8] sm:$0xff]
    %v277 = vld [vmem:[#allocation2 + $0x2e0] sm:$0xff]
    %v278 = vld [vmem:[#allocation2 + $0x2e8] sm:$0xf]
    %v279 = vld [vmem:[#allocation2 + $0x2ec] sm:$0xff]
    %v280 = vld [vmem:[#allocation2 + $0x2f4] sm:$0xff]
    %v281 = vld [vmem:[#allocation2 + $0x2fc] sm:$0xff]
    %v282 = vld [vmem:[#allocation2 + $0x304] sm:$0xff]
    %v283 = vld [vmem:[#allocation2 + $0x30c] sm:$0xff]
    %v284 = vld [vmem:[#allocation2 + $0x314] sm:$0xff]
    %v285 = vld [vmem:[#allocation2 + $0x31c] sm:$0xff]
    %v286 = vld [vmem:[#allocation2 + $0x324] sm:$0xff]
    %v287 = vld [vmem:[#allocation2 + $0x32c] sm:$0xf]
    %v288 = vld [vmem:[#allocation2 + $0x330] sm:$0xff]
    %v289 = vld [vmem:[#allocation2 + $0x338] sm:$0xff]
    %v290 = vld [vmem:[#allocation2 + $0x340] sm:$0xff]
    %v291 = vld [vmem:[#allocation2 + $0x348] sm:$0xff]
    %v292 = vld [vmem:[#allocation2 + $0x350] sm:$0xff]
    %v293 = vld [vmem:[#allocation2 + $0x358] sm:$0xff]
    %v294 = vld [vmem:[#allocation2 + $0x360] sm:$0xff]
    %v295 = vld [vmem:[#allocation2 + $0x368] sm:$0xff]
    %v296 = vld [vmem:[#allocation2 + $0x370] sm:$0xf]
    %v297 = vld [vmem:[#allocation2 + $0x374] sm:$0xff]
    %v298 = vld [vmem:[#allocation2 + $0x37c] sm:$0xff]
    %v299 = vld [vmem:[#allocation2 + $0x384] sm:$0xff]
    %v300 = vld [vmem:[#allocation2 + $0x38c] sm:$0xff]
    %v301 = vld [vmem:[#allocation2 + $0x394] sm:$0xff]
    %v302 = vld [vmem:[#allocation2 + $0x39c] sm:$0xff]
    %v303 = vld [vmem:[#allocation2 + $0x3a4] sm:$0xff]
    %v304 = vld [vmem:[#allocation2 + $0x3ac] sm:$0xff]
    %v305 = vld [vmem:[#allocation2 + $0x3b4] sm:$0xf]
    %v306 = vld [vmem:[#allocation2 + $0x3b8] sm:$0xff]
    %v307 = vld [vmem:[#allocation2 + $0x3c0] sm:$0xff]
    %v308 = vld [vmem:[#allocation2 + $0x3c8] sm:$0xff]
    %v309 = vld [vmem:[#allocation2 + $0x3d0] sm:$0xff]
    %v310 = vld [vmem:[#allocation2 + $0x3d8] sm:$0xff]
    %v311 = vld [vmem:[#allocation2 + $0x3e0] sm:$0xff]
    %v312 = vld [vmem:[#allocation2 + $0x3e8] sm:$0xff]
    %v313 = vld [vmem:[#allocation2 + $0x3f0] sm:$0xff]
    %v314 = vld [vmem:[#allocation2 + $0x3f8] sm:$0xf]
    %v315 = vld [vmem:[#allocation2 + $0x3fc] sm:$0xff]
    %v316 = vld [vmem:[#allocation2 + $0x404] sm:$0xff]
    %v317 = vld [vmem:[#allocation2 + $0x40c] sm:$0xff]
    %v318 = vld [vmem:[#allocation2 + $0x414] sm:$0xff]
    %v319 = vld [vmem:[#allocation2 + $0x41c] sm:$0xff]
    %v320 = vld [vmem:[#allocation2 + $0x424] sm:$0xff]
    %v321 = vld [vmem:[#allocation2 + $0x42c] sm:$0xff]
    %v322 = vld [vmem:[#allocation2 + $0x434] sm:$0xff]
    %v323 = vld [vmem:[#allocation2 + $0x43c] sm:$0xf]
    %v324 = vld [vmem:[#allocation2 + $0x440] sm:$0xff]
    %v325 = vld [vmem:[#allocation2 + $0x448] sm:$0xff]
    %v326 = vld [vmem:[#allocation2 + $0x450] sm:$0xff]
    %v327 = vld [vmem:[#allocation2 + $0x458] sm:$0xff]
    %v328 = vld [vmem:[#allocation2 + $0x460] sm:$0xff]
    %v329 = vld [vmem:[#allocation2 + $0x468] sm:$0xff]
    %v330 = vld [vmem:[#allocation2 + $0x470] sm:$0xff]
    %v331 = vld [vmem:[#allocation2 + $0x478] sm:$0xff]
    %v332 = vld [vmem:[#allocation2 + $0x480] sm:$0xf]
    %v333 = vld [vmem:[#allocation2 + $0x484] sm:$0xff]
    %v334 = vld [vmem:[#allocation2 + $0x48c] sm:$0xff]
    %v335 = vld [vmem:[#allocation2 + $0x494] sm:$0xff]
    %v336 = vld [vmem:[#allocation2 + $0x49c] sm:$0xff]
    %v337 = vld [vmem:[#allocation2 + $0x4a4] sm:$0xff]
    %v338 = vld [vmem:[#allocation2 + $0x4ac] sm:$0xff]
    %v339 = vld [vmem:[#allocation2 + $0x4b4] sm:$0xff]
    %v340 = vld [vmem:[#allocation2 + $0x4bc] sm:$0xff]
    %v341 = vld [vmem:[#allocation2 + $0x4c4] sm:$0xf]
    %v342 = vld [vmem:[#allocation2 + $0x4c8] sm:$0xff]
    %v343 = vld [vmem:[#allocation2 + $0x4d0] sm:$0xff]
    %v344 = vld [vmem:[#allocation2 + $0x4d8] sm:$0xff]
    %v345 = vld [vmem:[#allocation2 + $0x4e0] sm:$0xff]
    %v346 = vld [vmem:[#allocation2 + $0x4e8] sm:$0xff]
    %v347 = vld [vmem:[#allocation2 + $0x4f0] sm:$0xff]
    %v348 = vld [vmem:[#allocation2 + $0x4f8] sm:$0xff]
    %v349 = vld [vmem:[#allocation2 + $0x500] sm:$0xff]
    %v350 = vld [vmem:[#allocation2 + $0x508] sm:$0xf]
    %v351 = vld [vmem:[#allocation2 + $0x50c] sm:$0xff]
    %v352 = vld [vmem:[#allocation2 + $0x514] sm:$0xff]
    %v353 = vld [vmem:[#allocation2 + $0x51c] sm:$0xff]
    %v354 = vld [vmem:[#allocation2 + $0x524] sm:$0xff]
    %v355 = vld [vmem:[#allocation2 + $0x52c] sm:$0xff]
    %v356 = vld [vmem:[#allocation2 + $0x534] sm:$0xff]
    %v357 = vld [vmem:[#allocation2 + $0x53c] sm:$0xff]
    %v358 = vld [vmem:[#allocation2 + $0x544] sm:$0xff]
    %v359 = vld [vmem:[#allocation2 + $0x54c] sm:$0xf]
    %v360 = vld [vmem:[#allocation2 + $0x550] sm:$0xff]
    %v361 = vld [vmem:[#allocation2 + $0x558] sm:$0xff]
    %v362 = vld [vmem:[#allocation2 + $0x560] sm:$0xff]
    %v363 = vld [vmem:[#allocation2 + $0x568] sm:$0xff]
    %v364 = vld [vmem:[#allocation2 + $0x570] sm:$0xff]
    %v365 = vld [vmem:[#allocation2 + $0x578] sm:$0xff]
    %v366 = vld [vmem:[#allocation2 + $0x580] sm:$0xff]
    %v367 = vld [vmem:[#allocation2 + $0x588] sm:$0xff]
    %v368 = vld [vmem:[#allocation2 + $0x590] sm:$0xf]
    %v369 = vld [vmem:[#allocation2 + $0x594] sm:$0xff]
    %v370 = vld [vmem:[#allocation2 + $0x59c] sm:$0xff]
    %v371 = vld [vmem:[#allocation2 + $0x5a4] sm:$0xff]
    %v372 = vld [vmem:[#allocation2 + $0x5ac] sm:$0xff]
    %v373 = vld [vmem:[#allocation2 + $0x5b4] sm:$0xff]
    %v374 = vld [vmem:[#allocation2 + $0x5bc] sm:$0xff]
    %v375 = vld [vmem:[#allocation2 + $0x5c4] sm:$0xff]
    %v376 = vld [vmem:[#allocation2 + $0x5cc] sm:$0xff]
    %v377 = vld [vmem:[#allocation2 + $0x5d4] sm:$0xf]
    %v378 = vld [vmem:[#allocation2 + $0x5d8] sm:$0xff]
    %v379 = vld [vmem:[#allocation2 + $0x5e0] sm:$0xff]
    %v380 = vld [vmem:[#allocation2 + $0x5e8] sm:$0xff]
    %v381 = vld [vmem:[#allocation2 + $0x5f0] sm:$0xff]
    %v382 = vld [vmem:[#allocation2 + $0x5f8] sm:$0xff]
    %v383 = vld [vmem:[#allocation2 + $0x600] sm:$0xff]
    %v384 = vld [vmem:[#allocation2 + $0x608] sm:$0xff]
    %v385 = vld [vmem:[#allocation2 + $0x610] sm:$0xff]
    %v386 = vld [vmem:[#allocation2 + $0x618] sm:$0xf]
    %v387 = vld [vmem:[#allocation2 + $0x61c] sm:$0xff]
    %v388 = vld [vmem:[#allocation2 + $0x624] sm:$0xff]
    %v389 = vld [vmem:[#allocation2 + $0x62c] sm:$0xff]
    %v390 = vld [vmem:[#allocation2 + $0x634] sm:$0xff]
    %v391 = vld [vmem:[#allocation2 + $0x63c] sm:$0xff]
    %v392 = vld [vmem:[#allocation2 + $0x644] sm:$0xff]
    %v393 = vld [vmem:[#allocation2 + $0x64c] sm:$0xff]
    %v394 = vld [vmem:[#allocation2 + $0x654] sm:$0xff]
    %v395 = vld [vmem:[#allocation2 + $0x65c] sm:$0xf]
    %v396 = vld [vmem:[#allocation2 + $0x660] sm:$0xff]
    %v397 = vld [vmem:[#allocation2 + $0x668] sm:$0xff]
    %v398 = vld [vmem:[#allocation2 + $0x670] sm:$0xff]
    %v399 = vld [vmem:[#allocation2 + $0x678] sm:$0xff]
    %v400 = vld [vmem:[#allocation2 + $0x680] sm:$0xff]
    %v401 = vld [vmem:[#allocation2 + $0x688] sm:$0xff]
    %v402 = vld [vmem:[#allocation2 + $0x690] sm:$0xff]
    %v403 = vld [vmem:[#allocation2 + $0x698] sm:$0xff]
    %v404 = vld [vmem:[#allocation2 + $0x6a0] sm:$0xf]
    %v405 = vld [vmem:[#allocation2 + $0x6a4] sm:$0xff]
    %v406 = vld [vmem:[#allocation2 + $0x6ac] sm:$0xff]
    %v407 = vld [vmem:[#allocation2 + $0x6b4] sm:$0xff]
    %v408 = vld [vmem:[#allocation2 + $0x6bc] sm:$0xff]
    %v409 = vld [vmem:[#allocation2 + $0x6c4] sm:$0xff]
    %v410 = vld [vmem:[#allocation2 + $0x6cc] sm:$0xff]
    %v411 = vld [vmem:[#allocation2 + $0x6d4] sm:$0xff]
    %v412 = vld [vmem:[#allocation2 + $0x6dc] sm:$0xff]
    %v413 = vld [vmem:[#allocation2 + $0x6e4] sm:$0xf]
    %v414 = vld [vmem:[#allocation2 + $0x6e8] sm:$0xff]
    %v415 = vld [vmem:[#allocation2 + $0x6f0] sm:$0xff]
    %v416 = vld [vmem:[#allocation2 + $0x6f8] sm:$0xff]
    %v417 = vld [vmem:[#allocation2 + $0x700] sm:$0xff]
    %v418 = vld [vmem:[#allocation2 + $0x708] sm:$0xff]
    %v419 = vld [vmem:[#allocation2 + $0x710] sm:$0xff]
    %v420 = vld [vmem:[#allocation2 + $0x718] sm:$0xff]
    %v421 = vld [vmem:[#allocation2 + $0x720] sm:$0xff]
    %v422 = vld [vmem:[#allocation2 + $0x728] sm:$0xf]
    %v423 = vld [vmem:[#allocation2 + $0x72c] sm:$0xff]
    %v424 = vld [vmem:[#allocation2 + $0x734] sm:$0xff]
    %v425 = vld [vmem:[#allocation2 + $0x73c] sm:$0xff]
    %v426 = vld [vmem:[#allocation2 + $0x744] sm:$0xff]
    %v427 = vld [vmem:[#allocation2 + $0x74c] sm:$0xff]
    %v428 = vld [vmem:[#allocation2 + $0x754] sm:$0xff]
    %v429 = vld [vmem:[#allocation2 + $0x75c] sm:$0xff]
    %v430 = vld [vmem:[#allocation2 + $0x764] sm:$0xff]
    %v431 = vld [vmem:[#allocation2 + $0x76c] sm:$0xf]
    %v432 = vld [vmem:[#allocation2 + $0x770] sm:$0xff]
    %v433 = vld [vmem:[#allocation2 + $0x778] sm:$0xff]
    %v434 = vld [vmem:[#allocation2 + $0x780] sm:$0xff]
    %v435 = vld [vmem:[#allocation2 + $0x788] sm:$0xff]
    %v436 = vld [vmem:[#allocation2 + $0x790] sm:$0xff]
    %v437 = vld [vmem:[#allocation2 + $0x798] sm:$0xff]
    %v438 = vld [vmem:[#allocation2 + $0x7a0] sm:$0xff]
    %v439 = vld [vmem:[#allocation2 + $0x7a8] sm:$0xff]
    %v440 = vld [vmem:[#allocation2 + $0x7b0] sm:$0xf]
    %v441 = vld [vmem:[#allocation2 + $0x7b4] sm:$0xff]
    %v442 = vld [vmem:[#allocation2 + $0x7bc] sm:$0xff]
    %v443 = vld [vmem:[#allocation2 + $0x7c4] sm:$0xff]
    %v444 = vld [vmem:[#allocation2 + $0x7cc] sm:$0xff]
    %v445 = vld [vmem:[#allocation2 + $0x7d4] sm:$0xff]
    %v446 = vld [vmem:[#allocation2 + $0x7dc] sm:$0xff]
    %v447 = vld [vmem:[#allocation2 + $0x7e4] sm:$0xff]
    %v448 = vld [vmem:[#allocation2 + $0x7ec] sm:$0xff]
    %v449 = vld [vmem:[#allocation2 + $0x7f4] sm:$0xf]
    %v450 = vld [vmem:[#allocation2 + $0x7f8] sm:$0xff]
    %v451 = vld [vmem:[#allocation2 + $0x800] sm:$0xff]
    %v452 = vld [vmem:[#allocation2 + $0x808] sm:$0xff]
    %v453 = vld [vmem:[#allocation2 + $0x810] sm:$0xff]
    %v454 = vld [vmem:[#allocation2 + $0x818] sm:$0xff]
    %v455 = vld [vmem:[#allocation2 + $0x820] sm:$0xff]
    %v456 = vld [vmem:[#allocation2 + $0x828] sm:$0xff]
    %v457 = vld [vmem:[#allocation2 + $0x830] sm:$0xff]
    %v458 = vld [vmem:[#allocation2 + $0x838] sm:$0xf]
    %v459 = vld [vmem:[#allocation2 + $0x83c] sm:$0xff]
    %v460 = vld [vmem:[#allocation2 + $0x844] sm:$0xff]
    %v461 = vld [vmem:[#allocation2 + $0x84c] sm:$0xff]
    %v462 = vld [vmem:[#allocation2 + $0x854] sm:$0xff]
    %v463 = vld [vmem:[#allocation2 + $0x85c] sm:$0xff]
    %v464 = vld [vmem:[#allocation2 + $0x864] sm:$0xff]
    %v465 = vld [vmem:[#allocation2 + $0x86c] sm:$0xff]
    %v466 = vld [vmem:[#allocation2 + $0x874] sm:$0xff]
    %v467 = vld [vmem:[#allocation2 + $0x87c] sm:$0xf]
    %v468 = vld [vmem:[#allocation2 + $0x880] sm:$0xff]
    %v469 = vld [vmem:[#allocation2 + $0x888] sm:$0xff]
    %v470 = vld [vmem:[#allocation2 + $0x890] sm:$0xff]
    %v471 = vld [vmem:[#allocation2 + $0x898] sm:$0xff]
    %v472 = vld [vmem:[#allocation2 + $0x8a0] sm:$0xff]
    %v473 = vld [vmem:[#allocation2 + $0x8a8] sm:$0xff]
    %v474 = vld [vmem:[#allocation2 + $0x8b0] sm:$0xff]
    %v475 = vld [vmem:[#allocation2 + $0x8b8] sm:$0xff]
    %v476 = vld [vmem:[#allocation2 + $0x8c0] sm:$0xf]
    %v477 = vld [vmem:[#allocation2 + $0x8c4] sm:$0xff]
    %v478 = vld [vmem:[#allocation2 + $0x8cc] sm:$0xff]
    %v479 = vld [vmem:[#allocation2 + $0x8d4] sm:$0xff]
    %v480 = vld [vmem:[#allocation2 + $0x8dc] sm:$0xff]
    %v481 = vld [vmem:[#allocation2 + $0x8e4] sm:$0xff]
    %v482 = vld [vmem:[#allocation2 + $0x8ec] sm:$0xff]
    %v483 = vld [vmem:[#allocation2 + $0x8f4] sm:$0xff]
    %v484 = vld [vmem:[#allocation2 + $0x8fc] sm:$0xff]
    %v485 = vld [vmem:[#allocation2 + $0x904] sm:$0xf]
    %v486 = vld [vmem:[#allocation2 + $0x908] sm:$0xff]
    %v487 = vld [vmem:[#allocation2 + $0x910] sm:$0xff]
    %v488 = vld [vmem:[#allocation2 + $0x918] sm:$0xff]
    %v489 = vld [vmem:[#allocation2 + $0x920] sm:$0xff]
    %v490 = vld [vmem:[#allocation2 + $0x928] sm:$0xff]
    %v491 = vld [vmem:[#allocation2 + $0x930] sm:$0xff]
    %v492 = vld [vmem:[#allocation2 + $0x938] sm:$0xff]
    %v493 = vld [vmem:[#allocation2 + $0x940] sm:$0xff]
    %v494 = vld [vmem:[#allocation2 + $0x948] sm:$0xf]
    %v495 = vld [vmem:[#allocation2 + $0x94c] sm:$0xff]
    %v496 = vld [vmem:[#allocation2 + $0x954] sm:$0xff]
    %v497 = vld [vmem:[#allocation2 + $0x95c] sm:$0xff]
    %v498 = vld [vmem:[#allocation2 + $0x964] sm:$0xff]
    %v499 = vld [vmem:[#allocation2 + $0x96c] sm:$0xff]
    %v500 = vld [vmem:[#allocation2 + $0x974] sm:$0xff]
    %v501 = vld [vmem:[#allocation2 + $0x97c] sm:$0xff]
    %v502 = vld [vmem:[#allocation2 + $0x984] sm:$0xff]
    %v503 = vld [vmem:[#allocation2 + $0x98c] sm:$0xf]
    %v504 = vld [vmem:[#allocation2 + $0x990] sm:$0xff]
    %v505 = vld [vmem:[#allocation2 + $0x998] sm:$0xff]
    %v506 = vld [vmem:[#allocation2 + $0x9a0] sm:$0xff]
    %v507 = vld [vmem:[#allocation2 + $0x9a8] sm:$0xff]
    %v508 = vld [vmem:[#allocation2 + $0x9b0] sm:$0xff]
    %v509 = vld [vmem:[#allocation2 + $0x9b8] sm:$0xff]
    %v510 = vld [vmem:[#allocation2 + $0x9c0] sm:$0xff]
    %v511 = vld [vmem:[#allocation2 + $0x9c8] sm:$0xff]
    %v512 = vld [vmem:[#allocation2 + $0x9d0] sm:$0xf]
    %v513 = vld [vmem:[#allocation2 + $0x9d4] sm:$0xff]
    %v514 = vld [vmem:[#allocation2 + $0x9dc] sm:$0xff]
    %v515 = vld [vmem:[#allocation2 + $0x9e4] sm:$0xff]
    %v516 = vld [vmem:[#allocation2 + $0x9ec] sm:$0xff]
    %v517 = vld [vmem:[#allocation2 + $0x9f4] sm:$0xff]
    %v518 = vld [vmem:[#allocation2 + $0x9fc] sm:$0xff]
    %v519 = vld [vmem:[#allocation2 + $0xa04] sm:$0xff]
    %v520 = vld [vmem:[#allocation2 + $0xa0c] sm:$0xff]
    %v521 = vld [vmem:[#allocation2 + $0xa14] sm:$0xf]
    %v522 = vld [vmem:[#allocation2 + $0xa18] sm:$0xff]
    %v523 = vld [vmem:[#allocation2 + $0xa20] sm:$0xff]
    %v524 = vld [vmem:[#allocation2 + $0xa28] sm:$0xff]
    %v525 = vld [vmem:[#allocation2 + $0xa30] sm:$0xff]
    %v526 = vld [vmem:[#allocation2 + $0xa38] sm:$0xff]
    %v527 = vld [vmem:[#allocation2 + $0xa40] sm:$0xff]
    %v528 = vld [vmem:[#allocation2 + $0xa48] sm:$0xff]
    %v529 = vld [vmem:[#allocation2 + $0xa50] sm:$0xff]
    %v530 = vld [vmem:[#allocation2 + $0xa58] sm:$0xf]
    %v531 = vld [vmem:[#allocation2 + $0xa5c] sm:$0xff]
    %v532 = vld [vmem:[#allocation2 + $0xa64] sm:$0xff]
    %v533 = vld [vmem:[#allocation2 + $0xa6c] sm:$0xff]
    %v534 = vld [vmem:[#allocation2 + $0xa74] sm:$0xff]
    %v535 = vld [vmem:[#allocation2 + $0xa7c] sm:$0xff]
    %v536 = vld [vmem:[#allocation2 + $0xa84] sm:$0xff]
    %v537 = vld [vmem:[#allocation2 + $0xa8c] sm:$0xff]
    %v538 = vld [vmem:[#allocation2 + $0xa94] sm:$0xff]
    %v539 = vld [vmem:[#allocation2 + $0xa9c] sm:$0xf]
    %v540 = vld [vmem:[#allocation2 + $0xaa0] sm:$0xff]
    %v541 = vld [vmem:[#allocation2 + $0xaa8] sm:$0xff]
    %v542 = vld [vmem:[#allocation2 + $0xab0] sm:$0xff]
    %v543 = vld [vmem:[#allocation2 + $0xab8] sm:$0xff]
    %v544 = vld [vmem:[#allocation2 + $0xac0] sm:$0xff]
    %v545 = vld [vmem:[#allocation2 + $0xac8] sm:$0xff]
    %v546 = vld [vmem:[#allocation2 + $0xad0] sm:$0xff]
    %v547 = vld [vmem:[#allocation2 + $0xad8] sm:$0xff]
    %v548 = vld [vmem:[#allocation2 + $0xae0] sm:$0xf]
    %v549 = vld [vmem:[#allocation2 + $0xae4] sm:$0xff]
    %v550 = vld [vmem:[#allocation2 + $0xaec] sm:$0xff]
    %v551 = vld [vmem:[#allocation2 + $0xaf4] sm:$0xff]
    %v552 = vld [vmem:[#allocation2 + $0xafc] sm:$0xff]
    %v553 = vld [vmem:[#allocation2 + $0xb04] sm:$0xff]
    %v554 = vld [vmem:[#allocation2 + $0xb0c] sm:$0xff]
    %v555 = vld [vmem:[#allocation2 + $0xb14] sm:$0xff]
    %v556 = vld [vmem:[#allocation2 + $0xb1c] sm:$0xff]
    %v557 = vld [vmem:[#allocation2 + $0xb24] sm:$0xf]
    %v558 = vld [vmem:[#allocation2 + $0xb28] sm:$0xff]
    %v559 = vld [vmem:[#allocation2 + $0xb30] sm:$0xff]
    %v560 = vld [vmem:[#allocation2 + $0xb38] sm:$0xff]
    %v561 = vld [vmem:[#allocation2 + $0xb40] sm:$0xff]
    %v562 = vld [vmem:[#allocation2 + $0xb48] sm:$0xff]
    %v563 = vld [vmem:[#allocation2 + $0xb50] sm:$0xff]
    %v564 = vld [vmem:[#allocation2 + $0xb58] sm:$0xff]
    %v565 = vld [vmem:[#allocation2 + $0xb60] sm:$0xff]
    %v566 = vld [vmem:[#allocation2 + $0xb68] sm:$0xf]
    %567 = vxpose.xlu0.c.b16.start [1/8] %v158, 128
    %568 = vxpose.xlu0.c.b16.cont [2/8] %v159, 128
    %569 = vxpose.xlu0.c.b16.cont [3/8] %v160, 128
    %570 = vxpose.xlu0.c.b16.cont [4/8] %v161, 128
    %571 = vxpose.xlu0.c.b16.cont [5/8] %v162, 128
    %572 = vxpose.xlu0.c.b16.cont [6/8] %v163, 128
    %573 = vxpose.xlu0.c.b16.cont [7/8] %v164, 128
    %574 = vxpose.xlu0.c.b16.end [8/8] %v165, 128
    %v575 = vpop.trf.xlu0
    %v576 = vpop.trf.xlu0
    %v577 = vpop.trf.xlu0
    %v578 = vpop.trf.xlu0
    %v579 = vpop.trf.xlu0
    %v580 = vpop.trf.xlu0
    %v581 = vpop.trf.xlu0
    %v582 = vpop.trf.xlu0
    %583 = vxpose.xlu0.c.b16.start [1/8] %v166, 128
    %584 = vxpose.xlu0.c.b16.cont [2/8] %v167, 128
    %585 = vxpose.xlu0.c.b16.cont [3/8] %v168, 128
    %586 = vxpose.xlu0.c.b16.cont [4/8] %v169, 128
    %587 = vxpose.xlu0.c.b16.cont [5/8] %v170, 128
    %588 = vxpose.xlu0.c.b16.cont [6/8] %v171, 128
    %589 = vxpose.xlu0.c.b16.cont [7/8] %v172, 128
    %590 = vxpose.xlu0.c.b16.end [8/8] %v173, 128
    %v591 = vpop.trf.xlu0
    %v592 = vpop.trf.xlu0
    %v593 = vpop.trf.xlu0
    %v594 = vpop.trf.xlu0
    %v595 = vpop.trf.xlu0
    %v596 = vpop.trf.xlu0
    %v597 = vpop.trf.xlu0
    %v598 = vpop.trf.xlu0
    %599 = vxpose.xlu0.c.b16.start [1/8] %v174, 128
    %600 = vxpose.xlu0.c.b16.cont [2/8] %v175, 128
    %601 = vxpose.xlu0.c.b16.cont [3/8] %v176, 128
    %602 = vxpose.xlu0.c.b16.cont [4/8] %v177, 128
    %603 = vxpose.xlu0.c.b16.cont [5/8] %v178, 128
    %604 = vxpose.xlu0.c.b16.cont [6/8] %v179, 128
    %605 = vxpose.xlu0.c.b16.cont [7/8] 0, 128
    %606 = vxpose.xlu0.c.b16.end [8/8] 0, 128
    %v607 = vpop.trf.xlu0
    %v608 = vpop.trf.xlu0
    %v609 = vpop.trf.xlu0
    %v610 = vpop.trf.xlu0
    %v611 = vpop.trf.xlu0
    %v612 = vpop.trf.xlu0
    %v613 = vpop.trf.xlu0
    %v614 = vpop.trf.xlu0
    %v1002 = vunpack.c.l.b16 %v180
    %v1003 = vunpack.c.h.b16 %v180
    %v1004 = vunpack.c.l.b16 %v181
    %v1005 = vunpack.c.h.b16 %v181
    %v1006 = vunpack.c.l.b16 %v182
    %v1007 = vunpack.c.h.b16 %v182
    %v1008 = vunpack.c.l.b16 %v183
    %v1009 = vunpack.c.h.b16 %v183
    %v1010 = vunpack.c.l.b16 %v184
    %v1011 = vunpack.c.h.b16 %v184
    %v1012 = vunpack.c.l.b16 %v185
    %v1013 = vunpack.c.h.b16 %v185
    %v1014 = vunpack.c.l.b16 %v186
    %v1015 = vunpack.c.h.b16 %v186
    %v1016 = vunpack.c.l.b16 %v187
    %v1017 = vunpack.c.h.b16 %v187
    %v1018 = vunpack.c.l.b16 %v188
    %v1019 = vunpack.c.l.b16 %v189
    %v1020 = vunpack.c.h.b16 %v189
    %v1021 = vunpack.c.l.b16 %v190
    %v1022 = vunpack.c.h.b16 %v190
    %v1023 = vunpack.c.l.b16 %v191
    %v1024 = vunpack.c.h.b16 %v191
    %v1025 = vunpack.c.l.b16 %v192
    %v1026 = vunpack.c.h.b16 %v192
    %v1027 = vunpack.c.l.b16 %v193
    %v1028 = vunpack.c.h.b16 %v193
    %v1029 = vunpack.c.l.b16 %v194
    %v1030 = vunpack.c.h.b16 %v194
    %v1031 = vunpack.c.l.b16 %v195
    %v1032 = vunpack.c.h.b16 %v195
    %v1033 = vunpack.c.l.b16 %v196
    %v1034 = vunpack.c.h.b16 %v196
    %v1035 = vunpack.c.l.b16 %v197
    %v1036 = vunpack.c.l.b16 %v198
    %v1037 = vunpack.c.h.b16 %v198
    %v1038 = vunpack.c.l.b16 %v199
    %v1039 = vunpack.c.h.b16 %v199
    %v1040 = vunpack.c.l.b16 %v200
    %v1041 = vunpack.c.h.b16 %v200
    %v1042 = vunpack.c.l.b16 %v201
    %v1043 = vunpack.c.h.b16 %v201
    %v1044 = vunpack.c.l.b16 %v202
    %v1045 = vunpack.c.h.b16 %v202
    %v1046 = vunpack.c.l.b16 %v203
    %v1047 = vunpack.c.h.b16 %v203
    %v1048 = vunpack.c.l.b16 %v204
    %v1049 = vunpack.c.h.b16 %v204
    %v1050 = vunpack.c.l.b16 %v205
    %v1051 = vunpack.c.h.b16 %v205
    %v1052 = vunpack.c.l.b16 %v206
    %v1053 = vunpack.c.l.b16 %v207
    %v1054 = vunpack.c.h.b16 %v207
    %v1055 = vunpack.c.l.b16 %v208
    %v1056 = vunpack.c.h.b16 %v208
    %v1057 = vunpack.c.l.b16 %v209
    %v1058 = vunpack.c.h.b16 %v209
    %v1059 = vunpack.c.l.b16 %v210
    %v1060 = vunpack.c.h.b16 %v210
    %v1061 = vunpack.c.l.b16 %v211
    %v1062 = vunpack.c.h.b16 %v211
    %v1063 = vunpack.c.l.b16 %v212
    %v1064 = vunpack.c.h.b16 %v212
    %v1065 = vunpack.c.l.b16 %v213
    %v1066 = vunpack.c.h.b16 %v213
    %v1067 = vunpack.c.l.b16 %v214
    %v1068 = vunpack.c.h.b16 %v214
    %v1069 = vunpack.c.l.b16 %v215
    %v1070 = vunpack.c.l.b16 %v216
    %v1071 = vunpack.c.h.b16 %v216
    %v1072 = vunpack.c.l.b16 %v217
    %v1073 = vunpack.c.h.b16 %v217
    %v1074 = vunpack.c.l.b16 %v218
    %v1075 = vunpack.c.h.b16 %v218
    %v1076 = vunpack.c.l.b16 %v219
    %v1077 = vunpack.c.h.b16 %v219
    %v1078 = vunpack.c.l.b16 %v220
    %v1079 = vunpack.c.h.b16 %v220
    %v1080 = vunpack.c.l.b16 %v221
    %v1081 = vunpack.c.h.b16 %v221
    %v1082 = vunpack.c.l.b16 %v222
    %v1083 = vunpack.c.h.b16 %v222
    %v1084 = vunpack.c.l.b16 %v223
    %v1085 = vunpack.c.h.b16 %v223
    %v1086 = vunpack.c.l.b16 %v224
    %v1087 = vunpack.c.l.b16 %v225
    %v1088 = vunpack.c.h.b16 %v225
    %v1089 = vunpack.c.l.b16 %v226
    %v1090 = vunpack.c.h.b16 %v226
    %v1091 = vunpack.c.l.b16 %v227
    %v1092 = vunpack.c.h.b16 %v227
    %v1093 = vunpack.c.l.b16 %v228
    %v1094 = vunpack.c.h.b16 %v228
    %v1095 = vunpack.c.l.b16 %v229
    %v1096 = vunpack.c.h.b16 %v229
    %v1097 = vunpack.c.l.b16 %v230
    %v1098 = vunpack.c.h.b16 %v230
    %v1099 = vunpack.c.l.b16 %v231
    %v1100 = vunpack.c.h.b16 %v231
    %v1101 = vunpack.c.l.b16 %v232
    %v1102 = vunpack.c.h.b16 %v232
    %v1103 = vunpack.c.l.b16 %v233
    %v1104 = vunpack.c.l.b16 %v234
    %v1105 = vunpack.c.h.b16 %v234
    %v1106 = vunpack.c.l.b16 %v235
    %v1107 = vunpack.c.h.b16 %v235
    %v1108 = vunpack.c.l.b16 %v236
    %v1109 = vunpack.c.h.b16 %v236
    %v1110 = vunpack.c.l.b16 %v237
    %v1111 = vunpack.c.h.b16 %v237
    %v1112 = vunpack.c.l.b16 %v238
    %v1113 = vunpack.c.h.b16 %v238
    %v1114 = vunpack.c.l.b16 %v239
    %v1115 = vunpack.c.h.b16 %v239
    %v1116 = vunpack.c.l.b16 %v240
    %v1117 = vunpack.c.h.b16 %v240
    %v1118 = vunpack.c.l.b16 %v241
    %v1119 = vunpack.c.h.b16 %v241
    %v1120 = vunpack.c.l.b16 %v242
    %v1121 = vunpack.c.l.b16 %v243
    %v1122 = vunpack.c.h.b16 %v243
    %v1123 = vunpack.c.l.b16 %v244
    %v1124 = vunpack.c.h.b16 %v244
    %v1125 = vunpack.c.l.b16 %v245
    %v1126 = vunpack.c.h.b16 %v245
    %v1127 = vunpack.c.l.b16 %v246
    %v1128 = vunpack.c.h.b16 %v246
    %v1129 = vunpack.c.l.b16 %v247
    %v1130 = vunpack.c.h.b16 %v247
    %v1131 = vunpack.c.l.b16 %v248
    %v1132 = vunpack.c.h.b16 %v248
    %v1133 = vunpack.c.l.b16 %v249
    %v1134 = vunpack.c.h.b16 %v249
    %v1135 = vunpack.c.l.b16 %v250
    %v1136 = vunpack.c.h.b16 %v250
    %v1137 = vunpack.c.l.b16 %v251
    %v1138 = vunpack.c.l.b16 %v252
    %v1139 = vunpack.c.h.b16 %v252
    %v1140 = vunpack.c.l.b16 %v253
    %v1141 = vunpack.c.h.b16 %v253
    %v1142 = vunpack.c.l.b16 %v254
    %v1143 = vunpack.c.h.b16 %v254
    %v1144 = vunpack.c.l.b16 %v255
    %v1145 = vunpack.c.h.b16 %v255
    %v1146 = vunpack.c.l.b16 %v256
    %v1147 = vunpack.c.h.b16 %v256
    %v1148 = vunpack.c.l.b16 %v257
    %v1149 = vunpack.c.h.b16 %v257
    %v1150 = vunpack.c.l.b16 %v258
    %v1151 = vunpack.c.h.b16 %v258
    %v1152 = vunpack.c.l.b16 %v259
    %v1153 = vunpack.c.h.b16 %v259
    %v1154 = vunpack.c.l.b16 %v260
    %v1155 = vunpack.c.l.b16 %v261
    %v1156 = vunpack.c.h.b16 %v261
    %v1157 = vunpack.c.l.b16 %v262
    %v1158 = vunpack.c.h.b16 %v262
    %v1159 = vunpack.c.l.b16 %v263
    %v1160 = vunpack.c.h.b16 %v263
    %v1161 = vunpack.c.l.b16 %v264
    %v1162 = vunpack.c.h.b16 %v264
    %v1163 = vunpack.c.l.b16 %v265
    %v1164 = vunpack.c.h.b16 %v265
    %v1165 = vunpack.c.l.b16 %v266
    %v1166 = vunpack.c.h.b16 %v266
    %v1167 = vunpack.c.l.b16 %v267
    %v1168 = vunpack.c.h.b16 %v267
    %v1169 = vunpack.c.l.b16 %v268
    %v1170 = vunpack.c.h.b16 %v268
    %v1171 = vunpack.c.l.b16 %v269
    %v1172 = vunpack.c.l.b16 %v270
    %v1173 = vunpack.c.h.b16 %v270
    %v1174 = vunpack.c.l.b16 %v271
    %v1175 = vunpack.c.h.b16 %v271
    %v1176 = vunpack.c.l.b16 %v272
    %v1177 = vunpack.c.h.b16 %v272
    %v1178 = vunpack.c.l.b16 %v273
    %v1179 = vunpack.c.h.b16 %v273
    %v1180 = vunpack.c.l.b16 %v274
    %v1181 = vunpack.c.h.b16 %v274
    %v1182 = vunpack.c.l.b16 %v275
    %v1183 = vunpack.c.h.b16 %v275
    %v1184 = vunpack.c.l.b16 %v276
    %v1185 = vunpack.c.h.b16 %v276
    %v1186 = vunpack.c.l.b16 %v277
    %v1187 = vunpack.c.h.b16 %v277
    %v1188 = vunpack.c.l.b16 %v278
    %v1189 = vunpack.c.l.b16 %v279
    %v1190 = vunpack.c.h.b16 %v279
    %v1191 = vunpack.c.l.b16 %v280
    %v1192 = vunpack.c.h.b16 %v280
    %v1193 = vunpack.c.l.b16 %v281
    %v1194 = vunpack.c.h.b16 %v281
    %v1195 = vunpack.c.l.b16 %v282
    %v1196 = vunpack.c.h.b16 %v282
    %v1197 = vunpack.c.l.b16 %v283
    %v1198 = vunpack.c.h.b16 %v283
    %v1199 = vunpack.c.l.b16 %v284
    %v1200 = vunpack.c.h.b16 %v284
    %v1201 = vunpack.c.l.b16 %v285
    %v1202 = vunpack.c.h.b16 %v285
    %v1203 = vunpack.c.l.b16 %v286
    %v1204 = vunpack.c.h.b16 %v286
    %v1205 = vunpack.c.l.b16 %v287
    %v1206 = vunpack.c.l.b16 %v288
    %v1207 = vunpack.c.h.b16 %v288
    %v1208 = vunpack.c.l.b16 %v289
    %v1209 = vunpack.c.h.b16 %v289
    %v1210 = vunpack.c.l.b16 %v290
    %v1211 = vunpack.c.h.b16 %v290
    %v1212 = vunpack.c.l.b16 %v291
    %v1213 = vunpack.c.h.b16 %v291
    %v1214 = vunpack.c.l.b16 %v292
    %v1215 = vunpack.c.h.b16 %v292
    %v1216 = vunpack.c.l.b16 %v293
    %v1217 = vunpack.c.h.b16 %v293
    %v1218 = vunpack.c.l.b16 %v294
    %v1219 = vunpack.c.h.b16 %v294
    %v1220 = vunpack.c.l.b16 %v295
    %v1221 = vunpack.c.h.b16 %v295
    %v1222 = vunpack.c.l.b16 %v296
    %v1223 = vunpack.c.l.b16 %v297
    %v1224 = vunpack.c.h.b16 %v297
    %v1225 = vunpack.c.l.b16 %v298
    %v1226 = vunpack.c.h.b16 %v298
    %v1227 = vunpack.c.l.b16 %v299
    %v1228 = vunpack.c.h.b16 %v299
    %v1229 = vunpack.c.l.b16 %v300
    %v1230 = vunpack.c.h.b16 %v300
    %v1231 = vunpack.c.l.b16 %v301
    %v1232 = vunpack.c.h.b16 %v301
    %v1233 = vunpack.c.l.b16 %v302
    %v1234 = vunpack.c.h.b16 %v302
    %v1235 = vunpack.c.l.b16 %v303
    %v1236 = vunpack.c.h.b16 %v303
    %v1237 = vunpack.c.l.b16 %v304
    %v1238 = vunpack.c.h.b16 %v304
    %v1239 = vunpack.c.l.b16 %v305
    %v1240 = vunpack.c.l.b16 %v306
    %v1241 = vunpack.c.h.b16 %v306
    %v1242 = vunpack.c.l.b16 %v307
    %v1243 = vunpack.c.h.b16 %v307
    %v1244 = vunpack.c.l.b16 %v308
    %v1245 = vunpack.c.h.b16 %v308
    %v1246 = vunpack.c.l.b16 %v309
    %v1247 = vunpack.c.h.b16 %v309
    %v1248 = vunpack.c.l.b16 %v310
    %v1249 = vunpack.c.h.b16 %v310
    %v1250 = vunpack.c.l.b16 %v311
    %v1251 = vunpack.c.h.b16 %v311
    %v1252 = vunpack.c.l.b16 %v312
    %v1253 = vunpack.c.h.b16 %v312
    %v1254 = vunpack.c.l.b16 %v313
    %v1255 = vunpack.c.h.b16 %v313
    %v1256 = vunpack.c.l.b16 %v314
    %v1257 = vunpack.c.l.b16 %v315
    %v1258 = vunpack.c.h.b16 %v315
    %v1259 = vunpack.c.l.b16 %v316
    %v1260 = vunpack.c.h.b16 %v316
    %v1261 = vunpack.c.l.b16 %v317
    %v1262 = vunpack.c.h.b16 %v317
    %v1263 = vunpack.c.l.b16 %v318
    %v1264 = vunpack.c.h.b16 %v318
    %v1265 = vunpack.c.l.b16 %v319
    %v1266 = vunpack.c.h.b16 %v319
    %v1267 = vunpack.c.l.b16 %v320
    %v1268 = vunpack.c.h.b16 %v320
    %v1269 = vunpack.c.l.b16 %v321
    %v1270 = vunpack.c.h.b16 %v321
    %v1271 = vunpack.c.l.b16 %v322
    %v1272 = vunpack.c.h.b16 %v322
    %v1273 = vunpack.c.l.b16 %v323
    %v1274 = vunpack.c.l.b16 %v324
    %v1275 = vunpack.c.h.b16 %v324
    %v1276 = vunpack.c.l.b16 %v325
    %v1277 = vunpack.c.h.b16 %v325
    %v1278 = vunpack.c.l.b16 %v326
    %v1279 = vunpack.c.h.b16 %v326
    %v1280 = vunpack.c.l.b16 %v327
    %v1281 = vunpack.c.h.b16 %v327
    %v1282 = vunpack.c.l.b16 %v328
    %v1283 = vunpack.c.h.b16 %v328
    %v1284 = vunpack.c.l.b16 %v329
    %v1285 = vunpack.c.h.b16 %v329
    %v1286 = vunpack.c.l.b16 %v330
    %v1287 = vunpack.c.h.b16 %v330
    %v1288 = vunpack.c.l.b16 %v331
    %v1289 = vunpack.c.h.b16 %v331
    %v1290 = vunpack.c.l.b16 %v332
    %v1291 = vunpack.c.l.b16 %v333
    %v1292 = vunpack.c.h.b16 %v333
    %v1293 = vunpack.c.l.b16 %v334
    %v1294 = vunpack.c.h.b16 %v334
    %v1295 = vunpack.c.l.b16 %v335
    %v1296 = vunpack.c.h.b16 %v335
    %v1297 = vunpack.c.l.b16 %v336
    %v1298 = vunpack.c.h.b16 %v336
    %v1299 = vunpack.c.l.b16 %v337
    %v1300 = vunpack.c.h.b16 %v337
    %v1301 = vunpack.c.l.b16 %v338
    %v1302 = vunpack.c.h.b16 %v338
    %v1303 = vunpack.c.l.b16 %v339
    %v1304 = vunpack.c.h.b16 %v339
    %v1305 = vunpack.c.l.b16 %v340
    %v1306 = vunpack.c.h.b16 %v340
    %v1307 = vunpack.c.l.b16 %v341
    %v1308 = vunpack.c.l.b16 %v342
    %v1309 = vunpack.c.h.b16 %v342
    %v1310 = vunpack.c.l.b16 %v343
    %v1311 = vunpack.c.h.b16 %v343
    %v1312 = vunpack.c.l.b16 %v344
    %v1313 = vunpack.c.h.b16 %v344
    %v1314 = vunpack.c.l.b16 %v345
    %v1315 = vunpack.c.h.b16 %v345
    %v1316 = vunpack.c.l.b16 %v346
    %v1317 = vunpack.c.h.b16 %v346
    %v1318 = vunpack.c.l.b16 %v347
    %v1319 = vunpack.c.h.b16 %v347
    %v1320 = vunpack.c.l.b16 %v348
    %v1321 = vunpack.c.h.b16 %v348
    %v1322 = vunpack.c.l.b16 %v349
    %v1323 = vunpack.c.h.b16 %v349
    %v1324 = vunpack.c.l.b16 %v350
    %v1325 = vunpack.c.l.b16 %v351
    %v1326 = vunpack.c.h.b16 %v351
    %v1327 = vunpack.c.l.b16 %v352
    %v1328 = vunpack.c.h.b16 %v352
    %v1329 = vunpack.c.l.b16 %v353
    %v1330 = vunpack.c.h.b16 %v353
    %v1331 = vunpack.c.l.b16 %v354
    %v1332 = vunpack.c.h.b16 %v354
    %v1333 = vunpack.c.l.b16 %v355
    %v1334 = vunpack.c.h.b16 %v355
    %v1335 = vunpack.c.l.b16 %v356
    %v1336 = vunpack.c.h.b16 %v356
    %v1337 = vunpack.c.l.b16 %v357
    %v1338 = vunpack.c.h.b16 %v357
    %v1339 = vunpack.c.l.b16 %v358
    %v1340 = vunpack.c.h.b16 %v358
    %v1341 = vunpack.c.l.b16 %v359
    %v1342 = vunpack.c.l.b16 %v360
    %v1343 = vunpack.c.h.b16 %v360
    %v1344 = vunpack.c.l.b16 %v361
    %v1345 = vunpack.c.h.b16 %v361
    %v1346 = vunpack.c.l.b16 %v362
    %v1347 = vunpack.c.h.b16 %v362
    %v1348 = vunpack.c.l.b16 %v363
    %v1349 = vunpack.c.h.b16 %v363
    %v1350 = vunpack.c.l.b16 %v364
    %v1351 = vunpack.c.h.b16 %v364
    %v1352 = vunpack.c.l.b16 %v365
    %v1353 = vunpack.c.h.b16 %v365
    %v1354 = vunpack.c.l.b16 %v366
    %v1355 = vunpack.c.h.b16 %v366
    %v1356 = vunpack.c.l.b16 %v367
    %v1357 = vunpack.c.h.b16 %v367
    %v1358 = vunpack.c.l.b16 %v368
    %v1359 = vunpack.c.l.b16 %v369
    %v1360 = vunpack.c.h.b16 %v369
    %v1361 = vunpack.c.l.b16 %v370
    %v1362 = vunpack.c.h.b16 %v370
    %v1363 = vunpack.c.l.b16 %v371
    %v1364 = vunpack.c.h.b16 %v371
    %v1365 = vunpack.c.l.b16 %v372
    %v1366 = vunpack.c.h.b16 %v372
    %v1367 = vunpack.c.l.b16 %v373
    %v1368 = vunpack.c.h.b16 %v373
    %v1369 = vunpack.c.l.b16 %v374
    %v1370 = vunpack.c.h.b16 %v374
    %v1371 = vunpack.c.l.b16 %v375
    %v1372 = vunpack.c.h.b16 %v375
    %v1373 = vunpack.c.l.b16 %v376
    %v1374 = vunpack.c.h.b16 %v376
    %v1375 = vunpack.c.l.b16 %v377
    %v1376 = vunpack.c.l.b16 %v378
    %v1377 = vunpack.c.h.b16 %v378
    %v1378 = vunpack.c.l.b16 %v379
    %v1379 = vunpack.c.h.b16 %v379
    %v1380 = vunpack.c.l.b16 %v380
    %v1381 = vunpack.c.h.b16 %v380
    %v1382 = vunpack.c.l.b16 %v381
    %v1383 = vunpack.c.h.b16 %v381
    %v1384 = vunpack.c.l.b16 %v382
    %v1385 = vunpack.c.h.b16 %v382
    %v1386 = vunpack.c.l.b16 %v383
    %v1387 = vunpack.c.h.b16 %v383
    %v1388 = vunpack.c.l.b16 %v384
    %v1389 = vunpack.c.h.b16 %v384
    %v1390 = vunpack.c.l.b16 %v385
    %v1391 = vunpack.c.h.b16 %v385
    %v1392 = vunpack.c.l.b16 %v386
    %v1393 = vunpack.c.l.b16 %v387
    %v1394 = vunpack.c.h.b16 %v387
    %v1395 = vunpack.c.l.b16 %v388
    %v1396 = vunpack.c.h.b16 %v388
    %v1397 = vunpack.c.l.b16 %v389
    %v1398 = vunpack.c.h.b16 %v389
    %v1399 = vunpack.c.l.b16 %v390
    %v1400 = vunpack.c.h.b16 %v390
    %v1401 = vunpack.c.l.b16 %v391
    %v1402 = vunpack.c.h.b16 %v391
    %v1403 = vunpack.c.l.b16 %v392
    %v1404 = vunpack.c.h.b16 %v392
    %v1405 = vunpack.c.l.b16 %v393
    %v1406 = vunpack.c.h.b16 %v393
    %v1407 = vunpack.c.l.b16 %v394
    %v1408 = vunpack.c.h.b16 %v394
    %v1409 = vunpack.c.l.b16 %v395
    %v1410 = vunpack.c.l.b16 %v396
    %v1411 = vunpack.c.h.b16 %v396
    %v1412 = vunpack.c.l.b16 %v397
    %v1413 = vunpack.c.h.b16 %v397
    %v1414 = vunpack.c.l.b16 %v398
    %v1415 = vunpack.c.h.b16 %v398
    %v1416 = vunpack.c.l.b16 %v399
    %v1417 = vunpack.c.h.b16 %v399
    %v1418 = vunpack.c.l.b16 %v400
    %v1419 = vunpack.c.h.b16 %v400
    %v1420 = vunpack.c.l.b16 %v401
    %v1421 = vunpack.c.h.b16 %v401
    %v1422 = vunpack.c.l.b16 %v402
    %v1423 = vunpack.c.h.b16 %v402
    %v1424 = vunpack.c.l.b16 %v403
    %v1425 = vunpack.c.h.b16 %v403
    %v1426 = vunpack.c.l.b16 %v404
    %v1427 = vunpack.c.l.b16 %v405
    %v1428 = vunpack.c.h.b16 %v405
    %v1429 = vunpack.c.l.b16 %v406
    %v1430 = vunpack.c.h.b16 %v406
    %v1431 = vunpack.c.l.b16 %v407
    %v1432 = vunpack.c.h.b16 %v407
    %v1433 = vunpack.c.l.b16 %v408
    %v1434 = vunpack.c.h.b16 %v408
    %v1435 = vunpack.c.l.b16 %v409
    %v1436 = vunpack.c.h.b16 %v409
    %v1437 = vunpack.c.l.b16 %v410
    %v1438 = vunpack.c.h.b16 %v410
    %v1439 = vunpack.c.l.b16 %v411
    %v1440 = vunpack.c.h.b16 %v411
    %v1441 = vunpack.c.l.b16 %v412
    %v1442 = vunpack.c.h.b16 %v412
    %v1443 = vunpack.c.l.b16 %v413
    %v1444 = vunpack.c.l.b16 %v414
    %v1445 = vunpack.c.h.b16 %v414
    %v1446 = vunpack.c.l.b16 %v415
    %v1447 = vunpack.c.h.b16 %v415
    %v1448 = vunpack.c.l.b16 %v416
    %v1449 = vunpack.c.h.b16 %v416
    %v1450 = vunpack.c.l.b16 %v417
    %v1451 = vunpack.c.h.b16 %v417
    %v1452 = vunpack.c.l.b16 %v418
    %v1453 = vunpack.c.h.b16 %v418
    %v1454 = vunpack.c.l.b16 %v419
    %v1455 = vunpack.c.h.b16 %v419
    %v1456 = vunpack.c.l.b16 %v420
    %v1457 = vunpack.c.h.b16 %v420
    %v1458 = vunpack.c.l.b16 %v421
    %v1459 = vunpack.c.h.b16 %v421
    %v1460 = vunpack.c.l.b16 %v422
    %v1461 = vunpack.c.l.b16 %v423
    %v1462 = vunpack.c.h.b16 %v423
    %v1463 = vunpack.c.l.b16 %v424
    %v1464 = vunpack.c.h.b16 %v424
    %v1465 = vunpack.c.l.b16 %v425
    %v1466 = vunpack.c.h.b16 %v425
    %v1467 = vunpack.c.l.b16 %v426
    %v1468 = vunpack.c.h.b16 %v426
    %v1469 = vunpack.c.l.b16 %v427
    %v1470 = vunpack.c.h.b16 %v427
    %v1471 = vunpack.c.l.b16 %v428
    %v1472 = vunpack.c.h.b16 %v428
    %v1473 = vunpack.c.l.b16 %v429
    %v1474 = vunpack.c.h.b16 %v429
    %v1475 = vunpack.c.l.b16 %v430
    %v1476 = vunpack.c.h.b16 %v430
    %v1477 = vunpack.c.l.b16 %v431
    %v1478 = vunpack.c.l.b16 %v432
    %v1479 = vunpack.c.h.b16 %v432
    %v1480 = vunpack.c.l.b16 %v433
    %v1481 = vunpack.c.h.b16 %v433
    %v1482 = vunpack.c.l.b16 %v434
    %v1483 = vunpack.c.h.b16 %v434
    %v1484 = vunpack.c.l.b16 %v435
    %v1485 = vunpack.c.h.b16 %v435
    %v1486 = vunpack.c.l.b16 %v436
    %v1487 = vunpack.c.h.b16 %v436
    %v1488 = vunpack.c.l.b16 %v437
    %v1489 = vunpack.c.h.b16 %v437
    %v1490 = vunpack.c.l.b16 %v438
    %v1491 = vunpack.c.h.b16 %v438
    %v1492 = vunpack.c.l.b16 %v439
    %v1493 = vunpack.c.h.b16 %v439
    %v1494 = vunpack.c.l.b16 %v440
    %v1495 = vunpack.c.l.b16 %v441
    %v1496 = vunpack.c.h.b16 %v441
    %v1497 = vunpack.c.l.b16 %v442
    %v1498 = vunpack.c.h.b16 %v442
    %v1499 = vunpack.c.l.b16 %v443
    %v1500 = vunpack.c.h.b16 %v443
    %v1501 = vunpack.c.l.b16 %v444
    %v1502 = vunpack.c.h.b16 %v444
    %v1503 = vunpack.c.l.b16 %v445
    %v1504 = vunpack.c.h.b16 %v445
    %v1505 = vunpack.c.l.b16 %v446
    %v1506 = vunpack.c.h.b16 %v446
    %v1507 = vunpack.c.l.b16 %v447
    %v1508 = vunpack.c.h.b16 %v447
    %v1509 = vunpack.c.l.b16 %v448
    %v1510 = vunpack.c.h.b16 %v448
    %v1511 = vunpack.c.l.b16 %v449
    %v1512 = vunpack.c.l.b16 %v450
    %v1513 = vunpack.c.h.b16 %v450
    %v1514 = vunpack.c.l.b16 %v451
    %v1515 = vunpack.c.h.b16 %v451
    %v1516 = vunpack.c.l.b16 %v452
    %v1517 = vunpack.c.h.b16 %v452
    %v1518 = vunpack.c.l.b16 %v453
    %v1519 = vunpack.c.h.b16 %v453
    %v1520 = vunpack.c.l.b16 %v454
    %v1521 = vunpack.c.h.b16 %v454
    %v1522 = vunpack.c.l.b16 %v455
    %v1523 = vunpack.c.h.b16 %v455
    %v1524 = vunpack.c.l.b16 %v456
    %v1525 = vunpack.c.h.b16 %v456
    %v1526 = vunpack.c.l.b16 %v457
    %v1527 = vunpack.c.h.b16 %v457
    %v1528 = vunpack.c.l.b16 %v458
    %v1529 = vunpack.c.l.b16 %v459
    %v1530 = vunpack.c.h.b16 %v459
    %v1531 = vunpack.c.l.b16 %v460
    %v1532 = vunpack.c.h.b16 %v460
    %v1533 = vunpack.c.l.b16 %v461
    %v1534 = vunpack.c.h.b16 %v461
    %v1535 = vunpack.c.l.b16 %v462
    %v1536 = vunpack.c.h.b16 %v462
    %v1537 = vunpack.c.l.b16 %v463
    %v1538 = vunpack.c.h.b16 %v463
    %v1539 = vunpack.c.l.b16 %v464
    %v1540 = vunpack.c.h.b16 %v464
    %v1541 = vunpack.c.l.b16 %v465
    %v1542 = vunpack.c.h.b16 %v465
    %v1543 = vunpack.c.l.b16 %v466
    %v1544 = vunpack.c.h.b16 %v466
    %v1545 = vunpack.c.l.b16 %v467
    %v1546 = vunpack.c.l.b16 %v468
    %v1547 = vunpack.c.h.b16 %v468
    %v1548 = vunpack.c.l.b16 %v469
    %v1549 = vunpack.c.h.b16 %v469
    %v1550 = vunpack.c.l.b16 %v470
    %v1551 = vunpack.c.h.b16 %v470
    %v1552 = vunpack.c.l.b16 %v471
    %v1553 = vunpack.c.h.b16 %v471
    %v1554 = vunpack.c.l.b16 %v472
    %v1555 = vunpack.c.h.b16 %v472
    %v1556 = vunpack.c.l.b16 %v473
    %v1557 = vunpack.c.h.b16 %v473
    %v1558 = vunpack.c.l.b16 %v474
    %v1559 = vunpack.c.h.b16 %v474
    %v1560 = vunpack.c.l.b16 %v475
    %v1561 = vunpack.c.h.b16 %v475
    %v1562 = vunpack.c.l.b16 %v476
    %v1563 = vunpack.c.l.b16 %v477
    %v1564 = vunpack.c.h.b16 %v477
    %v1565 = vunpack.c.l.b16 %v478
    %v1566 = vunpack.c.h.b16 %v478
    %v1567 = vunpack.c.l.b16 %v479
    %v1568 = vunpack.c.h.b16 %v479
    %v1569 = vunpack.c.l.b16 %v480
    %v1570 = vunpack.c.h.b16 %v480
    %v1571 = vunpack.c.l.b16 %v481
    %v1572 = vunpack.c.h.b16 %v481
    %v1573 = vunpack.c.l.b16 %v482
    %v1574 = vunpack.c.h.b16 %v482
    %v1575 = vunpack.c.l.b16 %v483
    %v1576 = vunpack.c.h.b16 %v483
    %v1577 = vunpack.c.l.b16 %v484
    %v1578 = vunpack.c.h.b16 %v484
    %v1579 = vunpack.c.l.b16 %v485
    %v1580 = vunpack.c.l.b16 %v486
    %v1581 = vunpack.c.h.b16 %v486
    %v1582 = vunpack.c.l.b16 %v487
    %v1583 = vunpack.c.h.b16 %v487
    %v1584 = vunpack.c.l.b16 %v488
    %v1585 = vunpack.c.h.b16 %v488
    %v1586 = vunpack.c.l.b16 %v489
    %v1587 = vunpack.c.h.b16 %v489
    %v1588 = vunpack.c.l.b16 %v490
    %v1589 = vunpack.c.h.b16 %v490
    %v1590 = vunpack.c.l.b16 %v491
    %v1591 = vunpack.c.h.b16 %v491
    %v1592 = vunpack.c.l.b16 %v492
    %v1593 = vunpack.c.h.b16 %v492
    %v1594 = vunpack.c.l.b16 %v493
    %v1595 = vunpack.c.h.b16 %v493
    %v1596 = vunpack.c.l.b16 %v494
    %v1597 = vunpack.c.l.b16 %v495
    %v1598 = vunpack.c.h.b16 %v495
    %v1599 = vunpack.c.l.b16 %v496
    %v1600 = vunpack.c.h.b16 %v496
    %v1601 = vunpack.c.l.b16 %v497
    %v1602 = vunpack.c.h.b16 %v497
    %v1603 = vunpack.c.l.b16 %v498
    %v1604 = vunpack.c.h.b16 %v498
    %v1605 = vunpack.c.l.b16 %v499
    %v1606 = vunpack.c.h.b16 %v499
    %v1607 = vunpack.c.l.b16 %v500
    %v1608 = vunpack.c.h.b16 %v500
    %v1609 = vunpack.c.l.b16 %v501
    %v1610 = vunpack.c.h.b16 %v501
    %v1611 = vunpack.c.l.b16 %v502
    %v1612 = vunpack.c.h.b16 %v502
    %v1613 = vunpack.c.l.b16 %v503
    %v1614 = vunpack.c.l.b16 %v504
    %v1615 = vunpack.c.h.b16 %v504
    %v1616 = vunpack.c.l.b16 %v505
    %v1617 = vunpack.c.h.b16 %v505
    %v1618 = vunpack.c.l.b16 %v506
    %v1619 = vunpack.c.h.b16 %v506
    %v1620 = vunpack.c.l.b16 %v507
    %v1621 = vunpack.c.h.b16 %v507
    %v1622 = vunpack.c.l.b16 %v508
    %v1623 = vunpack.c.h.b16 %v508
    %v1624 = vunpack.c.l.b16 %v509
    %v1625 = vunpack.c.h.b16 %v509
    %v1626 = vunpack.c.l.b16 %v510
    %v1627 = vunpack.c.h.b16 %v510
    %v1628 = vunpack.c.l.b16 %v511
    %v1629 = vunpack.c.h.b16 %v511
    %v1630 = vunpack.c.l.b16 %v512
    %v1631 = vunpack.c.l.b16 %v513
    %v1632 = vunpack.c.h.b16 %v513
    %v1633 = vunpack.c.l.b16 %v514
    %v1634 = vunpack.c.h.b16 %v514
    %v1635 = vunpack.c.l.b16 %v515
    %v1636 = vunpack.c.h.b16 %v515
    %v1637 = vunpack.c.l.b16 %v516
    %v1638 = vunpack.c.h.b16 %v516
    %v1639 = vunpack.c.l.b16 %v517
    %v1640 = vunpack.c.h.b16 %v517
    %v1641 = vunpack.c.l.b16 %v518
    %v1642 = vunpack.c.h.b16 %v518
    %v1643 = vunpack.c.l.b16 %v519
    %v1644 = vunpack.c.h.b16 %v519
    %v1645 = vunpack.c.l.b16 %v520
    %v1646 = vunpack.c.h.b16 %v520
    %v1647 = vunpack.c.l.b16 %v521
    %v1648 = vunpack.c.l.b16 %v522
    %v1649 = vunpack.c.h.b16 %v522
    %v1650 = vunpack.c.l.b16 %v523
    %v1651 = vunpack.c.h.b16 %v523
    %v1652 = vunpack.c.l.b16 %v524
    %v1653 = vunpack.c.h.b16 %v524
    %v1654 = vunpack.c.l.b16 %v525
    %v1655 = vunpack.c.h.b16 %v525
    %v1656 = vunpack.c.l.b16 %v526
    %v1657 = vunpack.c.h.b16 %v526
    %v1658 = vunpack.c.l.b16 %v527
    %v1659 = vunpack.c.h.b16 %v527
    %v1660 = vunpack.c.l.b16 %v528
    %v1661 = vunpack.c.h.b16 %v528
    %v1662 = vunpack.c.l.b16 %v529
    %v1663 = vunpack.c.h.b16 %v529
    %v1664 = vunpack.c.l.b16 %v530
    %v1665 = vunpack.c.l.b16 %v531
    %v1666 = vunpack.c.h.b16 %v531
    %v1667 = vunpack.c.l.b16 %v532
    %v1668 = vunpack.c.h.b16 %v532
    %v1669 = vunpack.c.l.b16 %v533
    %v1670 = vunpack.c.h.b16 %v533
    %v1671 = vunpack.c.l.b16 %v534
    %v1672 = vunpack.c.h.b16 %v534
    %v1673 = vunpack.c.l.b16 %v535
    %v1674 = vunpack.c.h.b16 %v535
    %v1675 = vunpack.c.l.b16 %v536
    %v1676 = vunpack.c.h.b16 %v536
    %v1677 = vunpack.c.l.b16 %v537
    %v1678 = vunpack.c.h.b16 %v537
    %v1679 = vunpack.c.l.b16 %v538
    %v1680 = vunpack.c.h.b16 %v538
    %v1681 = vunpack.c.l.b16 %v539
    %v1682 = vunpack.c.l.b16 %v540
    %v1683 = vunpack.c.h.b16 %v540
    %v1684 = vunpack.c.l.b16 %v541
    %v1685 = vunpack.c.h.b16 %v541
    %v1686 = vunpack.c.l.b16 %v542
    %v1687 = vunpack.c.h.b16 %v542
    %v1688 = vunpack.c.l.b16 %v543
    %v1689 = vunpack.c.h.b16 %v543
    %v1690 = vunpack.c.l.b16 %v544
    %v1691 = vunpack.c.h.b16 %v544
    %v1692 = vunpack.c.l.b16 %v545
    %v1693 = vunpack.c.h.b16 %v545
    %v1694 = vunpack.c.l.b16 %v546
    %v1695 = vunpack.c.h.b16 %v546
    %v1696 = vunpack.c.l.b16 %v547
    %v1697 = vunpack.c.h.b16 %v547
    %v1698 = vunpack.c.l.b16 %v548
    %v1699 = vunpack.c.l.b16 %v549
    %v1700 = vunpack.c.h.b16 %v549
    %v1701 = vunpack.c.l.b16 %v550
    %v1702 = vunpack.c.h.b16 %v550
    %v1703 = vunpack.c.l.b16 %v551
    %v1704 = vunpack.c.h.b16 %v551
    %v1705 = vunpack.c.l.b16 %v552
    %v1706 = vunpack.c.h.b16 %v552
    %v1707 = vunpack.c.l.b16 %v553
    %v1708 = vunpack.c.h.b16 %v553
    %v1709 = vunpack.c.l.b16 %v554
    %v1710 = vunpack.c.h.b16 %v554
    %v1711 = vunpack.c.l.b16 %v555
    %v1712 = vunpack.c.h.b16 %v555
    %v1713 = vunpack.c.l.b16 %v556
    %v1714 = vunpack.c.h.b16 %v556
    %v1715 = vunpack.c.l.b16 %v557
    %v1716 = vunpack.c.l.b16 %v558
    %v1717 = vunpack.c.h.b16 %v558
    %v1718 = vunpack.c.l.b16 %v559
    %v1719 = vunpack.c.h.b16 %v559
    %v1720 = vunpack.c.l.b16 %v560
    %v1721 = vunpack.c.h.b16 %v560
    %v1722 = vunpack.c.l.b16 %v561
    %v1723 = vunpack.c.h.b16 %v561
    %v1724 = vunpack.c.l.b16 %v562
    %v1725 = vunpack.c.h.b16 %v562
    %v1726 = vunpack.c.l.b16 %v563
    %v1727 = vunpack.c.h.b16 %v563
    %v1728 = vunpack.c.l.b16 %v564
    %v1729 = vunpack.c.h.b16 %v564
    %v1730 = vunpack.c.l.b16 %v565
    %v1731 = vunpack.c.h.b16 %v565
    %v1732 = vunpack.c.l.b16 %v566
    %v1733 = vpack.c.b16 %v1019, %v1002
    %v1734 = vpack.c.b16 %v1020, %v1003
    %v1735 = vpack.c.b16 %v1021, %v1004
    %v1736 = vpack.c.b16 %v1022, %v1005
    %v1737 = vpack.c.b16 %v1023, %v1006
    %v1738 = vpack.c.b16 %v1024, %v1007
    %v1739 = vpack.c.b16 %v1025, %v1008
    %v1740 = vpack.c.b16 %v1026, %v1009
    %v1741 = vpack.c.b16 %v1027, %v1010
    %v1742 = vpack.c.b16 %v1028, %v1011
    %v1743 = vpack.c.b16 %v1029, %v1012
    %v1744 = vpack.c.b16 %v1030, %v1013
    %v1745 = vpack.c.b16 %v1031, %v1014
    %v1746 = vpack.c.b16 %v1032, %v1015
    %v1747 = vpack.c.b16 %v1033, %v1016
    %v1748 = vpack.c.b16 %v1034, %v1017
    %v1749 = vpack.c.b16 %v1035, %v1018
    %v1750 = vpack.c.b16 %v1053, %v1036
    %v1751 = vpack.c.b16 %v1054, %v1037
    %v1752 = vpack.c.b16 %v1055, %v1038
    %v1753 = vpack.c.b16 %v1056, %v1039
    %v1754 = vpack.c.b16 %v1057, %v1040
    %v1755 = vpack.c.b16 %v1058, %v1041
    %v1756 = vpack.c.b16 %v1059, %v1042
    %v1757 = vpack.c.b16 %v1060, %v1043
    %v1758 = vpack.c.b16 %v1061, %v1044
    %v1759 = vpack.c.b16 %v1062, %v1045
    %v1760 = vpack.c.b16 %v1063, %v1046
    %v1761 = vpack.c.b16 %v1064, %v1047
    %v1762 = vpack.c.b16 %v1065, %v1048
    %v1763 = vpack.c.b16 %v1066, %v1049
    %v1764 = vpack.c.b16 %v1067, %v1050
    %v1765 = vpack.c.b16 %v1068, %v1051
    %v1766 = vpack.c.b16 %v1069, %v1052
    %v1767 = vpack.c.b16 %v1087, %v1070
    %v1768 = vpack.c.b16 %v1088, %v1071
    %v1769 = vpack.c.b16 %v1089, %v1072
    %v1770 = vpack.c.b16 %v1090, %v1073
    %v1771 = vpack.c.b16 %v1091, %v1074
    %v1772 = vpack.c.b16 %v1092, %v1075
    %v1773 = vpack.c.b16 %v1093, %v1076
    %v1774 = vpack.c.b16 %v1094, %v1077
    %v1775 = vpack.c.b16 %v1095, %v1078
    %v1776 = vpack.c.b16 %v1096, %v1079
    %v1777 = vpack.c.b16 %v1097, %v1080
    %v1778 = vpack.c.b16 %v1098, %v1081
    %v1779 = vpack.c.b16 %v1099, %v1082
    %v1780 = vpack.c.b16 %v1100, %v1083
    %v1781 = vpack.c.b16 %v1101, %v1084
    %v1782 = vpack.c.b16 %v1102, %v1085
    %v1783 = vpack.c.b16 %v1103, %v1086
    %v1784 = vpack.c.b16 %v1121, %v1104
    %v1785 = vpack.c.b16 %v1122, %v1105
    %v1786 = vpack.c.b16 %v1123, %v1106
    %v1787 = vpack.c.b16 %v1124, %v1107
    %v1788 = vpack.c.b16 %v1125, %v1108
    %v1789 = vpack.c.b16 %v1126, %v1109
    %v1790 = vpack.c.b16 %v1127, %v1110
    %v1791 = vpack.c.b16 %v1128, %v1111
    %v1792 = vpack.c.b16 %v1129, %v1112
    %v1793 = vpack.c.b16 %v1130, %v1113
    %v1794 = vpack.c.b16 %v1131, %v1114
    %v1795 = vpack.c.b16 %v1132, %v1115
    %v1796 = vpack.c.b16 %v1133, %v1116
    %v1797 = vpack.c.b16 %v1134, %v1117
    %v1798 = vpack.c.b16 %v1135, %v1118
    %v1799 = vpack.c.b16 %v1136, %v1119
    %v1800 = vpack.c.b16 %v1137, %v1120
    %v1801 = vpack.c.b16 %v1155, %v1138
    %v1802 = vpack.c.b16 %v1156, %v1139
    %v1803 = vpack.c.b16 %v1157, %v1140
    %v1804 = vpack.c.b16 %v1158, %v1141
    %v1805 = vpack.c.b16 %v1159, %v1142
    %v1806 = vpack.c.b16 %v1160, %v1143
    %v1807 = vpack.c.b16 %v1161, %v1144
    %v1808 = vpack.c.b16 %v1162, %v1145
    %v1809 = vpack.c.b16 %v1163, %v1146
    %v1810 = vpack.c.b16 %v1164, %v1147
    %v1811 = vpack.c.b16 %v1165, %v1148
    %v1812 = vpack.c.b16 %v1166, %v1149
    %v1813 = vpack.c.b16 %v1167, %v1150
    %v1814 = vpack.c.b16 %v1168, %v1151
    %v1815 = vpack.c.b16 %v1169, %v1152
    %v1816 = vpack.c.b16 %v1170, %v1153
    %v1817 = vpack.c.b16 %v1171, %v1154
    %v1818 = vpack.c.b16 %v1189, %v1172
    %v1819 = vpack.c.b16 %v1190, %v1173
    %v1820 = vpack.c.b16 %v1191, %v1174
    %v1821 = vpack.c.b16 %v1192, %v1175
    %v1822 = vpack.c.b16 %v1193, %v1176
    %v1823 = vpack.c.b16 %v1194, %v1177
    %v1824 = vpack.c.b16 %v1195, %v1178
    %v1825 = vpack.c.b16 %v1196, %v1179
    %v1826 = vpack.c.b16 %v1197, %v1180
    %v1827 = vpack.c.b16 %v1198, %v1181
    %v1828 = vpack.c.b16 %v1199, %v1182
    %v1829 = vpack.c.b16 %v1200, %v1183
    %v1830 = vpack.c.b16 %v1201, %v1184
    %v1831 = vpack.c.b16 %v1202, %v1185
    %v1832 = vpack.c.b16 %v1203, %v1186
    %v1833 = vpack.c.b16 %v1204, %v1187
    %v1834 = vpack.c.b16 %v1205, %v1188
    %v1835 = vpack.c.b16 %v1223, %v1206
    %v1836 = vpack.c.b16 %v1224, %v1207
    %v1837 = vpack.c.b16 %v1225, %v1208
    %v1838 = vpack.c.b16 %v1226, %v1209
    %v1839 = vpack.c.b16 %v1227, %v1210
    %v1840 = vpack.c.b16 %v1228, %v1211
    %v1841 = vpack.c.b16 %v1229, %v1212
    %v1842 = vpack.c.b16 %v1230, %v1213
    %v1843 = vpack.c.b16 %v1231, %v1214
    %v1844 = vpack.c.b16 %v1232, %v1215
    %v1845 = vpack.c.b16 %v1233, %v1216
    %v1846 = vpack.c.b16 %v1234, %v1217
    %v1847 = vpack.c.b16 %v1235, %v1218
    %v1848 = vpack.c.b16 %v1236, %v1219
    %v1849 = vpack.c.b16 %v1237, %v1220
    %v1850 = vpack.c.b16 %v1238, %v1221
    %v1851 = vpack.c.b16 %v1239, %v1222
    %v1852 = vpack.c.b16 %v1257, %v1240
    %v1853 = vpack.c.b16 %v1258, %v1241
    %v1854 = vpack.c.b16 %v1259, %v1242
    %v1855 = vpack.c.b16 %v1260, %v1243
    %v1856 = vpack.c.b16 %v1261, %v1244
    %v1857 = vpack.c.b16 %v1262, %v1245
    %v1858 = vpack.c.b16 %v1263, %v1246
    %v1859 = vpack.c.b16 %v1264, %v1247
    %v1860 = vpack.c.b16 %v1265, %v1248
    %v1861 = vpack.c.b16 %v1266, %v1249
    %v1862 = vpack.c.b16 %v1267, %v1250
    %v1863 = vpack.c.b16 %v1268, %v1251
    %v1864 = vpack.c.b16 %v1269, %v1252
    %v1865 = vpack.c.b16 %v1270, %v1253
    %v1866 = vpack.c.b16 %v1271, %v1254
    %v1867 = vpack.c.b16 %v1272, %v1255
    %v1868 = vpack.c.b16 %v1273, %v1256
    %v1869 = vpack.c.b16 %v1291, %v1274
    %v1870 = vpack.c.b16 %v1292, %v1275
    %v1871 = vpack.c.b16 %v1293, %v1276
    %v1872 = vpack.c.b16 %v1294, %v1277
    %v1873 = vpack.c.b16 %v1295, %v1278
    %v1874 = vpack.c.b16 %v1296, %v1279
    %v1875 = vpack.c.b16 %v1297, %v1280
    %v1876 = vpack.c.b16 %v1298, %v1281
    %v1877 = vpack.c.b16 %v1299, %v1282
    %v1878 = vpack.c.b16 %v1300, %v1283
    %v1879 = vpack.c.b16 %v1301, %v1284
    %v1880 = vpack.c.b16 %v1302, %v1285
    %v1881 = vpack.c.b16 %v1303, %v1286
    %v1882 = vpack.c.b16 %v1304, %v1287
    %v1883 = vpack.c.b16 %v1305, %v1288
    %v1884 = vpack.c.b16 %v1306, %v1289
    %v1885 = vpack.c.b16 %v1307, %v1290
    %v1886 = vpack.c.b16 %v1325, %v1308
    %v1887 = vpack.c.b16 %v1326, %v1309
    %v1888 = vpack.c.b16 %v1327, %v1310
    %v1889 = vpack.c.b16 %v1328, %v1311
    %v1890 = vpack.c.b16 %v1329, %v1312
    %v1891 = vpack.c.b16 %v1330, %v1313
    %v1892 = vpack.c.b16 %v1331, %v1314
    %v1893 = vpack.c.b16 %v1332, %v1315
    %v1894 = vpack.c.b16 %v1333, %v1316
    %v1895 = vpack.c.b16 %v1334, %v1317
    %v1896 = vpack.c.b16 %v1335, %v1318
    %v1897 = vpack.c.b16 %v1336, %v1319
    %v1898 = vpack.c.b16 %v1337, %v1320
    %v1899 = vpack.c.b16 %v1338, %v1321
    %v1900 = vpack.c.b16 %v1339, %v1322
    %v1901 = vpack.c.b16 %v1340, %v1323
    %v1902 = vpack.c.b16 %v1341, %v1324
    %v1903 = vpack.c.b16 %v1359, %v1342
    %v1904 = vpack.c.b16 %v1360, %v1343
    %v1905 = vpack.c.b16 %v1361, %v1344
    %v1906 = vpack.c.b16 %v1362, %v1345
    %v1907 = vpack.c.b16 %v1363, %v1346
    %v1908 = vpack.c.b16 %v1364, %v1347
    %v1909 = vpack.c.b16 %v1365, %v1348
    %v1910 = vpack.c.b16 %v1366, %v1349
    %v1911 = vpack.c.b16 %v1367, %v1350
    %v1912 = vpack.c.b16 %v1368, %v1351
    %v1913 = vpack.c.b16 %v1369, %v1352
    %v1914 = vpack.c.b16 %v1370, %v1353
    %v1915 = vpack.c.b16 %v1371, %v1354
    %v1916 = vpack.c.b16 %v1372, %v1355
    %v1917 = vpack.c.b16 %v1373, %v1356
    %v1918 = vpack.c.b16 %v1374, %v1357
    %v1919 = vpack.c.b16 %v1375, %v1358
    %v1920 = vpack.c.b16 %v1393, %v1376
    %v1921 = vpack.c.b16 %v1394, %v1377
    %v1922 = vpack.c.b16 %v1395, %v1378
    %v1923 = vpack.c.b16 %v1396, %v1379
    %v1924 = vpack.c.b16 %v1397, %v1380
    %v1925 = vpack.c.b16 %v1398, %v1381
    %v1926 = vpack.c.b16 %v1399, %v1382
    %v1927 = vpack.c.b16 %v1400, %v1383
    %v1928 = vpack.c.b16 %v1401, %v1384
    %v1929 = vpack.c.b16 %v1402, %v1385
    %v1930 = vpack.c.b16 %v1403, %v1386
    %v1931 = vpack.c.b16 %v1404, %v1387
    %v1932 = vpack.c.b16 %v1405, %v1388
    %v1933 = vpack.c.b16 %v1406, %v1389
    %v1934 = vpack.c.b16 %v1407, %v1390
    %v1935 = vpack.c.b16 %v1408, %v1391
    %v1936 = vpack.c.b16 %v1409, %v1392
    %v1937 = vpack.c.b16 %v1427, %v1410
    %v1938 = vpack.c.b16 %v1428, %v1411
    %v1939 = vpack.c.b16 %v1429, %v1412
    %v1940 = vpack.c.b16 %v1430, %v1413
    %v1941 = vpack.c.b16 %v1431, %v1414
    %v1942 = vpack.c.b16 %v1432, %v1415
    %v1943 = vpack.c.b16 %v1433, %v1416
    %v1944 = vpack.c.b16 %v1434, %v1417
    %v1945 = vpack.c.b16 %v1435, %v1418
    %v1946 = vpack.c.b16 %v1436, %v1419
    %v1947 = vpack.c.b16 %v1437, %v1420
    %v1948 = vpack.c.b16 %v1438, %v1421
    %v1949 = vpack.c.b16 %v1439, %v1422
    %v1950 = vpack.c.b16 %v1440, %v1423
    %v1951 = vpack.c.b16 %v1441, %v1424
    %v1952 = vpack.c.b16 %v1442, %v1425
    %v1953 = vpack.c.b16 %v1443, %v1426
    %v1954 = vpack.c.b16 %v1461, %v1444
    %v1955 = vpack.c.b16 %v1462, %v1445
    %v1956 = vpack.c.b16 %v1463, %v1446
    %v1957 = vpack.c.b16 %v1464, %v1447
    %v1958 = vpack.c.b16 %v1465, %v1448
    %v1959 = vpack.c.b16 %v1466, %v1449
    %v1960 = vpack.c.b16 %v1467, %v1450
    %v1961 = vpack.c.b16 %v1468, %v1451
    %v1962 = vpack.c.b16 %v1469, %v1452
    %v1963 = vpack.c.b16 %v1470, %v1453
    %v1964 = vpack.c.b16 %v1471, %v1454
    %v1965 = vpack.c.b16 %v1472, %v1455
    %v1966 = vpack.c.b16 %v1473, %v1456
    %v1967 = vpack.c.b16 %v1474, %v1457
    %v1968 = vpack.c.b16 %v1475, %v1458
    %v1969 = vpack.c.b16 %v1476, %v1459
    %v1970 = vpack.c.b16 %v1477, %v1460
    %v1971 = vpack.c.b16 %v1495, %v1478
    %v1972 = vpack.c.b16 %v1496, %v1479
    %v1973 = vpack.c.b16 %v1497, %v1480
    %v1974 = vpack.c.b16 %v1498, %v1481
    %v1975 = vpack.c.b16 %v1499, %v1482
    %v1976 = vpack.c.b16 %v1500, %v1483
    %v1977 = vpack.c.b16 %v1501, %v1484
    %v1978 = vpack.c.b16 %v1502, %v1485
    %v1979 = vpack.c.b16 %v1503, %v1486
    %v1980 = vpack.c.b16 %v1504, %v1487
    %v1981 = vpack.c.b16 %v1505, %v1488
    %v1982 = vpack.c.b16 %v1506, %v1489
    %v1983 = vpack.c.b16 %v1507, %v1490
    %v1984 = vpack.c.b16 %v1508, %v1491
    %v1985 = vpack.c.b16 %v1509, %v1492
    %v1986 = vpack.c.b16 %v1510, %v1493
    %v1987 = vpack.c.b16 %v1511, %v1494
    %v1988 = vpack.c.b16 %v1529, %v1512
    %v1989 = vpack.c.b16 %v1530, %v1513
    %v1990 = vpack.c.b16 %v1531, %v1514
    %v1991 = vpack.c.b16 %v1532, %v1515
    %v1992 = vpack.c.b16 %v1533, %v1516
    %v1993 = vpack.c.b16 %v1534, %v1517
    %v1994 = vpack.c.b16 %v1535, %v1518
    %v1995 = vpack.c.b16 %v1536, %v1519
    %v1996 = vpack.c.b16 %v1537, %v1520
    %v1997 = vpack.c.b16 %v1538, %v1521
    %v1998 = vpack.c.b16 %v1539, %v1522
    %v1999 = vpack.c.b16 %v1540, %v1523
    %v2000 = vpack.c.b16 %v1541, %v1524
    %v2001 = vpack.c.b16 %v1542, %v1525
    %v2002 = vpack.c.b16 %v1543, %v1526
    %v2003 = vpack.c.b16 %v1544, %v1527
    %v2004 = vpack.c.b16 %v1545, %v1528
    %v2005 = vpack.c.b16 %v1563, %v1546
    %v2006 = vpack.c.b16 %v1564, %v1547
    %v2007 = vpack.c.b16 %v1565, %v1548
    %v2008 = vpack.c.b16 %v1566, %v1549
    %v2009 = vpack.c.b16 %v1567, %v1550
    %v2010 = vpack.c.b16 %v1568, %v1551
    %v2011 = vpack.c.b16 %v1569, %v1552
    %v2012 = vpack.c.b16 %v1570, %v1553
    %v2013 = vpack.c.b16 %v1571, %v1554
    %v2014 = vpack.c.b16 %v1572, %v1555
    %v2015 = vpack.c.b16 %v1573, %v1556
    %v2016 = vpack.c.b16 %v1574, %v1557
    %v2017 = vpack.c.b16 %v1575, %v1558
    %v2018 = vpack.c.b16 %v1576, %v1559
    %v2019 = vpack.c.b16 %v1577, %v1560
    %v2020 = vpack.c.b16 %v1578, %v1561
    %v2021 = vpack.c.b16 %v1579, %v1562
    %v2022 = vpack.c.b16 %v1597, %v1580
    %v2023 = vpack.c.b16 %v1598, %v1581
    %v2024 = vpack.c.b16 %v1599, %v1582
    %v2025 = vpack.c.b16 %v1600, %v1583
    %v2026 = vpack.c.b16 %v1601, %v1584
    %v2027 = vpack.c.b16 %v1602, %v1585
    %v2028 = vpack.c.b16 %v1603, %v1586
    %v2029 = vpack.c.b16 %v1604, %v1587
    %v2030 = vpack.c.b16 %v1605, %v1588
    %v2031 = vpack.c.b16 %v1606, %v1589
    %v2032 = vpack.c.b16 %v1607, %v1590
    %v2033 = vpack.c.b16 %v1608, %v1591
    %v2034 = vpack.c.b16 %v1609, %v1592
    %v2035 = vpack.c.b16 %v1610, %v1593
    %v2036 = vpack.c.b16 %v1611, %v1594
    %v2037 = vpack.c.b16 %v1612, %v1595
    %v2038 = vpack.c.b16 %v1613, %v1596
    %v2039 = vpack.c.b16 %v1631, %v1614
    %v2040 = vpack.c.b16 %v1632, %v1615
    %v2041 = vpack.c.b16 %v1633, %v1616
    %v2042 = vpack.c.b16 %v1634, %v1617
    %v2043 = vpack.c.b16 %v1635, %v1618
    %v2044 = vpack.c.b16 %v1636, %v1619
    %v2045 = vpack.c.b16 %v1637, %v1620
    %v2046 = vpack.c.b16 %v1638, %v1621
    %v2047 = vpack.c.b16 %v1639, %v1622
    %v2048 = vpack.c.b16 %v1640, %v1623
    %v2049 = vpack.c.b16 %v1641, %v1624
    %v2050 = vpack.c.b16 %v1642, %v1625
    %v2051 = vpack.c.b16 %v1643, %v1626
    %v2052 = vpack.c.b16 %v1644, %v1627
    %v2053 = vpack.c.b16 %v1645, %v1628
    %v2054 = vpack.c.b16 %v1646, %v1629
    %v2055 = vpack.c.b16 %v1647, %v1630
    %v2056 = vpack.c.b16 %v1665, %v1648
    %v2057 = vpack.c.b16 %v1666, %v1649
    %v2058 = vpack.c.b16 %v1667, %v1650
    %v2059 = vpack.c.b16 %v1668, %v1651
    %v2060 = vpack.c.b16 %v1669, %v1652
    %v2061 = vpack.c.b16 %v1670, %v1653
    %v2062 = vpack.c.b16 %v1671, %v1654
    %v2063 = vpack.c.b16 %v1672, %v1655
    %v2064 = vpack.c.b16 %v1673, %v1656
    %v2065 = vpack.c.b16 %v1674, %v1657
    %v2066 = vpack.c.b16 %v1675, %v1658
    %v2067 = vpack.c.b16 %v1676, %v1659
    %v2068 = vpack.c.b16 %v1677, %v1660
    %v2069 = vpack.c.b16 %v1678, %v1661
    %v2070 = vpack.c.b16 %v1679, %v1662
    %v2071 = vpack.c.b16 %v1680, %v1663
    %v2072 = vpack.c.b16 %v1681, %v1664
    %v2073 = vpack.c.b16 %v1699, %v1682
    %v2074 = vpack.c.b16 %v1700, %v1683
    %v2075 = vpack.c.b16 %v1701, %v1684
    %v2076 = vpack.c.b16 %v1702, %v1685
    %v2077 = vpack.c.b16 %v1703, %v1686
    %v2078 = vpack.c.b16 %v1704, %v1687
    %v2079 = vpack.c.b16 %v1705, %v1688
    %v2080 = vpack.c.b16 %v1706, %v1689
    %v2081 = vpack.c.b16 %v1707, %v1690
    %v2082 = vpack.c.b16 %v1708, %v1691
    %v2083 = vpack.c.b16 %v1709, %v1692
    %v2084 = vpack.c.b16 %v1710, %v1693
    %v2085 = vpack.c.b16 %v1711, %v1694
    %v2086 = vpack.c.b16 %v1712, %v1695
    %v2087 = vpack.c.b16 %v1713, %v1696
    %v2088 = vpack.c.b16 %v1714, %v1697
    %v2089 = vpack.c.b16 %v1715, %v1698
    %v2090 = vpack.c.b16 %v1716, %v1716
    %v2091 = vpack.c.b16 %v1717, %v1717
    %v2092 = vpack.c.b16 %v1718, %v1718
    %v2093 = vpack.c.b16 %v1719, %v1719
    %v2094 = vpack.c.b16 %v1720, %v1720
    %v2095 = vpack.c.b16 %v1721, %v1721
    %v2096 = vpack.c.b16 %v1722, %v1722
    %v2097 = vpack.c.b16 %v1723, %v1723
    %v2098 = vpack.c.b16 %v1724, %v1724
    %v2099 = vpack.c.b16 %v1725, %v1725
    %v2100 = vpack.c.b16 %v1726, %v1726
    %v2101 = vpack.c.b16 %v1727, %v1727
    %v2102 = vpack.c.b16 %v1728, %v1728
    %v2103 = vpack.c.b16 %v1729, %v1729
    %v2104 = vpack.c.b16 %v1730, %v1730
    %v2105 = vpack.c.b16 %v1731, %v1731
    %v2106 = vpack.c.b16 %v1732, %v1732
    %vm2464 = vcmask 719872
    %v2466 = vsel %vm2464, %v607, 0
    %v2469 = vsel %vm2464, %v608, 0
    %v2472 = vsel %vm2464, %v609, 0
    %v2475 = vsel %vm2464, %v610, 0
    %vm2477 = vcmask 1043456
    %v2479 = vsel %vm2477, %v2090, 0
    %v2482 = vsel %vm2477, %v2091, 0
    %v2485 = vsel %vm2477, %v2092, 0
    %v2488 = vsel %vm2477, %v2093, 0
    %v2491 = vsel %vm2477, %v2094, 0
    %v2494 = vsel %vm2477, %v2095, 0
    %v2497 = vsel %vm2477, %v2096, 0
    %v2500 = vsel %vm2477, %v2097, 0
    %v2503 = vsel %vm2477, %v2098, 0
    %v2506 = vsel %vm2477, %v2099, 0
    %v2509 = vsel %vm2477, %v2100, 0
    %v2512 = vsel %vm2477, %v2101, 0
    %v2515 = vsel %vm2477, %v2102, 0
    %v2518 = vsel %vm2477, %v2103, 0
    %v2521 = vsel %vm2477, %v2104, 0
    %v2524 = vsel %vm2477, %v2105, 0
    %v2527 = vsel %vm2477, %v2106, 0
    %2529 = vmatprep.subr.bf16.mxu0 %v1734
    %2530 = vmatpush1.bf16.msra.mxu0 %v1733
    %2531 = vmatprep.subr.bf16.mxu0 %v1751
    %2532 = vmatpush1.bf16.msra.mxu0 %v1750
    %2533 = vmatprep.subr.bf16.mxu0 %v1768
    %2534 = vmatpush1.bf16.msra.mxu0 %v1767
    %2535 = vmatprep.subr.bf16.mxu0 %v1785
    %2536 = vmatpush1.bf16.msra.mxu0 %v1784
    %2537 = vmatprep.subr.bf16.mxu0 %v1802
    %2538 = vmatpush1.bf16.msra.mxu0 %v1801
    %2539 = vmatprep.subr.bf16.mxu0 %v1819
    %2540 = vmatpush1.bf16.msra.mxu0 %v1818
    %2541 = vmatprep.subr.bf16.mxu0 %v1836
    %2542 = vmatpush1.bf16.msra.mxu0 %v1835
    %2543 = vmatprep.subr.bf16.mxu0 %v1853
    %2544 = vmatpush1.bf16.msra.mxu0 %v1852
    %2545 = vmatprep.subr.bf16.mxu0 %v1870
    %2546 = vmatpush1.bf16.msra.mxu0 %v1869
    %2547 = vmatprep.subr.bf16.mxu0 %v1887
    %2548 = vmatpush1.bf16.msra.mxu0 %v1886
    %2549 = vmatprep.subr.bf16.mxu0 %v1904
    %2550 = vmatpush1.bf16.msra.mxu0 %v1903
    %2551 = vmatprep.subr.bf16.mxu0 %v1921
    %2552 = vmatpush1.bf16.msra.mxu0 %v1920
    %2553 = vmatprep.subr.bf16.mxu0 %v1938
    %2554 = vmatpush1.bf16.msra.mxu0 %v1937
    %2555 = vmatprep.subr.bf16.mxu0 %v1955
    %2556 = vmatpush1.bf16.msra.mxu0 %v1954
    %2557 = vmatprep.subr.bf16.mxu0 %v1972
    %2558 = vmatpush1.bf16.msra.mxu0 %v1971
    %2559 = vmatprep.subr.bf16.mxu0 %v1989
    %2560 = vmatpush1.bf16.msra.mxu0 %v1988
    %2561 = vmatprep.mubr.bf16.mxu0 %v591
    %2562 = vmatmul.mubr.bf16.gmra.mrb[0].mxu0 %v575
    %v2563 = vpop.f32.mrb[0].mxu0
    %v2564 = vadd.f32 0.0, %v2563
    %v2565 = vpop.f32.mrb[0].mxu0
    %v2566 = vadd.f32 0.0, %v2565
    %v2567 = vpop.f32.mrb[0].mxu0
    %v2568 = vadd.f32 0.0, %v2567
    %v2569 = vpop.f32.mrb[0].mxu0
    %v2570 = vadd.f32 0.0, %v2569
    %2571 = vmatprep.mubr.bf16.mxu0 %v592
    %2572 = vmatmul.mubr.bf16.gmra.mrb[0].mxu0 %v576
    %v2573 = vpop.f32.mrb[0].mxu0
    %v2574 = vadd.f32 0.0, %v2573
    %v2575 = vpop.f32.mrb[0].mxu0
    %v2576 = vadd.f32 0.0, %v2575
    %v2577 = vpop.f32.mrb[0].mxu0
    %v2578 = vadd.f32 0.0, %v2577
    %v2579 = vpop.f32.mrb[0].mxu0
    %v2580 = vadd.f32 0.0, %v2579
    %2581 = vmatprep.mubr.bf16.mxu0 %v593
    %2582 = vmatmul.mubr.bf16.gmra.mrb[0].mxu0 %v577
    %v2583 = vpop.f32.mrb[0].mxu0
    %v2584 = vadd.f32 0.0, %v2583
    %v2585 = vpop.f32.mrb[0].mxu0
    %v2586 = vadd.f32 0.0, %v2585
    %v2587 = vpop.f32.mrb[0].mxu0
    %v2588 = vadd.f32 0.0, %v2587
    %v2589 = vpop.f32.mrb[0].mxu0
    %v2590 = vadd.f32 0.0, %v2589
    %2591 = vmatprep.mubr.bf16.mxu0 %v594
    %2592 = vmatmul.mubr.bf16.gmra.mrb[0].mxu0 %v578
    %v2593 = vpop.f32.mrb[0].mxu0
    %v2594 = vadd.f32 0.0, %v2593
    %v2595 = vpop.f32.mrb[0].mxu0
    %v2596 = vadd.f32 0.0, %v2595
    %v2597 = vpop.f32.mrb[0].mxu0
    %v2598 = vpop.f32.mrb[0].mxu0
    %2599 = vdwg.mxu0
    %2600 = vmatprep.subr.bf16.mxu0 %v2006
    %2601 = vmatpush1.bf16.msra.mxu0 %v2005
    %2602 = vmatprep.subr.bf16.mxu0 %v2023
    %2603 = vmatpush1.bf16.msra.mxu0 %v2022
    %2604 = vmatprep.subr.bf16.mxu0 %v2040
    %2605 = vmatpush1.bf16.msra.mxu0 %v2039
    %2606 = vmatprep.subr.bf16.mxu0 %v2057
    %2607 = vmatpush1.bf16.msra.mxu0 %v2056
    %2608 = vmatprep.subr.bf16.mxu0 %v2074
    %2609 = vmatpush1.bf16.msra.mxu0 %v2073
    %2610 = vmatprep.subr.bf16.mxu0 %v2482
    %2611 = vmatpush1.bf16.msra.mxu0 %v2479
    %2612 = vmatprep.subr.bf16.mxu0 0
    %2613 = vmatpush1.bf16.msra.mxu0 0
    %2614 = vmatprep.subr.bf16.mxu0 0
    %2615 = vmatpush1.bf16.msra.mxu0 0
    %2616 = vmatprep.subr.bf16.mxu0 0
    %2617 = vmatpush1.bf16.msra.mxu0 0
    %2618 = vmatprep.subr.bf16.mxu0 0
    %2619 = vmatpush1.bf16.msra.mxu0 0
    %2620 = vmatprep.subr.bf16.mxu0 0
    %2621 = vmatpush1.bf16.msra.mxu0 0
    %2622 = vmatprep.subr.bf16.mxu0 0
    %2623 = vmatpush1.bf16.msra.mxu0 0
    %2624 = vmatprep.subr.bf16.mxu0 0
    %2625 = vmatpush1.bf16.msra.mxu0 0
    %2626 = vmatprep.subr.bf16.mxu0 0
    %2627 = vmatpush1.bf16.msra.mxu0 0
    %2628 = vmatprep.subr.bf16.mxu0 0
    %2629 = vmatpush1.bf16.msra.mxu0 0
    %2630 = vmatprep.subr.bf16.mxu0 0
    %2631 = vmatpush1.bf16.msra.mxu0 0
    %2632 = vmatprep.mubr.bf16.mxu0 0
    %2633 = vmatmul.mubr.bf16.gmra.mrb[0].mxu0 %v2466
    %v2634 = vpop.f32.mrb[0].mxu0
    %v2635 = vadd.f32 %v2564, %v2634
    %v2636 = vpop.f32.mrb[0].mxu0
    %v2637 = vadd.f32 %v2566, %v2636
    %v2638 = vpop.f32.mrb[0].mxu0
    %v2639 = vadd.f32 %v2568, %v2638
    %v2640 = vpop.f32.mrb[0].mxu0
    %v2641 = vadd.f32 %v2570, %v2640
    %2642 = vmatprep.mubr.bf16.mxu0 0
    %2643 = vmatmul.mubr.bf16.gmra.mrb[0].mxu0 %v2469
    %v2644 = vpop.f32.mrb[0].mxu0
    %v2645 = vadd.f32 %v2574, %v2644
    %v2646 = vpop.f32.mrb[0].mxu0
    %v2647 = vadd.f32 %v2576, %v2646
    %v2648 = vpop.f32.mrb[0].mxu0
    %v2649 = vadd.f32 %v2578, %v2648
    %v2650 = vpop.f32.mrb[0].mxu0
    %v2651 = vadd.f32 %v2580, %v2650
    %2652 = vmatprep.mubr.bf16.mxu0 0
    %2653 = vmatmul.mubr.bf16.gmra.mrb[0].mxu0 %v2472
    %v2654 = vpop.f32.mrb[0].mxu0
    %v2655 = vadd.f32 %v2584, %v2654
    %v2656 = vpop.f32.mrb[0].mxu0
    %v2657 = vadd.f32 %v2586, %v2656
    %v2658 = vpop.f32.mrb[0].mxu0
    %v2659 = vadd.f32 %v2588, %v2658
    %v2660 = vpop.f32.mrb[0].mxu0
    %v2661 = vadd.f32 %v2590, %v2660
    %2662 = vmatprep.mubr.bf16.mxu0 0
    %2663 = vmatmul.mubr.bf16.gmra.mrb[0].mxu0 %v2475
    %v2664 = vpop.f32.mrb[0].mxu0
    %v2665 = vadd.f32 %v2594, %v2664
    %v2666 = vpop.f32.mrb[0].mxu0
    %v2667 = vadd.f32 %v2596, %v2666
    %v2668 = vpop.f32.mrb[0].mxu0
    %v2669 = vpop.f32.mrb[0].mxu0
    %2670 = vdwg.mxu0
    %2671 = vmatprep.subr.bf16.mxu0 %v1736
    %2672 = vmatpush1.bf16.msra.mxu0 %v1735
    %2673 = vmatprep.subr.bf16.mxu0 %v1753
    %2674 = vmatpush1.bf16.msra.mxu0 %v1752
    %2675 = vmatprep.subr.bf16.mxu0 %v1770
    %2676 = vmatpush1.bf16.msra.mxu0 %v1769
    %2677 = vmatprep.subr.bf16.mxu0 %v1787
    %2678 = vmatpush1.bf16.msra.mxu0 %v1786
    %2679 = vmatprep.subr.bf16.mxu0 %v1804
    %2680 = vmatpush1.bf16.msra.mxu0 %v1803
    %2681 = vmatprep.subr.bf16.mxu0 %v1821
    %2682 = vmatpush1.bf16.msra.mxu0 %v1820
    %2683 = vmatprep.subr.bf16.mxu0 %v1838
    %2684 = vmatpush1.bf16.msra.mxu0 %v1837
    %2685 = vmatprep.subr.bf16.mxu0 %v1855
    %2686 = vmatpush1.bf16.msra.mxu0 %v1854
    %2687 = vmatprep.subr.bf16.mxu0 %v1872
    %2688 = vmatpush1.bf16.msra.mxu0 %v1871
    %2689 = vmatprep.subr.bf16.mxu0 %v1889
    %2690 = vmatpush1.bf16.msra.mxu0 %v1888
    %2691 = vmatprep.subr.bf16.mxu0 %v1906
    %2692 = vmatpush1.bf16.msra.mxu0 %v1905
    %2693 = vmatprep.subr.bf16.mxu0 %v1923
    %2694 = vmatpush1.bf16.msra.mxu0 %v1922
    %2695 = vmatprep.subr.bf16.mxu0 %v1940
    %2696 = vmatpush1.bf16.msra.mxu0 %v1939
    %2697 = vmatprep.subr.bf16.mxu0 %v1957
    %2698 = vmatpush1.bf16.msra.mxu0 %v1956
    %2699 = vmatprep.subr.bf16.mxu0 %v1974
    %2700 = vmatpush1.bf16.msra.mxu0 %v1973
    %2701 = vmatprep.subr.bf16.mxu0 %v1991
    %2702 = vmatpush1.bf16.msra.mxu0 %v1990
    %2703 = vmatprep.mubr.bf16.mxu0 %v591
    %2704 = vmatmul.mubr.bf16.gmra.mrb[0].mxu0 %v575
    %v2705 = vpop.f32.mrb[0].mxu0
    %v2706 = vadd.f32 0.0, %v2705
    %v2707 = vpop.f32.mrb[0].mxu0
    %v2708 = vadd.f32 0.0, %v2707
    %v2709 = vpop.f32.mrb[0].mxu0
    %v2710 = vadd.f32 0.0, %v2709
    %v2711 = vpop.f32.mrb[0].mxu0
    %v2712 = vadd.f32 0.0, %v2711
    %2713 = vmatprep.mubr.bf16.mxu0 %v592
    %2714 = vmatmul.mubr.bf16.gmra.mrb[0].mxu0 %v576
    %v2715 = vpop.f32.mrb[0].mxu0
    %v2716 = vadd.f32 0.0, %v2715
    %v2717 = vpop.f32.mrb[0].mxu0
    %v2718 = vadd.f32 0.0, %v2717
    %v2719 = vpop.f32.mrb[0].mxu0
    %v2720 = vadd.f32 0.0, %v2719
    %v2721 = vpop.f32.mrb[0].mxu0
    %v2722 = vadd.f32 0.0, %v2721
    %2723 = vmatprep.mubr.bf16.mxu0 %v593
    %2724 = vmatmul.mubr.bf16.gmra.mrb[0].mxu0 %v577
    %v2725 = vpop.f32.mrb[0].mxu0
    %v2726 = vadd.f32 0.0, %v2725
    %v2727 = vpop.f32.mrb[0].mxu0
    %v2728 = vadd.f32 0.0, %v2727
    %v2729 = vpop.f32.mrb[0].mxu0
    %v2730 = vadd.f32 0.0, %v2729
    %v2731 = vpop.f32.mrb[0].mxu0
    %v2732 = vadd.f32 0.0, %v2731
    %2733 = vmatprep.mubr.bf16.mxu0 %v594
    %2734 = vmatmul.mubr.bf16.gmra.mrb[0].mxu0 %v578
    %v2735 = vpop.f32.mrb[0].mxu0
    %v2736 = vadd.f32 0.0, %v2735
    %v2737 = vpop.f32.mrb[0].mxu0
    %v2738 = vadd.f32 0.0, %v2737
    %v2739 = vpop.f32.mrb[0].mxu0
    %v2740 = vpop.f32.mrb[0].mxu0
    %2741 = vdwg.mxu0
    %2742 = vmatprep.subr.bf16.mxu0 %v2008
    %2743 = vmatpush1.bf16.msra.mxu0 %v2007
    %2744 = vmatprep.subr.bf16.mxu0 %v2025
    %2745 = vmatpush1.bf16.msra.mxu0 %v2024
    %2746 = vmatprep.subr.bf16.mxu0 %v2042
    %2747 = vmatpush1.bf16.msra.mxu0 %v2041
    %2748 = vmatprep.subr.bf16.mxu0 %v2059
    %2749 = vmatpush1.bf16.msra.mxu0 %v2058
    %2750 = vmatprep.subr.bf16.mxu0 %v2076
    %2751 = vmatpush1.bf16.msra.mxu0 %v2075
    %2752 = vmatprep.subr.bf16.mxu0 %v2488
    %2753 = vmatpush1.bf16.msra.mxu0 %v2485
    %2754 = vmatprep.subr.bf16.mxu0 0
    %2755 = vmatpush1.bf16.msra.mxu0 0
    %2756 = vmatprep.subr.bf16.mxu0 0
    %2757 = vmatpush1.bf16.msra.mxu0 0
    %2758 = vmatprep.subr.bf16.mxu0 0
    %2759 = vmatpush1.bf16.msra.mxu0 0
    %2760 = vmatprep.subr.bf16.mxu0 0
    %2761 = vmatpush1.bf16.msra.mxu0 0
    %2762 = vmatprep.subr.bf16.mxu0 0
    %2763 = vmatpush1.bf16.msra.mxu0 0
    %2764 = vmatprep.subr.bf16.mxu0 0
    %2765 = vmatpush1.bf16.msra.mxu0 0
    %2766 = vmatprep.subr.bf16.mxu0 0
    %2767 = vmatpush1.bf16.msra.mxu0 0
    %2768 = vmatprep.subr.bf16.mxu0 0
    %2769 = vmatpush1.bf16.msra.mxu0 0
    %2770 = vmatprep.subr.bf16.mxu0 0
    %2771 = vmatpush1.bf16.msra.mxu0 0
    %2772 = vmatprep.subr.bf16.mxu0 0
    %2773 = vmatpush1.bf16.msra.mxu0 0
    %2774 = vmatprep.mubr.bf16.mxu0 0
    %2775 = vmatmul.mubr.bf16.gmra.mrb[0].mxu0 %v2466
    %v2776 = vpop.f32.mrb[0].mxu0
    %v2777 = vadd.f32 %v2706, %v2776
    %v2778 = vpop.f32.mrb[0].mxu0
    %v2779 = vadd.f32 %v2708, %v2778
    %v2780 = vpop.f32.mrb[0].mxu0
    %v2781 = vadd.f32 %v2710, %v2780
    %v2782 = vpop.f32.mrb[0].mxu0
    %v2783 = vadd.f32 %v2712, %v2782
    %2784 = vmatprep.mubr.bf16.mxu0 0
    %2785 = vmatmul.mubr.bf16.gmra.mrb[0].mxu0 %v2469
    %v2786 = vpop.f32.mrb[0].mxu0
    %v2787 = vadd.f32 %v2716, %v2786
    %v2788 = vpop.f32.mrb[0].mxu0
    %v2789 = vadd.f32 %v2718, %v2788
    %v2790 = vpop.f32.mrb[0].mxu0
    %v2791 = vadd.f32 %v2720, %v2790
    %v2792 = vpop.f32.mrb[0].mxu0
    %v2793 = vadd.f32 %v2722, %v2792
    %2794 = vmatprep.mubr.bf16.mxu0 0
    %2795 = vmatmul.mubr.bf16.gmra.mrb[0].mxu0 %v2472
    %v2796 = vpop.f32.mrb[0].mxu0
    %v2797 = vadd.f32 %v2726, %v2796
    %v2798 = vpop.f32.mrb[0].mxu0
    %v2799 = vadd.f32 %v2728, %v2798
    %v2800 = vpop.f32.mrb[0].mxu0
    %v2801 = vadd.f32 %v2730, %v2800
    %v2802 = vpop.f32.mrb[0].mxu0
    %v2803 = vadd.f32 %v2732, %v2802
    %2804 = vmatprep.mubr.bf16.mxu0 0
    %2805 = vmatmul.mubr.bf16.gmra.mrb[0].mxu0 %v2475
    %v2806 = vpop.f32.mrb[0].mxu0
    %v2807 = vadd.f32 %v2736, %v2806
    %v2808 = vpop.f32.mrb[0].mxu0
    %v2809 = vadd.f32 %v2738, %v2808
    %v2810 = vpop.f32.mrb[0].mxu0
    %v2811 = vpop.f32.mrb[0].mxu0
    %2812 = vdwg.mxu0
    %2813 = vmatprep.subr.bf16.mxu0 %v1738
    %2814 = vmatpush1.bf16.msra.mxu0 %v1737
    %2815 = vmatprep.subr.bf16.mxu0 %v1755
    %2816 = vmatpush1.bf16.msra.mxu0 %v1754
    %2817 = vmatprep.subr.bf16.mxu0 %v1772
    %2818 = vmatpush1.bf16.msra.mxu0 %v1771
    %2819 = vmatprep.subr.bf16.mxu0 %v1789
    %2820 = vmatpush1.bf16.msra.mxu0 %v1788
    %2821 = vmatprep.subr.bf16.mxu0 %v1806
    %2822 = vmatpush1.bf16.msra.mxu0 %v1805
    %2823 = vmatprep.subr.bf16.mxu0 %v1823
    %2824 = vmatpush1.bf16.msra.mxu0 %v1822
    %2825 = vmatprep.subr.bf16.mxu0 %v1840
    %2826 = vmatpush1.bf16.msra.mxu0 %v1839
    %2827 = vmatprep.subr.bf16.mxu0 %v1857
    %2828 = vmatpush1.bf16.msra.mxu0 %v1856
    %2829 = vmatprep.subr.bf16.mxu0 %v1874
    %2830 = vmatpush1.bf16.msra.mxu0 %v1873
    %2831 = vmatprep.subr.bf16.mxu0 %v1891
    %2832 = vmatpush1.bf16.msra.mxu0 %v1890
    %2833 = vmatprep.subr.bf16.mxu0 %v1908
    %2834 = vmatpush1.bf16.msra.mxu0 %v1907
    %2835 = vmatprep.subr.bf16.mxu0 %v1925
    %2836 = vmatpush1.bf16.msra.mxu0 %v1924
    %2837 = vmatprep.subr.bf16.mxu0 %v1942
    %2838 = vmatpush1.bf16.msra.mxu0 %v1941
    %2839 = vmatprep.subr.bf16.mxu0 %v1959
    %2840 = vmatpush1.bf16.msra.mxu0 %v1958
    %2841 = vmatprep.subr.bf16.mxu0 %v1976
    %2842 = vmatpush1.bf16.msra.mxu0 %v1975
    %2843 = vmatprep.subr.bf16.mxu0 %v1993
    %2844 = vmatpush1.bf16.msra.mxu0 %v1992
    %2845 = vmatprep.mubr.bf16.mxu0 %v591
    %2846 = vmatmul.mubr.bf16.gmra.mrb[0].mxu0 %v575
    %v2847 = vpop.f32.mrb[0].mxu0
    %v2848 = vadd.f32 0.0, %v2847
    %v2849 = vpop.f32.mrb[0].mxu0
    %v2850 = vadd.f32 0.0, %v2849
    %v2851 = vpop.f32.mrb[0].mxu0
    %v2852 = vadd.f32 0.0, %v2851
    %v2853 = vpop.f32.mrb[0].mxu0
    %v2854 = vadd.f32 0.0, %v2853
    %2855 = vmatprep.mubr.bf16.mxu0 %v592
    %2856 = vmatmul.mubr.bf16.gmra.mrb[0].mxu0 %v576
    %v2857 = vpop.f32.mrb[0].mxu0
    %v2858 = vadd.f32 0.0, %v2857
    %v2859 = vpop.f32.mrb[0].mxu0
    %v2860 = vadd.f32 0.0, %v2859
    %v2861 = vpop.f32.mrb[0].mxu0
    %v2862 = vadd.f32 0.0, %v2861
    %v2863 = vpop.f32.mrb[0].mxu0
    %v2864 = vadd.f32 0.0, %v2863
    %2865 = vmatprep.mubr.bf16.mxu0 %v593
    %2866 = vmatmul.mubr.bf16.gmra.mrb[0].mxu0 %v577
    %v2867 = vpop.f32.mrb[0].mxu0
    %v2868 = vadd.f32 0.0, %v2867
    %v2869 = vpop.f32.mrb[0].mxu0
    %v2870 = vadd.f32 0.0, %v2869
    %v2871 = vpop.f32.mrb[0].mxu0
    %v2872 = vadd.f32 0.0, %v2871
    %v2873 = vpop.f32.mrb[0].mxu0
    %v2874 = vadd.f32 0.0, %v2873
    %2875 = vmatprep.mubr.bf16.mxu0 %v594
    %2876 = vmatmul.mubr.bf16.gmra.mrb[0].mxu0 %v578
    %v2877 = vpop.f32.mrb[0].mxu0
    %v2878 = vadd.f32 0.0, %v2877
    %v2879 = vpop.f32.mrb[0].mxu0
    %v2880 = vadd.f32 0.0, %v2879
    %v2881 = vpop.f32.mrb[0].mxu0
    %v2882 = vpop.f32.mrb[0].mxu0
    %2883 = vdwg.mxu0
    %2884 = vmatprep.subr.bf16.mxu0 %v2010
    %2885 = vmatpush1.bf16.msra.mxu0 %v2009
    %2886 = vmatprep.subr.bf16.mxu0 %v2027
    %2887 = vmatpush1.bf16.msra.mxu0 %v2026
    %2888 = vmatprep.subr.bf16.mxu0 %v2044
    %2889 = vmatpush1.bf16.msra.mxu0 %v2043
    %2890 = vmatprep.subr.bf16.mxu0 %v2061
    %2891 = vmatpush1.bf16.msra.mxu0 %v2060
    %2892 = vmatprep.subr.bf16.mxu0 %v2078
    %2893 = vmatpush1.bf16.msra.mxu0 %v2077
    %2894 = vmatprep.subr.bf16.mxu0 %v2494
    %2895 = vmatpush1.bf16.msra.mxu0 %v2491
    %2896 = vmatprep.subr.bf16.mxu0 0
    %2897 = vmatpush1.bf16.msra.mxu0 0
    %2898 = vmatprep.subr.bf16.mxu0 0
    %2899 = vmatpush1.bf16.msra.mxu0 0
    %2900 = vmatprep.subr.bf16.mxu0 0
    %2901 = vmatpush1.bf16.msra.mxu0 0
    %2902 = vmatprep.subr.bf16.mxu0 0
    %2903 = vmatpush1.bf16.msra.mxu0 0
    %2904 = vmatprep.subr.bf16.mxu0 0
    %2905 = vmatpush1.bf16.msra.mxu0 0
    %2906 = vmatprep.subr.bf16.mxu0 0
    %2907 = vmatpush1.bf16.msra.mxu0 0
    %2908 = vmatprep.subr.bf16.mxu0 0
    %2909 = vmatpush1.bf16.msra.mxu0 0
    %2910 = vmatprep.subr.bf16.mxu0 0
    %2911 = vmatpush1.bf16.msra.mxu0 0
    %2912 = vmatprep.subr.bf16.mxu0 0
    %2913 = vmatpush1.bf16.msra.mxu0 0
    %2914 = vmatprep.subr.bf16.mxu0 0
    %2915 = vmatpush1.bf16.msra.mxu0 0
    %2916 = vmatprep.mubr.bf16.mxu0 0
    %2917 = vmatmul.mubr.bf16.gmra.mrb[0].mxu0 %v2466
    %v2918 = vpop.f32.mrb[0].mxu0
    %v2919 = vadd.f32 %v2848, %v2918
    %v2920 = vpop.f32.mrb[0].mxu0
    %v2921 = vadd.f32 %v2850, %v2920
    %v2922 = vpop.f32.mrb[0].mxu0
    %v2923 = vadd.f32 %v2852, %v2922
    %v2924 = vpop.f32.mrb[0].mxu0
    %v2925 = vadd.f32 %v2854, %v2924
    %2926 = vmatprep.mubr.bf16.mxu0 0
    %2927 = vmatmul.mubr.bf16.gmra.mrb[0].mxu0 %v2469
    %v2928 = vpop.f32.mrb[0].mxu0
    %v2929 = vadd.f32 %v2858, %v2928
    %v2930 = vpop.f32.mrb[0].mxu0
    %v2931 = vadd.f32 %v2860, %v2930
    %v2932 = vpop.f32.mrb[0].mxu0
    %v2933 = vadd.f32 %v2862, %v2932
    %v2934 = vpop.f32.mrb[0].mxu0
    %v2935 = vadd.f32 %v2864, %v2934
    %2936 = vmatprep.mubr.bf16.mxu0 0
    %2937 = vmatmul.mubr.bf16.gmra.mrb[0].mxu0 %v2472
    %v2938 = vpop.f32.mrb[0].mxu0
    %v2939 = vadd.f32 %v2868, %v2938
    %v2940 = vpop.f32.mrb[0].mxu0
    %v2941 = vadd.f32 %v2870, %v2940
    %v2942 = vpop.f32.mrb[0].mxu0
    %v2943 = vadd.f32 %v2872, %v2942
    %v2944 = vpop.f32.mrb[0].mxu0
    %v2945 = vadd.f32 %v2874, %v2944
    %2946 = vmatprep.mubr.bf16.mxu0 0
    %2947 = vmatmul.mubr.bf16.gmra.mrb[0].mxu0 %v2475
    %v2948 = vpop.f32.mrb[0].mxu0
    %v2949 = vadd.f32 %v2878, %v2948
    %v2950 = vpop.f32.mrb[0].mxu0
    %v2951 = vadd.f32 %v2880, %v2950
    %v2952 = vpop.f32.mrb[0].mxu0
    %v2953 = vpop.f32.mrb[0].mxu0
    %2954 = vdwg.mxu0
    %2955 = vmatprep.subr.bf16.mxu0 %v1740
    %2956 = vmatpush1.bf16.msra.mxu0 %v1739
    %2957 = vmatprep.subr.bf16.mxu0 %v1757
    %2958 = vmatpush1.bf16.msra.mxu0 %v1756
    %2959 = vmatprep.subr.bf16.mxu0 %v1774
    %2960 = vmatpush1.bf16.msra.mxu0 %v1773
    %2961 = vmatprep.subr.bf16.mxu0 %v1791
    %2962 = vmatpush1.bf16.msra.mxu0 %v1790
    %2963 = vmatprep.subr.bf16.mxu0 %v1808
    %2964 = vmatpush1.bf16.msra.mxu0 %v1807
    %2965 = vmatprep.subr.bf16.mxu0 %v1825
    %2966 = vmatpush1.bf16.msra.mxu0 %v1824
    %2967 = vmatprep.subr.bf16.mxu0 %v1842
    %2968 = vmatpush1.bf16.msra.mxu0 %v1841
    %2969 = vmatprep.subr.bf16.mxu0 %v1859
    %2970 = vmatpush1.bf16.msra.mxu0 %v1858
    %2971 = vmatprep.subr.bf16.mxu0 %v1876
    %2972 = vmatpush1.bf16.msra.mxu0 %v1875
    %2973 = vmatprep.subr.bf16.mxu0 %v1893
    %2974 = vmatpush1.bf16.msra.mxu0 %v1892
    %2975 = vmatprep.subr.bf16.mxu0 %v1910
    %2976 = vmatpush1.bf16.msra.mxu0 %v1909
    %2977 = vmatprep.subr.bf16.mxu0 %v1927
    %2978 = vmatpush1.bf16.msra.mxu0 %v1926
    %2979 = vmatprep.subr.bf16.mxu0 %v1944
    %2980 = vmatpush1.bf16.msra.mxu0 %v1943
    %2981 = vmatprep.subr.bf16.mxu0 %v1961
    %2982 = vmatpush1.bf16.msra.mxu0 %v1960
    %2983 = vmatprep.subr.bf16.mxu0 %v1978
    %2984 = vmatpush1.bf16.msra.mxu0 %v1977
    %2985 = vmatprep.subr.bf16.mxu0 %v1995
    %2986 = vmatpush1.bf16.msra.mxu0 %v1994
    %2987 = vmatprep.mubr.bf16.mxu0 %v591
    %2988 = vmatmul.mubr.bf16.gmra.mrb[0].mxu0 %v575
    %v2989 = vpop.f32.mrb[0].mxu0
    %v2990 = vadd.f32 0.0, %v2989
    %v2991 = vpop.f32.mrb[0].mxu0
    %v2992 = vadd.f32 0.0, %v2991
    %v2993 = vpop.f32.mrb[0].mxu0
    %v2994 = vadd.f32 0.0, %v2993
    %v2995 = vpop.f32.mrb[0].mxu0
    %v2996 = vadd.f32 0.0, %v2995
    %2997 = vmatprep.mubr.bf16.mxu0 %v592
    %2998 = vmatmul.mubr.bf16.gmra.mrb[0].mxu0 %v576
    %v2999 = vpop.f32.mrb[0].mxu0
    %v3000 = vadd.f32 0.0, %v2999
    %v3001 = vpop.f32.mrb[0].mxu0
    %v3002 = vadd.f32 0.0, %v3001
    %v3003 = vpop.f32.mrb[0].mxu0
    %v3004 = vadd.f32 0.0, %v3003
    %v3005 = vpop.f32.mrb[0].mxu0
    %v3006 = vadd.f32 0.0, %v3005
    %3007 = vmatprep.mubr.bf16.mxu0 %v593
    %3008 = vmatmul.mubr.bf16.gmra.mrb[0].mxu0 %v577
    %v3009 = vpop.f32.mrb[0].mxu0
    %v3010 = vadd.f32 0.0, %v3009
    %v3011 = vpop.f32.mrb[0].mxu0
    %v3012 = vadd.f32 0.0, %v3011
    %v3013 = vpop.f32.mrb[0].mxu0
    %v3014 = vadd.f32 0.0, %v3013
    %v3015 = vpop.f32.mrb[0].mxu0
    %v3016 = vadd.f32 0.0, %v3015
    %3017 = vmatprep.mubr.bf16.mxu0 %v594
    %3018 = vmatmul.mubr.bf16.gmra.mrb[0].mxu0 %v578
    %v3019 = vpop.f32.mrb[0].mxu0
    %v3020 = vadd.f32 0.0, %v3019
    %v3021 = vpop.f32.mrb[0].mxu0
    %v3022 = vadd.f32 0.0, %v3021
    %v3023 = vpop.f32.mrb[0].mxu0
    %v3024 = vpop.f32.mrb[0].mxu0
    %3025 = vdwg.mxu0
    %3026 = vmatprep.subr.bf16.mxu0 %v2012
    %3027 = vmatpush1.bf16.msra.mxu0 %v2011
    %3028 = vmatprep.subr.bf16.mxu0 %v2029
    %3029 = vmatpush1.bf16.msra.mxu0 %v2028
    %3030 = vmatprep.subr.bf16.mxu0 %v2046
    %3031 = vmatpush1.bf16.msra.mxu0 %v2045
    %3032 = vmatprep.subr.bf16.mxu0 %v2063
    %3033 = vmatpush1.bf16.msra.mxu0 %v2062
    %3034 = vmatprep.subr.bf16.mxu0 %v2080
    %3035 = vmatpush1.bf16.msra.mxu0 %v2079
    %3036 = vmatprep.subr.bf16.mxu0 %v2500
    %3037 = vmatpush1.bf16.msra.mxu0 %v2497
    %3038 = vmatprep.subr.bf16.mxu0 0
    %3039 = vmatpush1.bf16.msra.mxu0 0
    %3040 = vmatprep.subr.bf16.mxu0 0
    %3041 = vmatpush1.bf16.msra.mxu0 0
    %3042 = vmatprep.subr.bf16.mxu0 0
    %3043 = vmatpush1.bf16.msra.mxu0 0
    %3044 = vmatprep.subr.bf16.mxu0 0
    %3045 = vmatpush1.bf16.msra.mxu0 0
    %3046 = vmatprep.subr.bf16.mxu0 0
    %3047 = vmatpush1.bf16.msra.mxu0 0
    %3048 = vmatprep.subr.bf16.mxu0 0
    %3049 = vmatpush1.bf16.msra.mxu0 0
    %3050 = vmatprep.subr.bf16.mxu0 0
    %3051 = vmatpush1.bf16.msra.mxu0 0
    %3052 = vmatprep.subr.bf16.mxu0 0
    %3053 = vmatpush1.bf16.msra.mxu0 0
    %3054 = vmatprep.subr.bf16.mxu0 0
    %3055 = vmatpush1.bf16.msra.mxu0 0
    %3056 = vmatprep.subr.bf16.mxu0 0
    %3057 = vmatpush1.bf16.msra.mxu0 0
    %3058 = vmatprep.mubr.bf16.mxu0 0
    %3059 = vmatmul.mubr.bf16.gmra.mrb[0].mxu0 %v2466
    %v3060 = vpop.f32.mrb[0].mxu0
    %v3061 = vadd.f32 %v2990, %v3060
    %v3062 = vpop.f32.mrb[0].mxu0
    %v3063 = vadd.f32 %v2992, %v3062
    %v3064 = vpop.f32.mrb[0].mxu0
    %v3065 = vadd.f32 %v2994, %v3064
    %v3066 = vpop.f32.mrb[0].mxu0
    %v3067 = vadd.f32 %v2996, %v3066
    %3068 = vmatprep.mubr.bf16.mxu0 0
    %3069 = vmatmul.mubr.bf16.gmra.mrb[0].mxu0 %v2469
    %v3070 = vpop.f32.mrb[0].mxu0
    %v3071 = vadd.f32 %v3000, %v3070
    %v3072 = vpop.f32.mrb[0].mxu0
    %v3073 = vadd.f32 %v3002, %v3072
    %v3074 = vpop.f32.mrb[0].mxu0
    %v3075 = vadd.f32 %v3004, %v3074
    %v3076 = vpop.f32.mrb[0].mxu0
    %v3077 = vadd.f32 %v3006, %v3076
    %3078 = vmatprep.mubr.bf16.mxu0 0
    %3079 = vmatmul.mubr.bf16.gmra.mrb[0].mxu0 %v2472
    %v3080 = vpop.f32.mrb[0].mxu0
    %v3081 = vadd.f32 %v3010, %v3080
    %v3082 = vpop.f32.mrb[0].mxu0
    %v3083 = vadd.f32 %v3012, %v3082
    %v3084 = vpop.f32.mrb[0].mxu0
    %v3085 = vadd.f32 %v3014, %v3084
    %v3086 = vpop.f32.mrb[0].mxu0
    %v3087 = vadd.f32 %v3016, %v3086
    %3088 = vmatprep.mubr.bf16.mxu0 0
    %3089 = vmatmul.mubr.bf16.gmra.mrb[0].mxu0 %v2475
    %v3090 = vpop.f32.mrb[0].mxu0
    %v3091 = vadd.f32 %v3020, %v3090
    %v3092 = vpop.f32.mrb[0].mxu0
    %v3093 = vadd.f32 %v3022, %v3092
    %v3094 = vpop.f32.mrb[0].mxu0
    %v3095 = vpop.f32.mrb[0].mxu0
    %3096 = vdwg.mxu0
    %3097 = vmatprep.subr.bf16.mxu0 %v1742
    %3098 = vmatpush1.bf16.msra.mxu0 %v1741
    %3099 = vmatprep.subr.bf16.mxu0 %v1759
    %3100 = vmatpush1.bf16.msra.mxu0 %v1758
    %3101 = vmatprep.subr.bf16.mxu0 %v1776
    %3102 = vmatpush1.bf16.msra.mxu0 %v1775
    %3103 = vmatprep.subr.bf16.mxu0 %v1793
    %3104 = vmatpush1.bf16.msra.mxu0 %v1792
    %3105 = vmatprep.subr.bf16.mxu0 %v1810
    %3106 = vmatpush1.bf16.msra.mxu0 %v1809
    %3107 = vmatprep.subr.bf16.mxu0 %v1827
    %3108 = vmatpush1.bf16.msra.mxu0 %v1826
    %3109 = vmatprep.subr.bf16.mxu0 %v1844
    %3110 = vmatpush1.bf16.msra.mxu0 %v1843
    %3111 = vmatprep.subr.bf16.mxu0 %v1861
    %3112 = vmatpush1.bf16.msra.mxu0 %v1860
    %3113 = vmatprep.subr.bf16.mxu0 %v1878
    %3114 = vmatpush1.bf16.msra.mxu0 %v1877
    %3115 = vmatprep.subr.bf16.mxu0 %v1895
    %3116 = vmatpush1.bf16.msra.mxu0 %v1894
    %3117 = vmatprep.subr.bf16.mxu0 %v1912
    %3118 = vmatpush1.bf16.msra.mxu0 %v1911
    %3119 = vmatprep.subr.bf16.mxu0 %v1929
    %3120 = vmatpush1.bf16.msra.mxu0 %v1928
    %3121 = vmatprep.subr.bf16.mxu0 %v1946
    %3122 = vmatpush1.bf16.msra.mxu0 %v1945
    %3123 = vmatprep.subr.bf16.mxu0 %v1963
    %3124 = vmatpush1.bf16.msra.mxu0 %v1962
    %3125 = vmatprep.subr.bf16.mxu0 %v1980
    %3126 = vmatpush1.bf16.msra.mxu0 %v1979
    %3127 = vmatprep.subr.bf16.mxu0 %v1997
    %3128 = vmatpush1.bf16.msra.mxu0 %v1996
    %3129 = vmatprep.mubr.bf16.mxu0 %v591
    %3130 = vmatmul.mubr.bf16.gmra.mrb[0].mxu0 %v575
    %v3131 = vpop.f32.mrb[0].mxu0
    %v3132 = vadd.f32 0.0, %v3131
    %v3133 = vpop.f32.mrb[0].mxu0
    %v3134 = vadd.f32 0.0, %v3133
    %v3135 = vpop.f32.mrb[0].mxu0
    %v3136 = vadd.f32 0.0, %v3135
    %v3137 = vpop.f32.mrb[0].mxu0
    %v3138 = vadd.f32 0.0, %v3137
    %3139 = vmatprep.mubr.bf16.mxu0 %v592
    %3140 = vmatmul.mubr.bf16.gmra.mrb[0].mxu0 %v576
    %v3141 = vpop.f32.mrb[0].mxu0
    %v3142 = vadd.f32 0.0, %v3141
    %v3143 = vpop.f32.mrb[0].mxu0
    %v3144 = vadd.f32 0.0, %v3143
    %v3145 = vpop.f32.mrb[0].mxu0
    %v3146 = vadd.f32 0.0, %v3145
    %v3147 = vpop.f32.mrb[0].mxu0
    %v3148 = vadd.f32 0.0, %v3147
    %3149 = vmatprep.mubr.bf16.mxu0 %v593
    %3150 = vmatmul.mubr.bf16.gmra.mrb[0].mxu0 %v577
    %v3151 = vpop.f32.mrb[0].mxu0
    %v3152 = vadd.f32 0.0, %v3151
    %v3153 = vpop.f32.mrb[0].mxu0
    %v3154 = vadd.f32 0.0, %v3153
    %v3155 = vpop.f32.mrb[0].mxu0
    %v3156 = vadd.f32 0.0, %v3155
    %v3157 = vpop.f32.mrb[0].mxu0
    %v3158 = vadd.f32 0.0, %v3157
    %3159 = vmatprep.mubr.bf16.mxu0 %v594
    %3160 = vmatmul.mubr.bf16.gmra.mrb[0].mxu0 %v578
    %v3161 = vpop.f32.mrb[0].mxu0
    %v3162 = vadd.f32 0.0, %v3161
    %v3163 = vpop.f32.mrb[0].mxu0
    %v3164 = vadd.f32 0.0, %v3163
    %v3165 = vpop.f32.mrb[0].mxu0
    %v3166 = vpop.f32.mrb[0].mxu0
    %3167 = vdwg.mxu0
    %3168 = vmatprep.subr.bf16.mxu0 %v2014
    %3169 = vmatpush1.bf16.msra.mxu0 %v2013
    %3170 = vmatprep.subr.bf16.mxu0 %v2031
    %3171 = vmatpush1.bf16.msra.mxu0 %v2030
    %3172 = vmatprep.subr.bf16.mxu0 %v2048
    %3173 = vmatpush1.bf16.msra.mxu0 %v2047
    %3174 = vmatprep.subr.bf16.mxu0 %v2065
    %3175 = vmatpush1.bf16.msra.mxu0 %v2064
    %3176 = vmatprep.subr.bf16.mxu0 %v2082
    %3177 = vmatpush1.bf16.msra.mxu0 %v2081
    %3178 = vmatprep.subr.bf16.mxu0 %v2506
    %3179 = vmatpush1.bf16.msra.mxu0 %v2503
    %3180 = vmatprep.subr.bf16.mxu0 0
    %3181 = vmatpush1.bf16.msra.mxu0 0
    %3182 = vmatprep.subr.bf16.mxu0 0
    %3183 = vmatpush1.bf16.msra.mxu0 0
    %3184 = vmatprep.subr.bf16.mxu0 0
    %3185 = vmatpush1.bf16.msra.mxu0 0
    %3186 = vmatprep.subr.bf16.mxu0 0
    %3187 = vmatpush1.bf16.msra.mxu0 0
    %3188 = vmatprep.subr.bf16.mxu0 0
    %3189 = vmatpush1.bf16.msra.mxu0 0
    %3190 = vmatprep.subr.bf16.mxu0 0
    %3191 = vmatpush1.bf16.msra.mxu0 0
    %3192 = vmatprep.subr.bf16.mxu0 0
    %3193 = vmatpush1.bf16.msra.mxu0 0
    %3194 = vmatprep.subr.bf16.mxu0 0
    %3195 = vmatpush1.bf16.msra.mxu0 0
    %3196 = vmatprep.subr.bf16.mxu0 0
    %3197 = vmatpush1.bf16.msra.mxu0 0
    %3198 = vmatprep.subr.bf16.mxu0 0
    %3199 = vmatpush1.bf16.msra.mxu0 0
    %3200 = vmatprep.mubr.bf16.mxu0 0
    %3201 = vmatmul.mubr.bf16.gmra.mrb[0].mxu0 %v2466
    %v3202 = vpop.f32.mrb[0].mxu0
    %v3203 = vadd.f32 %v3132, %v3202
    %v3204 = vpop.f32.mrb[0].mxu0
    %v3205 = vadd.f32 %v3134, %v3204
    %v3206 = vpop.f32.mrb[0].mxu0
    %v3207 = vadd.f32 %v3136, %v3206
    %v3208 = vpop.f32.mrb[0].mxu0
    %v3209 = vadd.f32 %v3138, %v3208
    %3210 = vmatprep.mubr.bf16.mxu0 0
    %3211 = vmatmul.mubr.bf16.gmra.mrb[0].mxu0 %v2469
    %v3212 = vpop.f32.mrb[0].mxu0
    %v3213 = vadd.f32 %v3142, %v3212
    %v3214 = vpop.f32.mrb[0].mxu0
    %v3215 = vadd.f32 %v3144, %v3214
    %v3216 = vpop.f32.mrb[0].mxu0
    %v3217 = vadd.f32 %v3146, %v3216
    %v3218 = vpop.f32.mrb[0].mxu0
    %v3219 = vadd.f32 %v3148, %v3218
    %3220 = vmatprep.mubr.bf16.mxu0 0
    %3221 = vmatmul.mubr.bf16.gmra.mrb[0].mxu0 %v2472
    %v3222 = vpop.f32.mrb[0].mxu0
    %v3223 = vadd.f32 %v3152, %v3222
    %v3224 = vpop.f32.mrb[0].mxu0
    %v3225 = vadd.f32 %v3154, %v3224
    %v3226 = vpop.f32.mrb[0].mxu0
    %v3227 = vadd.f32 %v3156, %v3226
    %v3228 = vpop.f32.mrb[0].mxu0
    %v3229 = vadd.f32 %v3158, %v3228
    %3230 = vmatprep.mubr.bf16.mxu0 0
    %3231 = vmatmul.mubr.bf16.gmra.mrb[0].mxu0 %v2475
    %v3232 = vpop.f32.mrb[0].mxu0
    %v3233 = vadd.f32 %v3162, %v3232
    %v3234 = vpop.f32.mrb[0].mxu0
    %v3235 = vadd.f32 %v3164, %v3234
    %v3236 = vpop.f32.mrb[0].mxu0
    %v3237 = vpop.f32.mrb[0].mxu0
    %3238 = vdwg.mxu0
    %3239 = vmatprep.subr.bf16.mxu0 %v1744
    %3240 = vmatpush1.bf16.msra.mxu0 %v1743
    %3241 = vmatprep.subr.bf16.mxu0 %v1761
    %3242 = vmatpush1.bf16.msra.mxu0 %v1760
    %3243 = vmatprep.subr.bf16.mxu0 %v1778
    %3244 = vmatpush1.bf16.msra.mxu0 %v1777
    %3245 = vmatprep.subr.bf16.mxu0 %v1795
    %3246 = vmatpush1.bf16.msra.mxu0 %v1794
    %3247 = vmatprep.subr.bf16.mxu0 %v1812
    %3248 = vmatpush1.bf16.msra.mxu0 %v1811
    %3249 = vmatprep.subr.bf16.mxu0 %v1829
    %3250 = vmatpush1.bf16.msra.mxu0 %v1828
    %3251 = vmatprep.subr.bf16.mxu0 %v1846
    %3252 = vmatpush1.bf16.msra.mxu0 %v1845
    %3253 = vmatprep.subr.bf16.mxu0 %v1863
    %3254 = vmatpush1.bf16.msra.mxu0 %v1862
    %3255 = vmatprep.subr.bf16.mxu0 %v1880
    %3256 = vmatpush1.bf16.msra.mxu0 %v1879
    %3257 = vmatprep.subr.bf16.mxu0 %v1897
    %3258 = vmatpush1.bf16.msra.mxu0 %v1896
    %3259 = vmatprep.subr.bf16.mxu0 %v1914
    %3260 = vmatpush1.bf16.msra.mxu0 %v1913
    %3261 = vmatprep.subr.bf16.mxu0 %v1931
    %3262 = vmatpush1.bf16.msra.mxu0 %v1930
    %3263 = vmatprep.subr.bf16.mxu0 %v1948
    %3264 = vmatpush1.bf16.msra.mxu0 %v1947
    %3265 = vmatprep.subr.bf16.mxu0 %v1965
    %3266 = vmatpush1.bf16.msra.mxu0 %v1964
    %3267 = vmatprep.subr.bf16.mxu0 %v1982
    %3268 = vmatpush1.bf16.msra.mxu0 %v1981
    %3269 = vmatprep.subr.bf16.mxu0 %v1999
    %3270 = vmatpush1.bf16.msra.mxu0 %v1998
    %3271 = vmatprep.mubr.bf16.mxu0 %v591
    %3272 = vmatmul.mubr.bf16.gmra.mrb[0].mxu0 %v575
    %v3273 = vpop.f32.mrb[0].mxu0
    %v3274 = vadd.f32 0.0, %v3273
    %v3275 = vpop.f32.mrb[0].mxu0
    %v3276 = vadd.f32 0.0, %v3275
    %v3277 = vpop.f32.mrb[0].mxu0
    %v3278 = vadd.f32 0.0, %v3277
    %v3279 = vpop.f32.mrb[0].mxu0
    %v3280 = vadd.f32 0.0, %v3279
    %3281 = vmatprep.mubr.bf16.mxu0 %v592
    %3282 = vmatmul.mubr.bf16.gmra.mrb[0].mxu0 %v576
    %v3283 = vpop.f32.mrb[0].mxu0
    %v3284 = vadd.f32 0.0, %v3283
    %v3285 = vpop.f32.mrb[0].mxu0
    %v3286 = vadd.f32 0.0, %v3285
    %v3287 = vpop.f32.mrb[0].mxu0
    %v3288 = vadd.f32 0.0, %v3287
    %v3289 = vpop.f32.mrb[0].mxu0
    %v3290 = vadd.f32 0.0, %v3289
    %3291 = vmatprep.mubr.bf16.mxu0 %v593
    %3292 = vmatmul.mubr.bf16.gmra.mrb[0].mxu0 %v577
    %v3293 = vpop.f32.mrb[0].mxu0
    %v3294 = vadd.f32 0.0, %v3293
    %v3295 = vpop.f32.mrb[0].mxu0
    %v3296 = vadd.f32 0.0, %v3295
    %v3297 = vpop.f32.mrb[0].mxu0
    %v3298 = vadd.f32 0.0, %v3297
    %v3299 = vpop.f32.mrb[0].mxu0
    %v3300 = vadd.f32 0.0, %v3299
    %3301 = vmatprep.mubr.bf16.mxu0 %v594
    %3302 = vmatmul.mubr.bf16.gmra.mrb[0].mxu0 %v578
    %v3303 = vpop.f32.mrb[0].mxu0
    %v3304 = vadd.f32 0.0, %v3303
    %v3305 = vpop.f32.mrb[0].mxu0
    %v3306 = vadd.f32 0.0, %v3305
    %v3307 = vpop.f32.mrb[0].mxu0
    %v3308 = vpop.f32.mrb[0].mxu0
    %3309 = vdwg.mxu0
    %3310 = vmatprep.subr.bf16.mxu0 %v2016
    %3311 = vmatpush1.bf16.msra.mxu0 %v2015
    %3312 = vmatprep.subr.bf16.mxu0 %v2033
    %3313 = vmatpush1.bf16.msra.mxu0 %v2032
    %3314 = vmatprep.subr.bf16.mxu0 %v2050
    %3315 = vmatpush1.bf16.msra.mxu0 %v2049
    %3316 = vmatprep.subr.bf16.mxu0 %v2067
    %3317 = vmatpush1.bf16.msra.mxu0 %v2066
    %3318 = vmatprep.subr.bf16.mxu0 %v2084
    %3319 = vmatpush1.bf16.msra.mxu0 %v2083
    %3320 = vmatprep.subr.bf16.mxu0 %v2512
    %3321 = vmatpush1.bf16.msra.mxu0 %v2509
    %3322 = vmatprep.subr.bf16.mxu0 0
    %3323 = vmatpush1.bf16.msra.mxu0 0
    %3324 = vmatprep.subr.bf16.mxu0 0
    %3325 = vmatpush1.bf16.msra.mxu0 0
    %3326 = vmatprep.subr.bf16.mxu0 0
    %3327 = vmatpush1.bf16.msra.mxu0 0
    %3328 = vmatprep.subr.bf16.mxu0 0
    %3329 = vmatpush1.bf16.msra.mxu0 0
    %3330 = vmatprep.subr.bf16.mxu0 0
    %3331 = vmatpush1.bf16.msra.mxu0 0
    %3332 = vmatprep.subr.bf16.mxu0 0
    %3333 = vmatpush1.bf16.msra.mxu0 0
    %3334 = vmatprep.subr.bf16.mxu0 0
    %3335 = vmatpush1.bf16.msra.mxu0 0
    %3336 = vmatprep.subr.bf16.mxu0 0
    %3337 = vmatpush1.bf16.msra.mxu0 0
    %3338 = vmatprep.subr.bf16.mxu0 0
    %3339 = vmatpush1.bf16.msra.mxu0 0
    %3340 = vmatprep.subr.bf16.mxu0 0
    %3341 = vmatpush1.bf16.msra.mxu0 0
    %3342 = vmatprep.mubr.bf16.mxu0 0
    %3343 = vmatmul.mubr.bf16.gmra.mrb[0].mxu0 %v2466
    %v3344 = vpop.f32.mrb[0].mxu0
    %v3345 = vadd.f32 %v3274, %v3344
    %v3346 = vpop.f32.mrb[0].mxu0
    %v3347 = vadd.f32 %v3276, %v3346
    %v3348 = vpop.f32.mrb[0].mxu0
    %v3349 = vadd.f32 %v3278, %v3348
    %v3350 = vpop.f32.mrb[0].mxu0
    %v3351 = vadd.f32 %v3280, %v3350
    %3352 = vmatprep.mubr.bf16.mxu0 0
    %3353 = vmatmul.mubr.bf16.gmra.mrb[0].mxu0 %v2469
    %v3354 = vpop.f32.mrb[0].mxu0
    %v3355 = vadd.f32 %v3284, %v3354
    %v3356 = vpop.f32.mrb[0].mxu0
    %v3357 = vadd.f32 %v3286, %v3356
    %v3358 = vpop.f32.mrb[0].mxu0
    %v3359 = vadd.f32 %v3288, %v3358
    %v3360 = vpop.f32.mrb[0].mxu0
    %v3361 = vadd.f32 %v3290, %v3360
    %3362 = vmatprep.mubr.bf16.mxu0 0
    %3363 = vmatmul.mubr.bf16.gmra.mrb[0].mxu0 %v2472
    %v3364 = vpop.f32.mrb[0].mxu0
    %v3365 = vadd.f32 %v3294, %v3364
    %v3366 = vpop.f32.mrb[0].mxu0
    %v3367 = vadd.f32 %v3296, %v3366
    %v3368 = vpop.f32.mrb[0].mxu0
    %v3369 = vadd.f32 %v3298, %v3368
    %v3370 = vpop.f32.mrb[0].mxu0
    %v3371 = vadd.f32 %v3300, %v3370
    %3372 = vmatprep.mubr.bf16.mxu0 0
    %3373 = vmatmul.mubr.bf16.gmra.mrb[0].mxu0 %v2475
    %v3374 = vpop.f32.mrb[0].mxu0
    %v3375 = vadd.f32 %v3304, %v3374
    %v3376 = vpop.f32.mrb[0].mxu0
    %v3377 = vadd.f32 %v3306, %v3376
    %v3378 = vpop.f32.mrb[0].mxu0
    %v3379 = vpop.f32.mrb[0].mxu0
    %3380 = vdwg.mxu0
    %3381 = vmatprep.subr.bf16.mxu0 %v1746
    %3382 = vmatpush1.bf16.msra.mxu0 %v1745
    %3383 = vmatprep.subr.bf16.mxu0 %v1763
    %3384 = vmatpush1.bf16.msra.mxu0 %v1762
    %3385 = vmatprep.subr.bf16.mxu0 %v1780
    %3386 = vmatpush1.bf16.msra.mxu0 %v1779
    %3387 = vmatprep.subr.bf16.mxu0 %v1797
    %3388 = vmatpush1.bf16.msra.mxu0 %v1796
    %3389 = vmatprep.subr.bf16.mxu0 %v1814
    %3390 = vmatpush1.bf16.msra.mxu0 %v1813
    %3391 = vmatprep.subr.bf16.mxu0 %v1831
    %3392 = vmatpush1.bf16.msra.mxu0 %v1830
    %3393 = vmatprep.subr.bf16.mxu0 %v1848
    %3394 = vmatpush1.bf16.msra.mxu0 %v1847
    %3395 = vmatprep.subr.bf16.mxu0 %v1865
    %3396 = vmatpush1.bf16.msra.mxu0 %v1864
    %3397 = vmatprep.subr.bf16.mxu0 %v1882
    %3398 = vmatpush1.bf16.msra.mxu0 %v1881
    %3399 = vmatprep.subr.bf16.mxu0 %v1899
    %3400 = vmatpush1.bf16.msra.mxu0 %v1898
    %3401 = vmatprep.subr.bf16.mxu0 %v1916
    %3402 = vmatpush1.bf16.msra.mxu0 %v1915
    %3403 = vmatprep.subr.bf16.mxu0 %v1933
    %3404 = vmatpush1.bf16.msra.mxu0 %v1932
    %3405 = vmatprep.subr.bf16.mxu0 %v1950
    %3406 = vmatpush1.bf16.msra.mxu0 %v1949
    %3407 = vmatprep.subr.bf16.mxu0 %v1967
    %3408 = vmatpush1.bf16.msra.mxu0 %v1966
    %3409 = vmatprep.subr.bf16.mxu0 %v1984
    %3410 = vmatpush1.bf16.msra.mxu0 %v1983
    %3411 = vmatprep.subr.bf16.mxu0 %v2001
    %3412 = vmatpush1.bf16.msra.mxu0 %v2000
    %3413 = vmatprep.mubr.bf16.mxu0 %v591
    %3414 = vmatmul.mubr.bf16.gmra.mrb[0].mxu0 %v575
    %v3415 = vpop.f32.mrb[0].mxu0
    %v3416 = vadd.f32 0.0, %v3415
    %v3417 = vpop.f32.mrb[0].mxu0
    %v3418 = vadd.f32 0.0, %v3417
    %v3419 = vpop.f32.mrb[0].mxu0
    %v3420 = vadd.f32 0.0, %v3419
    %v3421 = vpop.f32.mrb[0].mxu0
    %v3422 = vadd.f32 0.0, %v3421
    %3423 = vmatprep.mubr.bf16.mxu0 %v592
    %3424 = vmatmul.mubr.bf16.gmra.mrb[0].mxu0 %v576
    %v3425 = vpop.f32.mrb[0].mxu0
    %v3426 = vadd.f32 0.0, %v3425
    %v3427 = vpop.f32.mrb[0].mxu0
    %v3428 = vadd.f32 0.0, %v3427
    %v3429 = vpop.f32.mrb[0].mxu0
    %v3430 = vadd.f32 0.0, %v3429
    %v3431 = vpop.f32.mrb[0].mxu0
    %v3432 = vadd.f32 0.0, %v3431
    %3433 = vmatprep.mubr.bf16.mxu0 %v593
    %3434 = vmatmul.mubr.bf16.gmra.mrb[0].mxu0 %v577
    %v3435 = vpop.f32.mrb[0].mxu0
    %v3436 = vadd.f32 0.0, %v3435
    %v3437 = vpop.f32.mrb[0].mxu0
    %v3438 = vadd.f32 0.0, %v3437
    %v3439 = vpop.f32.mrb[0].mxu0
    %v3440 = vadd.f32 0.0, %v3439
    %v3441 = vpop.f32.mrb[0].mxu0
    %v3442 = vadd.f32 0.0, %v3441
    %3443 = vmatprep.mubr.bf16.mxu0 %v594
    %3444 = vmatmul.mubr.bf16.gmra.mrb[0].mxu0 %v578
    %v3445 = vpop.f32.mrb[0].mxu0
    %v3446 = vadd.f32 0.0, %v3445
    %v3447 = vpop.f32.mrb[0].mxu0
    %v3448 = vadd.f32 0.0, %v3447
    %v3449 = vpop.f32.mrb[0].mxu0
    %v3450 = vpop.f32.mrb[0].mxu0
    %3451 = vdwg.mxu0
    %3452 = vmatprep.subr.bf16.mxu0 %v2018
    %3453 = vmatpush1.bf16.msra.mxu0 %v2017
    %3454 = vmatprep.subr.bf16.mxu0 %v2035
    %3455 = vmatpush1.bf16.msra.mxu0 %v2034
    %3456 = vmatprep.subr.bf16.mxu0 %v2052
    %3457 = vmatpush1.bf16.msra.mxu0 %v2051
    %3458 = vmatprep.subr.bf16.mxu0 %v2069
    %3459 = vmatpush1.bf16.msra.mxu0 %v2068
    %3460 = vmatprep.subr.bf16.mxu0 %v2086
    %3461 = vmatpush1.bf16.msra.mxu0 %v2085
    %3462 = vmatprep.subr.bf16.mxu0 %v2518
    %3463 = vmatpush1.bf16.msra.mxu0 %v2515
    %3464 = vmatprep.subr.bf16.mxu0 0
    %3465 = vmatpush1.bf16.msra.mxu0 0
    %3466 = vmatprep.subr.bf16.mxu0 0
    %3467 = vmatpush1.bf16.msra.mxu0 0
    %3468 = vmatprep.subr.bf16.mxu0 0
    %3469 = vmatpush1.bf16.msra.mxu0 0
    %3470 = vmatprep.subr.bf16.mxu0 0
    %3471 = vmatpush1.bf16.msra.mxu0 0
    %3472 = vmatprep.subr.bf16.mxu0 0
    %3473 = vmatpush1.bf16.msra.mxu0 0
    %3474 = vmatprep.subr.bf16.mxu0 0
    %3475 = vmatpush1.bf16.msra.mxu0 0
    %3476 = vmatprep.subr.bf16.mxu0 0
    %3477 = vmatpush1.bf16.msra.mxu0 0
    %3478 = vmatprep.subr.bf16.mxu0 0
    %3479 = vmatpush1.bf16.msra.mxu0 0
    %3480 = vmatprep.subr.bf16.mxu0 0
    %3481 = vmatpush1.bf16.msra.mxu0 0
    %3482 = vmatprep.subr.bf16.mxu0 0
    %3483 = vmatpush1.bf16.msra.mxu0 0
    %3484 = vmatprep.mubr.bf16.mxu0 0
    %3485 = vmatmul.mubr.bf16.gmra.mrb[0].mxu0 %v2466
    %v3486 = vpop.f32.mrb[0].mxu0
    %v3487 = vadd.f32 %v3416, %v3486
    %v3488 = vpop.f32.mrb[0].mxu0
    %v3489 = vadd.f32 %v3418, %v3488
    %v3490 = vpop.f32.mrb[0].mxu0
    %v3491 = vadd.f32 %v3420, %v3490
    %v3492 = vpop.f32.mrb[0].mxu0
    %v3493 = vadd.f32 %v3422, %v3492
    %3494 = vmatprep.mubr.bf16.mxu0 0
    %3495 = vmatmul.mubr.bf16.gmra.mrb[0].mxu0 %v2469
    %v3496 = vpop.f32.mrb[0].mxu0
    %v3497 = vadd.f32 %v3426, %v3496
    %v3498 = vpop.f32.mrb[0].mxu0
    %v3499 = vadd.f32 %v3428, %v3498
    %v3500 = vpop.f32.mrb[0].mxu0
    %v3501 = vadd.f32 %v3430, %v3500
    %v3502 = vpop.f32.mrb[0].mxu0
    %v3503 = vadd.f32 %v3432, %v3502
    %3504 = vmatprep.mubr.bf16.mxu0 0
    %3505 = vmatmul.mubr.bf16.gmra.mrb[0].mxu0 %v2472
    %v3506 = vpop.f32.mrb[0].mxu0
    %v3507 = vadd.f32 %v3436, %v3506
    %v3508 = vpop.f32.mrb[0].mxu0
    %v3509 = vadd.f32 %v3438, %v3508
    %v3510 = vpop.f32.mrb[0].mxu0
    %v3511 = vadd.f32 %v3440, %v3510
    %v3512 = vpop.f32.mrb[0].mxu0
    %v3513 = vadd.f32 %v3442, %v3512
    %3514 = vmatprep.mubr.bf16.mxu0 0
    %3515 = vmatmul.mubr.bf16.gmra.mrb[0].mxu0 %v2475
    %v3516 = vpop.f32.mrb[0].mxu0
    %v3517 = vadd.f32 %v3446, %v3516
    %v3518 = vpop.f32.mrb[0].mxu0
    %v3519 = vadd.f32 %v3448, %v3518
    %v3520 = vpop.f32.mrb[0].mxu0
    %v3521 = vpop.f32.mrb[0].mxu0
    %3522 = vdwg.mxu0
    %3523 = vmatprep.subr.bf16.mxu0 %v1748
    %3524 = vmatpush1.bf16.msra.mxu0 %v1747
    %3525 = vmatprep.subr.bf16.mxu0 %v1765
    %3526 = vmatpush1.bf16.msra.mxu0 %v1764
    %3527 = vmatprep.subr.bf16.mxu0 %v1782
    %3528 = vmatpush1.bf16.msra.mxu0 %v1781
    %3529 = vmatprep.subr.bf16.mxu0 %v1799
    %3530 = vmatpush1.bf16.msra.mxu0 %v1798
    %3531 = vmatprep.subr.bf16.mxu0 %v1816
    %3532 = vmatpush1.bf16.msra.mxu0 %v1815
    %3533 = vmatprep.subr.bf16.mxu0 %v1833
    %3534 = vmatpush1.bf16.msra.mxu0 %v1832
    %3535 = vmatprep.subr.bf16.mxu0 %v1850
    %3536 = vmatpush1.bf16.msra.mxu0 %v1849
    %3537 = vmatprep.subr.bf16.mxu0 %v1867
    %3538 = vmatpush1.bf16.msra.mxu0 %v1866
    %3539 = vmatprep.subr.bf16.mxu0 %v1884
    %3540 = vmatpush1.bf16.msra.mxu0 %v1883
    %3541 = vmatprep.subr.bf16.mxu0 %v1901
    %3542 = vmatpush1.bf16.msra.mxu0 %v1900
    %3543 = vmatprep.subr.bf16.mxu0 %v1918
    %3544 = vmatpush1.bf16.msra.mxu0 %v1917
    %3545 = vmatprep.subr.bf16.mxu0 %v1935
    %3546 = vmatpush1.bf16.msra.mxu0 %v1934
    %3547 = vmatprep.subr.bf16.mxu0 %v1952
    %3548 = vmatpush1.bf16.msra.mxu0 %v1951
    %3549 = vmatprep.subr.bf16.mxu0 %v1969
    %3550 = vmatpush1.bf16.msra.mxu0 %v1968
    %3551 = vmatprep.subr.bf16.mxu0 %v1986
    %3552 = vmatpush1.bf16.msra.mxu0 %v1985
    %3553 = vmatprep.subr.bf16.mxu0 %v2003
    %3554 = vmatpush1.bf16.msra.mxu0 %v2002
    %3555 = vmatprep.mubr.bf16.mxu0 %v591
    %3556 = vmatmul.mubr.bf16.gmra.mrb[0].mxu0 %v575
    %v3557 = vpop.f32.mrb[0].mxu0
    %v3558 = vadd.f32 0.0, %v3557
    %v3559 = vpop.f32.mrb[0].mxu0
    %v3560 = vadd.f32 0.0, %v3559
    %v3561 = vpop.f32.mrb[0].mxu0
    %v3562 = vadd.f32 0.0, %v3561
    %v3563 = vpop.f32.mrb[0].mxu0
    %v3564 = vadd.f32 0.0, %v3563
    %3565 = vmatprep.mubr.bf16.mxu0 %v592
    %3566 = vmatmul.mubr.bf16.gmra.mrb[0].mxu0 %v576
    %v3567 = vpop.f32.mrb[0].mxu0
    %v3568 = vadd.f32 0.0, %v3567
    %v3569 = vpop.f32.mrb[0].mxu0
    %v3570 = vadd.f32 0.0, %v3569
    %v3571 = vpop.f32.mrb[0].mxu0
    %v3572 = vadd.f32 0.0, %v3571
    %v3573 = vpop.f32.mrb[0].mxu0
    %v3574 = vadd.f32 0.0, %v3573
    %3575 = vmatprep.mubr.bf16.mxu0 %v593
    %3576 = vmatmul.mubr.bf16.gmra.mrb[0].mxu0 %v577
    %v3577 = vpop.f32.mrb[0].mxu0
    %v3578 = vadd.f32 0.0, %v3577
    %v3579 = vpop.f32.mrb[0].mxu0
    %v3580 = vadd.f32 0.0, %v3579
    %v3581 = vpop.f32.mrb[0].mxu0
    %v3582 = vadd.f32 0.0, %v3581
    %v3583 = vpop.f32.mrb[0].mxu0
    %v3584 = vadd.f32 0.0, %v3583
    %3585 = vmatprep.mubr.bf16.mxu0 %v594
    %3586 = vmatmul.mubr.bf16.gmra.mrb[0].mxu0 %v578
    %v3587 = vpop.f32.mrb[0].mxu0
    %v3588 = vadd.f32 0.0, %v3587
    %v3589 = vpop.f32.mrb[0].mxu0
    %v3590 = vadd.f32 0.0, %v3589
    %v3591 = vpop.f32.mrb[0].mxu0
    %v3592 = vpop.f32.mrb[0].mxu0
    %3593 = vdwg.mxu0
    %3594 = vmatprep.subr.bf16.mxu0 %v2020
    %3595 = vmatpush1.bf16.msra.mxu0 %v2019
    %3596 = vmatprep.subr.bf16.mxu0 %v2037
    %3597 = vmatpush1.bf16.msra.mxu0 %v2036
    %3598 = vmatprep.subr.bf16.mxu0 %v2054
    %3599 = vmatpush1.bf16.msra.mxu0 %v2053
    %3600 = vmatprep.subr.bf16.mxu0 %v2071
    %3601 = vmatpush1.bf16.msra.mxu0 %v2070
    %3602 = vmatprep.subr.bf16.mxu0 %v2088
    %3603 = vmatpush1.bf16.msra.mxu0 %v2087
    %3604 = vmatprep.subr.bf16.mxu0 %v2524
    %3605 = vmatpush1.bf16.msra.mxu0 %v2521
    %3606 = vmatprep.subr.bf16.mxu0 0
    %3607 = vmatpush1.bf16.msra.mxu0 0
    %3608 = vmatprep.subr.bf16.mxu0 0
    %3609 = vmatpush1.bf16.msra.mxu0 0
    %3610 = vmatprep.subr.bf16.mxu0 0
    %3611 = vmatpush1.bf16.msra.mxu0 0
    %3612 = vmatprep.subr.bf16.mxu0 0
    %3613 = vmatpush1.bf16.msra.mxu0 0
    %3614 = vmatprep.subr.bf16.mxu0 0
    %3615 = vmatpush1.bf16.msra.mxu0 0
    %3616 = vmatprep.subr.bf16.mxu0 0
    %3617 = vmatpush1.bf16.msra.mxu0 0
    %3618 = vmatprep.subr.bf16.mxu0 0
    %3619 = vmatpush1.bf16.msra.mxu0 0
    %3620 = vmatprep.subr.bf16.mxu0 0
    %3621 = vmatpush1.bf16.msra.mxu0 0
    %3622 = vmatprep.subr.bf16.mxu0 0
    %3623 = vmatpush1.bf16.msra.mxu0 0
    %3624 = vmatprep.subr.bf16.mxu0 0
    %3625 = vmatpush1.bf16.msra.mxu0 0
    %3626 = vmatprep.mubr.bf16.mxu0 0
    %3627 = vmatmul.mubr.bf16.gmra.mrb[0].mxu0 %v2466
    %v3628 = vpop.f32.mrb[0].mxu0
    %v3629 = vadd.f32 %v3558, %v3628
    %v3630 = vpop.f32.mrb[0].mxu0
    %v3631 = vadd.f32 %v3560, %v3630
    %v3632 = vpop.f32.mrb[0].mxu0
    %v3633 = vadd.f32 %v3562, %v3632
    %v3634 = vpop.f32.mrb[0].mxu0
    %v3635 = vadd.f32 %v3564, %v3634
    %3636 = vmatprep.mubr.bf16.mxu0 0
    %3637 = vmatmul.mubr.bf16.gmra.mrb[0].mxu0 %v2469
    %v3638 = vpop.f32.mrb[0].mxu0
    %v3639 = vadd.f32 %v3568, %v3638
    %v3640 = vpop.f32.mrb[0].mxu0
    %v3641 = vadd.f32 %v3570, %v3640
    %v3642 = vpop.f32.mrb[0].mxu0
    %v3643 = vadd.f32 %v3572, %v3642
    %v3644 = vpop.f32.mrb[0].mxu0
    %v3645 = vadd.f32 %v3574, %v3644
    %3646 = vmatprep.mubr.bf16.mxu0 0
    %3647 = vmatmul.mubr.bf16.gmra.mrb[0].mxu0 %v2472
    %v3648 = vpop.f32.mrb[0].mxu0
    %v3649 = vadd.f32 %v3578, %v3648
    %v3650 = vpop.f32.mrb[0].mxu0
    %v3651 = vadd.f32 %v3580, %v3650
    %v3652 = vpop.f32.mrb[0].mxu0
    %v3653 = vadd.f32 %v3582, %v3652
    %v3654 = vpop.f32.mrb[0].mxu0
    %v3655 = vadd.f32 %v3584, %v3654
    %3656 = vmatprep.mubr.bf16.mxu0 0
    %3657 = vmatmul.mubr.bf16.gmra.mrb[0].mxu0 %v2475
    %v3658 = vpop.f32.mrb[0].mxu0
    %v3659 = vadd.f32 %v3588, %v3658
    %v3660 = vpop.f32.mrb[0].mxu0
    %v3661 = vadd.f32 %v3590, %v3660
    %v3662 = vpop.f32.mrb[0].mxu0
    %v3663 = vpop.f32.mrb[0].mxu0
    %3664 = vdwg.mxu0
    %3665 = vmatprep.subr.bf16.mxu0 0
    %3666 = vmatpush1.bf16.msra.mxu0 %v1749
    %3667 = vmatprep.subr.bf16.mxu0 0
    %3668 = vmatpush1.bf16.msra.mxu0 %v1766
    %3669 = vmatprep.subr.bf16.mxu0 0
    %3670 = vmatpush1.bf16.msra.mxu0 %v1783
    %3671 = vmatprep.subr.bf16.mxu0 0
    %3672 = vmatpush1.bf16.msra.mxu0 %v1800
    %3673 = vmatprep.subr.bf16.mxu0 0
    %3674 = vmatpush1.bf16.msra.mxu0 %v1817
    %3675 = vmatprep.subr.bf16.mxu0 0
    %3676 = vmatpush1.bf16.msra.mxu0 %v1834
    %3677 = vmatprep.subr.bf16.mxu0 0
    %3678 = vmatpush1.bf16.msra.mxu0 %v1851
    %3679 = vmatprep.subr.bf16.mxu0 0
    %3680 = vmatpush1.bf16.msra.mxu0 %v1868
    %3681 = vmatprep.subr.bf16.mxu0 0
    %3682 = vmatpush1.bf16.msra.mxu0 %v1885
    %3683 = vmatprep.subr.bf16.mxu0 0
    %3684 = vmatpush1.bf16.msra.mxu0 %v1902
    %3685 = vmatprep.subr.bf16.mxu0 0
    %3686 = vmatpush1.bf16.msra.mxu0 %v1919
    %3687 = vmatprep.subr.bf16.mxu0 0
    %3688 = vmatpush1.bf16.msra.mxu0 %v1936
    %3689 = vmatprep.subr.bf16.mxu0 0
    %3690 = vmatpush1.bf16.msra.mxu0 %v1953
    %3691 = vmatprep.subr.bf16.mxu0 0
    %3692 = vmatpush1.bf16.msra.mxu0 %v1970
    %3693 = vmatprep.subr.bf16.mxu0 0
    %3694 = vmatpush1.bf16.msra.mxu0 %v1987
    %3695 = vmatprep.subr.bf16.mxu0 0
    %3696 = vmatpush1.bf16.msra.mxu0 %v2004
    %3697 = vmatprep.mubr.bf16.mxu0 %v591
    %3698 = vmatmul.mubr.bf16.gmra.mrb[0].mxu0 %v575
    %v3699 = vpop.f32.mrb[0].mxu0
    %v3700 = vadd.f32 0.0, %v3699
    %v3701 = vpop.f32.mrb[0].mxu0
    %v3702 = vpop.f32.mrb[0].mxu0
    %v3703 = vadd.f32 0.0, %v3702
    %v3704 = vpop.f32.mrb[0].mxu0
    %3705 = vmatprep.mubr.bf16.mxu0 %v592
    %3706 = vmatmul.mubr.bf16.gmra.mrb[0].mxu0 %v576
    %v3707 = vpop.f32.mrb[0].mxu0
    %v3708 = vadd.f32 0.0, %v3707
    %v3709 = vpop.f32.mrb[0].mxu0
    %v3710 = vpop.f32.mrb[0].mxu0
    %v3711 = vadd.f32 0.0, %v3710
    %v3712 = vpop.f32.mrb[0].mxu0
    %3713 = vmatprep.mubr.bf16.mxu0 %v593
    %3714 = vmatmul.mubr.bf16.gmra.mrb[0].mxu0 %v577
    %v3715 = vpop.f32.mrb[0].mxu0
    %v3716 = vadd.f32 0.0, %v3715
    %v3717 = vpop.f32.mrb[0].mxu0
    %v3718 = vpop.f32.mrb[0].mxu0
    %v3719 = vadd.f32 0.0, %v3718
    %v3720 = vpop.f32.mrb[0].mxu0
    %3721 = vmatprep.mubr.bf16.mxu0 %v594
    %3722 = vmatmul.mubr.bf16.gmra.mrb[0].mxu0 %v578
    %v3723 = vpop.f32.mrb[0].mxu0
    %v3724 = vadd.f32 0.0, %v3723
    %v3725 = vpop.f32.mrb[0].mxu0
    %v3726 = vpop.f32.mrb[0].mxu0
    %v3727 = vpop.f32.mrb[0].mxu0
    %3728 = vdwg.mxu0
    %3729 = vmatprep.subr.bf16.mxu0 0
    %3730 = vmatpush1.bf16.msra.mxu0 %v2021
    %3731 = vmatprep.subr.bf16.mxu0 0
    %3732 = vmatpush1.bf16.msra.mxu0 %v2038
    %3733 = vmatprep.subr.bf16.mxu0 0
    %3734 = vmatpush1.bf16.msra.mxu0 %v2055
    %3735 = vmatprep.subr.bf16.mxu0 0
    %3736 = vmatpush1.bf16.msra.mxu0 %v2072
    %3737 = vmatprep.subr.bf16.mxu0 0
    %3738 = vmatpush1.bf16.msra.mxu0 %v2089
    %3739 = vmatprep.subr.bf16.mxu0 0
    %3740 = vmatpush1.bf16.msra.mxu0 %v2527
    %3741 = vmatprep.subr.bf16.mxu0 0
    %3742 = vmatpush1.bf16.msra.mxu0 0
    %3743 = vmatprep.subr.bf16.mxu0 0
    %3744 = vmatpush1.bf16.msra.mxu0 0
    %3745 = vmatprep.subr.bf16.mxu0 0
    %3746 = vmatpush1.bf16.msra.mxu0 0
    %3747 = vmatprep.subr.bf16.mxu0 0
    %3748 = vmatpush1.bf16.msra.mxu0 0
    %3749 = vmatprep.subr.bf16.mxu0 0
    %3750 = vmatpush1.bf16.msra.mxu0 0
    %3751 = vmatprep.subr.bf16.mxu0 0
    %3752 = vmatpush1.bf16.msra.mxu0 0
    %3753 = vmatprep.subr.bf16.mxu0 0
    %3754 = vmatpush1.bf16.msra.mxu0 0
    %3755 = vmatprep.subr.bf16.mxu0 0
    %3756 = vmatpush1.bf16.msra.mxu0 0
    %3757 = vmatprep.subr.bf16.mxu0 0
    %3758 = vmatpush1.bf16.msra.mxu0 0
    %3759 = vmatprep.subr.bf16.mxu0 0
    %3760 = vmatpush1.bf16.msra.mxu0 0
    %3761 = vmatprep.mubr.bf16.mxu0 0
    %3762 = vmatmul.mubr.bf16.gmra.mrb[0].mxu0 %v2466
    %v3763 = vpop.f32.mrb[0].mxu0
    %v3764 = vadd.f32 %v3700, %v3763
    %v3765 = vpop.f32.mrb[0].mxu0
    %v3766 = vpop.f32.mrb[0].mxu0
    %v3767 = vadd.f32 %v3703, %v3766
    %v3768 = vpop.f32.mrb[0].mxu0
    %3769 = vmatprep.mubr.bf16.mxu0 0
    %3770 = vmatmul.mubr.bf16.gmra.mrb[0].mxu0 %v2469
    %v3771 = vpop.f32.mrb[0].mxu0
    %v3772 = vadd.f32 %v3708, %v3771
    %v3773 = vpop.f32.mrb[0].mxu0
    %v3774 = vpop.f32.mrb[0].mxu0
    %v3775 = vadd.f32 %v3711, %v3774
    %v3776 = vpop.f32.mrb[0].mxu0
    %3777 = vmatprep.mubr.bf16.mxu0 0
    %3778 = vmatmul.mubr.bf16.gmra.mrb[0].mxu0 %v2472
    %v3779 = vpop.f32.mrb[0].mxu0
    %v3780 = vadd.f32 %v3716, %v3779
    %v3781 = vpop.f32.mrb[0].mxu0
    %v3782 = vpop.f32.mrb[0].mxu0
    %v3783 = vadd.f32 %v3719, %v3782
    %v3784 = vpop.f32.mrb[0].mxu0
    %3785 = vmatprep.mubr.bf16.mxu0 0
    %3786 = vmatmul.mubr.bf16.gmra.mrb[0].mxu0 %v2475
    %v3787 = vpop.f32.mrb[0].mxu0
    %v3788 = vadd.f32 %v3724, %v3787
    %v3789 = vpop.f32.mrb[0].mxu0
    %v3790 = vpop.f32.mrb[0].mxu0
    %v3791 = vpop.f32.mrb[0].mxu0
    %3792 = vdwg.mxu0
    %3793 = vst [vmem:[%s3] sm:$0xff] %v2635
    %3794 = vst [vmem:[%s3 + $0x8] sm:$0xff] %v2637
    %3795 = vst [vmem:[%s3 + $0x10] sm:$0xff] %v2777
    %3796 = vst [vmem:[%s3 + $0x18] sm:$0xff] %v2779
    %3797 = vst [vmem:[%s3 + $0x20] sm:$0xff] %v2919
    %3798 = vst [vmem:[%s3 + $0x28] sm:$0xff] %v2921
    %3799 = vst [vmem:[%s3 + $0x30] sm:$0xff] %v3061
    %3800 = vst [vmem:[%s3 + $0x38] sm:$0xff] %v3063
    %3801 = vst [vmem:[%s3 + $0x40] sm:$0xff] %v3203
    %3802 = vst [vmem:[%s3 + $0x48] sm:$0xff] %v3205
    %3803 = vst [vmem:[%s3 + $0x50] sm:$0xff] %v3345
    %3804 = vst [vmem:[%s3 + $0x58] sm:$0xff] %v3347
    %3805 = vst [vmem:[%s3 + $0x60] sm:$0xff] %v3487
    %3806 = vst [vmem:[%s3 + $0x68] sm:$0xff] %v3489
    %3807 = vst [vmem:[%s3 + $0x70] sm:$0xff] %v3629
    %3808 = vst [vmem:[%s3 + $0x78] sm:$0xff] %v3631
    %vm3809 = vcmask 130048
    %3810 = vst.msk [vmem:[%s3 + $0x80] sm:$0xff] %vm3809, %v3764
    %3811 = vst [vmem:[%s3 + $0x88] sm:$0xff] %v2639
    %3812 = vst [vmem:[%s3 + $0x90] sm:$0xff] %v2641
    %3813 = vst [vmem:[%s3 + $0x98] sm:$0xff] %v2781
    %3814 = vst [vmem:[%s3 + $0xa0] sm:$0xff] %v2783
    %3815 = vst [vmem:[%s3 + $0xa8] sm:$0xff] %v2923
    %3816 = vst [vmem:[%s3 + $0xb0] sm:$0xff] %v2925
    %3817 = vst [vmem:[%s3 + $0xb8] sm:$0xff] %v3065
    %3818 = vst [vmem:[%s3 + $0xc0] sm:$0xff] %v3067
    %3819 = vst [vmem:[%s3 + $0xc8] sm:$0xff] %v3207
    %3820 = vst [vmem:[%s3 + $0xd0] sm:$0xff] %v3209
    %3821 = vst [vmem:[%s3 + $0xd8] sm:$0xff] %v3349
    %3822 = vst [vmem:[%s3 + $0xe0] sm:$0xff] %v3351
    %3823 = vst [vmem:[%s3 + $0xe8] sm:$0xff] %v3491
    %3824 = vst [vmem:[%s3 + $0xf0] sm:$0xff] %v3493
    %3825 = vst [vmem:[%s3 + $0xf8] sm:$0xff] %v3633
    %3826 = vst [vmem:[%s3 + $0x100] sm:$0xff] %v3635
    %3827 = vst.msk [vmem:[%s3 + $0x108] sm:$0xff] %vm3809, %v3767
    %3828 = vst [vmem:[%s3 + $0x110] sm:$0xff] %v2645
    %3829 = vst [vmem:[%s3 + $0x118] sm:$0xff] %v2647
    %3830 = vst [vmem:[%s3 + $0x120] sm:$0xff] %v2787
    %3831 = vst [vmem:[%s3 + $0x128] sm:$0xff] %v2789
    %3832 = vst [vmem:[%s3 + $0x130] sm:$0xff] %v2929
    %3833 = vst [vmem:[%s3 + $0x138] sm:$0xff] %v2931
    %3834 = vst [vmem:[%s3 + $0x140] sm:$0xff] %v3071
    %3835 = vst [vmem:[%s3 + $0x148] sm:$0xff] %v3073
    %3836 = vst [vmem:[%s3 + $0x150] sm:$0xff] %v3213
    %3837 = vst [vmem:[%s3 + $0x158] sm:$0xff] %v3215
    %3838 = vst [vmem:[%s3 + $0x160] sm:$0xff] %v3355
    %3839 = vst [vmem:[%s3 + $0x168] sm:$0xff] %v3357
    %3840 = vst [vmem:[%s3 + $0x170] sm:$0xff] %v3497
    %3841 = vst [vmem:[%s3 + $0x178] sm:$0xff] %v3499
    %3842 = vst [vmem:[%s3 + $0x180] sm:$0xff] %v3639
    %3843 = vst [vmem:[%s3 + $0x188] sm:$0xff] %v3641
    %3844 = vst.msk [vmem:[%s3 + $0x190] sm:$0xff] %vm3809, %v3772
    %3845 = vst [vmem:[%s3 + $0x198] sm:$0xff] %v2649
    %3846 = vst [vmem:[%s3 + $0x1a0] sm:$0xff] %v2651
    %3847 = vst [vmem:[%s3 + $0x1a8] sm:$0xff] %v2791
    %3848 = vst [vmem:[%s3 + $0x1b0] sm:$0xff] %v2793
    %3849 = vst [vmem:[%s3 + $0x1b8] sm:$0xff] %v2933
    %3850 = vst [vmem:[%s3 + $0x1c0] sm:$0xff] %v2935
    %3851 = vst [vmem:[%s3 + $0x1c8] sm:$0xff] %v3075
    %3852 = vst [vmem:[%s3 + $0x1d0] sm:$0xff] %v3077
    %3853 = vst [vmem:[%s3 + $0x1d8] sm:$0xff] %v3217
    %3854 = vst [vmem:[%s3 + $0x1e0] sm:$0xff] %v3219
    %3855 = vst [vmem:[%s3 + $0x1e8] sm:$0xff] %v3359
    %3856 = vst [vmem:[%s3 + $0x1f0] sm:$0xff] %v3361
    %3857 = vst [vmem:[%s3 + $0x1f8] sm:$0xff] %v3501
    %3858 = vst [vmem:[%s3 + $0x200] sm:$0xff] %v3503
    %3859 = vst [vmem:[%s3 + $0x208] sm:$0xff] %v3643
    %3860 = vst [vmem:[%s3 + $0x210] sm:$0xff] %v3645
    %3861 = vst.msk [vmem:[%s3 + $0x218] sm:$0xff] %vm3809, %v3775
    %3862 = vst [vmem:[%s3 + $0x220] sm:$0xff] %v2655
    %3863 = vst [vmem:[%s3 + $0x228] sm:$0xff] %v2657
    %3864 = vst [vmem:[%s3 + $0x230] sm:$0xff] %v2797
    %3865 = vst [vmem:[%s3 + $0x238] sm:$0xff] %v2799
    %3866 = vst [vmem:[%s3 + $0x240] sm:$0xff] %v2939
    %3867 = vst [vmem:[%s3 + $0x248] sm:$0xff] %v2941
    %3868 = vst [vmem:[%s3 + $0x250] sm:$0xff] %v3081
    %3869 = vst [vmem:[%s3 + $0x258] sm:$0xff] %v3083
    %3870 = vst [vmem:[%s3 + $0x260] sm:$0xff] %v3223
    %3871 = vst [vmem:[%s3 + $0x268] sm:$0xff] %v3225
    %3872 = vst [vmem:[%s3 + $0x270] sm:$0xff] %v3365
    %3873 = vst [vmem:[%s3 + $0x278] sm:$0xff] %v3367
    %3874 = vst [vmem:[%s3 + $0x280] sm:$0xff] %v3507
    %3875 = vst [vmem:[%s3 + $0x288] sm:$0xff] %v3509
    %3876 = vst [vmem:[%s3 + $0x290] sm:$0xff] %v3649
    %3877 = vst [vmem:[%s3 + $0x298] sm:$0xff] %v3651
    %3878 = vst.msk [vmem:[%s3 + $0x2a0] sm:$0xff] %vm3809, %v3780
    %3879 = vst [vmem:[%s3 + $0x2a8] sm:$0xff] %v2659
    %3880 = vst [vmem:[%s3 + $0x2b0] sm:$0xff] %v2661
    %3881 = vst [vmem:[%s3 + $0x2b8] sm:$0xff] %v2801
    %3882 = vst [vmem:[%s3 + $0x2c0] sm:$0xff] %v2803
    %3883 = vst [vmem:[%s3 + $0x2c8] sm:$0xff] %v2943
    %3884 = vst [vmem:[%s3 + $0x2d0] sm:$0xff] %v2945
    %3885 = vst [vmem:[%s3 + $0x2d8] sm:$0xff] %v3085
    %3886 = vst [vmem:[%s3 + $0x2e0] sm:$0xff] %v3087
    %3887 = vst [vmem:[%s3 + $0x2e8] sm:$0xff] %v3227
    %3888 = vst [vmem:[%s3 + $0x2f0] sm:$0xff] %v3229
    %3889 = vst [vmem:[%s3 + $0x2f8] sm:$0xff] %v3369
    %3890 = vst [vmem:[%s3 + $0x300] sm:$0xff] %v3371
    %3891 = vst [vmem:[%s3 + $0x308] sm:$0xff] %v3511
    %3892 = vst [vmem:[%s3 + $0x310] sm:$0xff] %v3513
    %3893 = vst [vmem:[%s3 + $0x318] sm:$0xff] %v3653
    %3894 = vst [vmem:[%s3 + $0x320] sm:$0xff] %v3655
    %3895 = vst.msk [vmem:[%s3 + $0x328] sm:$0xff] %vm3809, %v3783
    %3896 = vst [vmem:[%s3 + $0x330] sm:$0x1] %v2665
    %3897 = vst [vmem:[%s3 + $0x338] sm:$0x1] %v2667
    %3898 = vst [vmem:[%s3 + $0x340] sm:$0x1] %v2807
    %3899 = vst [vmem:[%s3 + $0x348] sm:$0x1] %v2809
    %3900 = vst [vmem:[%s3 + $0x350] sm:$0x1] %v2949
    %3901 = vst [vmem:[%s3 + $0x358] sm:$0x1] %v2951
    %3902 = vst [vmem:[%s3 + $0x360] sm:$0x1] %v3091
    %3903 = vst [vmem:[%s3 + $0x368] sm:$0x1] %v3093
    %3904 = vst [vmem:[%s3 + $0x370] sm:$0x1] %v3233
    %3905 = vst [vmem:[%s3 + $0x378] sm:$0x1] %v3235
    %3906 = vst [vmem:[%s3 + $0x380] sm:$0x1] %v3375
    %3907 = vst [vmem:[%s3 + $0x388] sm:$0x1] %v3377
    %3908 = vst [vmem:[%s3 + $0x390] sm:$0x1] %v3517
    %3909 = vst [vmem:[%s3 + $0x398] sm:$0x1] %v3519
    %3910 = vst [vmem:[%s3 + $0x3a0] sm:$0x1] %v3659
    %3911 = vst [vmem:[%s3 + $0x3a8] sm:$0x1] %v3661
    %vm3912 = vcmask 122880
    %3913 = vst.msk [vmem:[%s3 + $0x3b0] sm:$0x1] %vm3912, %v3788
    // Predicated region
    $region18: #{tpu_custom_call.1} parent=1 // pred_check
      _
    $region19: #{tpu_custom_call.1} parent=1 // pred_check_branch
      %3915 = sbr.rel (0) target = $region21
    $region20: #{tpu_custom_call.1} parent=1 // pred_region
      _
    $region21: #{tpu_custom_call.1} parent=1 // pred_fallthru
      _
    // Predicated region
    $region22: #{tpu_custom_call.1} parent=1 // pred_check
      _
    $region23: #{tpu_custom_call.1} parent=1 // pred_check_branch
      %3917 = sbr.rel (0) target = $region25
    $region24: #{tpu_custom_call.1} parent=1 // pred_region
      _
    $region25: #{tpu_custom_call.1} parent=1 // pred_fallthru
      _
    %3918 = vsyncpa [#allocation3], 1

</llo_original>
